<compile_context>
chip_gen: v6e
topology: v6e:2x2x1
jax: 0.10.0
libtpu: 0.0.40
codegen_flags: <defaults>
</compile_context>

<pallas_src>
import functools

import jax
import jax.numpy as jnp
from jax.experimental import pallas as pl
from jax.experimental.pallas import tpu as pltpu

LANE = 128


def _round_up(x, m):
    return (x + m - 1) // m * m


def _im2col(x, K, dilation, stride, Hout, Wout):
    """x: (Hp, Wp, C) -> (Hout*Wout, K*K*C) patches (tap-major, channel-minor)."""
    C = x.shape[-1]
    cols = []
    for kh in range(K):
        for kw in range(K):
            h0 = kh * dilation
            w0 = kw * dilation
            if stride == 1:
                xs = jax.lax.slice(x, (h0, w0, 0), (h0 + Hout, w0 + Wout, C))
            else:
                # TODO(synk): for stride==2 move the subsampling into the
                # BlockSpec/index_map instead of a strided in-kernel slice.
                xs = jax.lax.slice(
                    x, (h0, w0, 0),
                    (h0 + (Hout - 1) * stride + 1,
                     w0 + (Wout - 1) * stride + 1, C),
                    (stride, stride, 1))
            cols.append(xs.reshape(Hout * Wout, C))
    return jnp.concatenate(cols, axis=1)


def _shuffle_unit_kernel(xp_ref, w1_ref, b1_ref, w2_ref, b2_ref,
                         wsc_ref, bsc_ref, o_ref, y1pad_ref, *,
                         stride, dilation, H, W, H1, W1, pad1, pad2):
    """One batch element per grid step. Everything stays in VMEM."""
    x = xp_ref[0]                            # (Hp, Wp, Cp), spatially+channel padded
    Cp = x.shape[-1]
    Mp = b1_ref.shape[-1]
    Op = o_ref.shape[-1]

    # ---- dw_conv1: 3x3 dilated conv (stride) + folded-BN bias + ReLU --------
    p1 = _im2col(x, 3, dilation, stride, H1, W1)            # (H1*W1, 9*Cp)
    y1 = jnp.dot(p1, w1_ref[...], preferred_element_type=jnp.float32)
    y1 = jnp.maximum(y1 + b1_ref[...], 0.0)                 # (H1*W1, Mp)

    # Channel shuffle is already folded into w2 (input-channel permutation).
    # conv2's zero padding: write y1 into the interior of a zeroed VMEM scratch.
    y1pad_ref[...] = jnp.zeros_like(y1pad_ref)
    y1pad_ref[pl.ds(pad2, H1), pl.ds(pad2, W1), :] = y1.reshape(H1, W1, Mp)

    # ---- dw_conv2: 3x3 dilated conv (stride 1) + folded-BN bias + ReLU ------
    p2 = _im2col(y1pad_ref[...], 3, dilation, 1, H1, W1)    # (H1*W1, 9*Mp)
    y2 = jnp.dot(p2, w2_ref[...], preferred_element_type=jnp.float32)
    y2 = jnp.maximum(y2 + b2_ref[...], 0.0)                 # (H1*W1, Op)

    # ---- shortcut: 1x1 conv + folded BN (identity encoded as eye weight) ----
    if stride == 1:
        xo = jax.lax.slice(x, (pad1, pad1, 0), (pad1 + H, pad1 + W, Cp))
    else:
        xo = jax.lax.slice(
            x, (pad1, pad1, 0),
            (pad1 + (H1 - 1) * stride + 1, pad1 + (W1 - 1) * stride + 1, Cp),
            (stride, stride, 1))
    res = jnp.dot(xo.reshape(H1 * W1, Cp), wsc_ref[...],
                  preferred_element_type=jnp.float32) + bsc_ref[...]

    o_ref[0] = (y2 + res).reshape(H1, W1, Op).astype(o_ref.dtype)


def prepare_fused_params(params, *, in_channels, out_channels, groups, stride,
                         dilation=2):
    """Fold BN scales into weights, fold channel shuffle into w2, pad channel
    dims to multiples of 128, and flatten 3x3 weights for im2col. Done ONCE."""
    mid = out_channels // 4
    Cp = _round_up(in_channels, LANE)
    Mp = _round_up(mid, LANE)
    Op = _round_up(out_channels, LANE)

    def pad_w(w, ci, co, Ci, Co):
        return jnp.pad(w, ((0, 0), (0, 0), (0, Ci - ci), (0, Co - co)))

    # conv1: fold BN scale into weights, pad, flatten taps.
    w1 = params["w1"] * params["s1"][None, None, None, :]
    w1f = pad_w(w1, in_channels, mid, Cp, Mp).reshape(9 * Cp, Mp)
    b1f = jnp.pad(params["b1"], (0, Mp - mid)).reshape(1, Mp)

    # conv2: fold the channel shuffle (permute the Cin axis) + BN scale.
    cpg = mid // groups
    perm = jnp.arange(mid).reshape(groups, cpg).T.reshape(-1)   # shuffled[k] = x[perm[k]]
    inv_perm = jnp.argsort(perm)
    w2 = params["w2"][:, :, inv_perm, :] * params["s2"][None, None, None, :]
    w2f = pad_w(w2, mid, out_channels, Mp, Op).reshape(9 * Mp, Op)
    b2f = jnp.pad(params["b2"], (0, Op - out_channels)).reshape(1, Op)

    # shortcut: 1x1 conv + BN, or identity expressed as an eye 1x1 conv.
    if params["w_sc"] is not None:
        wsc = params["w_sc"][0, 0] * params["s_sc"][None, :]
        bsc = params["b_sc"]
    else:
        wsc = jnp.eye(in_channels, out_channels, dtype=jnp.float32)
        bsc = jnp.zeros((out_channels,), jnp.float32)
    wscf = jnp.pad(wsc, ((0, Cp - in_channels), (0, Op - out_channels)))
    bscf = jnp.pad(bsc, (0, Op - out_channels)).reshape(1, Op)

    return dict(w1f=w1f, b1f=b1f, w2f=w2f, b2f=b2f, wscf=wscf, bscf=bscf,
                Cp=Cp, Mp=Mp, Op=Op, stride=stride, dilation=dilation,
                pad1=dilation, pad2=dilation,
                in_channels=in_channels, out_channels=out_channels)


def shuffle_unit_forward(x_nchw, fp):
    """Fused ShuffleUnit forward. Input/output NCHW (PyTorch convention)."""
    N, Cin, H, W = x_nchw.shape
    stride, dilation = fp["stride"], fp["dilation"]
    pad1, pad2 = fp["pad1"], fp["pad2"]
    Cp, Mp, Op = fp["Cp"], fp["Mp"], fp["Op"]
    Cout = fp["out_channels"]

    H1 = (H - 1) // stride + 1
    W1 = (W - 1) // stride + 1
    Hp, Wp = H + 2 * pad1, W + 2 * pad1

    # TODO(synk): when stacking units, keep NHWC between units; transpose only at
    # the model boundary.
    x = jnp.transpose(x_nchw, (0, 2, 3, 1)).astype(jnp.float32)
    # one pad op: spatial halo for conv1 + lane-dense channel padding.
    xp = jnp.pad(x, ((0, 0), (pad1, pad1), (pad1, pad1), (0, Cp - Cin)))

    kernel = functools.partial(
        _shuffle_unit_kernel, stride=stride, dilation=dilation,
        H=H, W=W, H1=H1, W1=W1, pad1=pad1, pad2=pad2)

    out = pl.pallas_call(
        kernel,
        out_shape=jax.ShapeDtypeStruct((N, H1, W1, Op), x_nchw.dtype),
        grid=(N,),
        in_specs=[
            pl.BlockSpec((1, Hp, Wp, Cp), lambda n: (n, 0, 0, 0)),
            pl.BlockSpec((9 * Cp, Mp), lambda n: (0, 0)),
            pl.BlockSpec((1, Mp), lambda n: (0, 0)),
            pl.BlockSpec((9 * Mp, Op), lambda n: (0, 0)),
            pl.BlockSpec((1, Op), lambda n: (0, 0)),
            pl.BlockSpec((Cp, Op), lambda n: (0, 0)),
            pl.BlockSpec((1, Op), lambda n: (0, 0)),
        ],
        out_specs=pl.BlockSpec((1, H1, W1, Op), lambda n: (n, 0, 0, 0)),
        scratch_shapes=[
            pltpu.VMEM((H1 + 2 * pad2, W1 + 2 * pad2, Mp), jnp.float32)],
        compiler_params=pltpu.CompilerParams(
            dimension_semantics=("parallel",)),
    )(xp, fp["w1f"], fp["b1f"], fp["w2f"], fp["b2f"], fp["wscf"], fp["bscf"])

    out = out[:, :, :, :Cout]                 # drop lane padding
    return jnp.transpose(out, (0, 3, 1, 2))   # -> NCHW


# ---------------- parameter construction (deterministic, synthetic) ----------

def _fold_bn(gamma, beta, mean, var, eps=1e-5):
    scale = gamma / jnp.sqrt(var + eps)
    shift = beta - mean * scale
    return scale, shift


def make_params(key, in_channels, out_channels, stride):
    mid_channels = out_channels // 4
    ks = jax.random.split(key, 16)

    def bn_params(k, c):
        k1, k2, k3, k4 = jax.random.split(k, 4)
        gamma = 1.0 + 0.1 * jax.random.normal(k1, (c,), jnp.float32)
        beta = 0.05 * jax.random.normal(k2, (c,), jnp.float32)
        mean = 0.1 * jax.random.normal(k3, (c,), jnp.float32)
        var = 1.0 + 0.1 * jnp.abs(jax.random.normal(k4, (c,), jnp.float32))
        return _fold_bn(gamma, beta, mean, var)

    p = {}
    # weights stored HWIO: (K, K, Cin, Cout)
    p["w1"] = 0.1 * jax.random.normal(ks[0], (3, 3, in_channels, mid_channels), jnp.float32)
    p["s1"], p["b1"] = bn_params(ks[1], mid_channels)
    p["w2"] = 0.1 * jax.random.normal(ks[2], (3, 3, mid_channels, out_channels), jnp.float32)
    p["s2"], p["b2"] = bn_params(ks[3], out_channels)
    if stride == 2 or in_channels != out_channels:
        p["w_sc"] = 0.1 * jax.random.normal(ks[4], (1, 1, in_channels, out_channels), jnp.float32)
        p["s_sc"], p["b_sc"] = bn_params(ks[5], out_channels)
    else:
        p["w_sc"] = None
        p["s_sc"] = None
        p["b_sc"] = None
    return p


# ---------------- pure-JAX reference for correctness check -------------------

def ref_forward(x_nchw, params, *, stride, groups):
    def conv(x, w_hwio, s, b, stride, dilation, padding, relu):
        w = jnp.transpose(w_hwio, (3, 2, 0, 1))  # -> OIHW
        y = jax.lax.conv_general_dilated(
            x, w, (stride, stride),
            ((padding, padding), (padding, padding)),
            rhs_dilation=(dilation, dilation),
            dimension_numbers=("NCHW", "OIHW", "NCHW"))
        y = y * s[None, :, None, None] + b[None, :, None, None]
        return jnp.maximum(y, 0.0) if relu else y

    out = conv(x_nchw, params["w1"], params["s1"], params["b1"], stride, 2, 2, True)
    N, C, H, W = out.shape
    cpg = C // groups
    out = out.reshape(N, groups, cpg, H, W).transpose(0, 2, 1, 3, 4).reshape(N, C, H, W)
    out = conv(out, params["w2"], params["s2"], params["b2"], 1, 2, 2, True)
    if params["w_sc"] is not None:
        res = conv(x_nchw, params["w_sc"], params["s_sc"], params["b_sc"], stride, 1, 0, False)
    else:
        res = x_nchw
    return out + res


if __name__ == "__main__":
    # Small shapes consistent with the module: N=2, Cin=4, Cout=16, H=W=16
    N, Cin, Cout, H, W = 2, 4, 16, 16, 16
    stride, groups = 1, 2

    key = jax.random.PRNGKey(0)
    kx, kp = jax.random.split(key)
    x = jax.random.normal(kx, (N, Cin, H, W), jnp.float32)
    params = make_params(kp, Cin, Cout, stride)

    fused = prepare_fused_params(params, in_channels=Cin, out_channels=Cout,
                                 groups=groups, stride=stride)

    out = shuffle_unit_forward(x, fused)
    out = jax.block_until_ready(out)

    ref = jax.block_until_ready(ref_forward(x, params, stride=stride, groups=groups))
    assert out.shape == (N, Cout, H, W), out.shape
    assert jnp.allclose(out, ref, atol=1e-4, rtol=1e-4), (
        float(jnp.max(jnp.abs(out - ref))))

    print("KERNEL_OK")
</pallas_src>

<mosaic_0001>
module attributes {stable_mosaic.version = 11 : i64} {
  func.func @_shuffle_unit_kernel(%arg0: i32, %arg1: memref<1x20x20x128xf32, #tpu.memory_space<vmem>>, %arg2: memref<1152x128xf32, #tpu.memory_space<vmem>>, %arg3: memref<1x128xf32, #tpu.memory_space<vmem>>, %arg4: memref<1152x128xf32, #tpu.memory_space<vmem>>, %arg5: memref<1x128xf32, #tpu.memory_space<vmem>>, %arg6: memref<128x128xf32, #tpu.memory_space<vmem>>, %arg7: memref<1x128xf32, #tpu.memory_space<vmem>>, %arg8: memref<1x16x16x128xf32, #tpu.memory_space<vmem>>, %arg9: memref<20x20x128xf32, #tpu.memory_space<vmem>>) attributes {dimension_semantics = [#tpu.dimension_semantics<parallel>], iteration_bounds = array<i64: 2>, scalar_prefetch = 0 : i64, scratch_operands = 1 : i64, tpu.core_type = #tpu.core_type<tc>, window_params = [{transform_indices = @transform_0, window_bounds = array<i64: 1, 20, 20, 128>}, {pipeline_mode = #tpu.pipeline_mode<synchronous>, transform_indices = @transform_1, window_bounds = array<i64: 1152, 128>}, {pipeline_mode = #tpu.pipeline_mode<synchronous>, transform_indices = @transform_2, window_bounds = array<i64: 1, 128>}, {pipeline_mode = #tpu.pipeline_mode<synchronous>, transform_indices = @transform_3, window_bounds = array<i64: 1152, 128>}, {pipeline_mode = #tpu.pipeline_mode<synchronous>, transform_indices = @transform_4, window_bounds = array<i64: 1, 128>}, {pipeline_mode = #tpu.pipeline_mode<synchronous>, transform_indices = @transform_5, window_bounds = array<i64: 128, 128>}, {pipeline_mode = #tpu.pipeline_mode<synchronous>, transform_indices = @transform_6, window_bounds = array<i64: 1, 128>}, {transform_indices = @transform_7, window_bounds = array<i64: 1, 16, 16, 128>}]} {
    %c0 = arith.constant 0 : index
    %c0_0 = arith.constant 0 : index
    %c0_1 = arith.constant 0 : index
    %c0_2 = arith.constant 0 : index
    %0 = vector.load %arg1[%c0, %c0_0, %c0_1, %c0_2] : memref<1x20x20x128xf32, #tpu.memory_space<vmem>>, vector<1x20x20x128xf32>
    %1 = vector.shape_cast %0 : vector<1x20x20x128xf32> to vector<20x20x128xf32>
    %2 = vector.extract_strided_slice %1 {offsets = [0, 0, 0], sizes = [16, 16, 128], strides = [1, 1, 1]} : vector<20x20x128xf32> to vector<16x16x128xf32>
    %3 = vector.shape_cast %2 : vector<16x16x128xf32> to vector<256x128xf32>
    %4 = vector.extract_strided_slice %1 {offsets = [0, 2, 0], sizes = [16, 16, 128], strides = [1, 1, 1]} : vector<20x20x128xf32> to vector<16x16x128xf32>
    %5 = vector.shape_cast %4 : vector<16x16x128xf32> to vector<256x128xf32>
    %6 = vector.extract_strided_slice %1 {offsets = [0, 4, 0], sizes = [16, 16, 128], strides = [1, 1, 1]} : vector<20x20x128xf32> to vector<16x16x128xf32>
    %7 = vector.shape_cast %6 : vector<16x16x128xf32> to vector<256x128xf32>
    %8 = vector.extract_strided_slice %1 {offsets = [2, 0, 0], sizes = [16, 16, 128], strides = [1, 1, 1]} : vector<20x20x128xf32> to vector<16x16x128xf32>
    %9 = vector.shape_cast %8 : vector<16x16x128xf32> to vector<256x128xf32>
    %10 = vector.extract_strided_slice %1 {offsets = [2, 2, 0], sizes = [16, 16, 128], strides = [1, 1, 1]} : vector<20x20x128xf32> to vector<16x16x128xf32>
    %11 = vector.shape_cast %10 : vector<16x16x128xf32> to vector<256x128xf32>
    %12 = vector.extract_strided_slice %1 {offsets = [2, 4, 0], sizes = [16, 16, 128], strides = [1, 1, 1]} : vector<20x20x128xf32> to vector<16x16x128xf32>
    %13 = vector.shape_cast %12 : vector<16x16x128xf32> to vector<256x128xf32>
    %14 = vector.extract_strided_slice %1 {offsets = [4, 0, 0], sizes = [16, 16, 128], strides = [1, 1, 1]} : vector<20x20x128xf32> to vector<16x16x128xf32>
    %15 = vector.shape_cast %14 : vector<16x16x128xf32> to vector<256x128xf32>
    %16 = vector.extract_strided_slice %1 {offsets = [4, 2, 0], sizes = [16, 16, 128], strides = [1, 1, 1]} : vector<20x20x128xf32> to vector<16x16x128xf32>
    %17 = vector.shape_cast %16 : vector<16x16x128xf32> to vector<256x128xf32>
    %18 = vector.extract_strided_slice %1 {offsets = [4, 4, 0], sizes = [16, 16, 128], strides = [1, 1, 1]} : vector<20x20x128xf32> to vector<16x16x128xf32>
    %19 = vector.shape_cast %18 : vector<16x16x128xf32> to vector<256x128xf32>
    %20 = tpu.concatenate %3, %5, %7, %9, %11, %13, %15, %17, %19 in 1 : vector<256x128xf32>, vector<256x128xf32>, vector<256x128xf32>, vector<256x128xf32>, vector<256x128xf32>, vector<256x128xf32>, vector<256x128xf32>, vector<256x128xf32>, vector<256x128xf32> -> vector<256x1152xf32>
    %c0_3 = arith.constant 0 : index
    %c0_4 = arith.constant 0 : index
    %21 = vector.load %arg2[%c0_3, %c0_4] : memref<1152x128xf32, #tpu.memory_space<vmem>>, vector<1152x128xf32>
    %cst = arith.constant dense<0.000000e+00> : vector<256x128xf32>
    %22 = tpu.matmul %20, %21, %cst {dimension_numbers = #tpu.dot_dimension_numbers<[1], [0], [0], [1], [0, 0, 1, 1], [], []>} : vector<256x1152xf32>, vector<1152x128xf32>, vector<256x128xf32> -> vector<256x128xf32>
    %c0_5 = arith.constant 0 : index
    %c0_6 = arith.constant 0 : index
    %23 = vector.load %arg3[%c0_5, %c0_6] : memref<1x128xf32, #tpu.memory_space<vmem>>, vector<1x128xf32>
    %24 = vector.broadcast %23 : vector<1x128xf32> to vector<256x128xf32>
    %25 = arith.addf %22, %24 : vector<256x128xf32>
    %cst_7 = arith.constant 0.000000e+00 : f32
    %26 = vector.broadcast %cst_7 : f32 to vector<256x128xf32>
    %27 = arith.maximumf %25, %26 : vector<256x128xf32>
    %cst_8 = arith.constant 0.000000e+00 : f32
    %28 = vector.broadcast %cst_8 : f32 to vector<20x20x128xf32>
    %c0_9 = arith.constant 0 : index
    %c0_10 = arith.constant 0 : index
    %c0_11 = arith.constant 0 : index
    %29 = vector.load %arg9[%c0_9, %c0_10, %c0_11] : memref<20x20x128xf32, #tpu.memory_space<vmem>>, vector<20x20x128xf32>
    tpu.vector_store %arg9[%c0_9, %c0_10, %c0_11], %28 {strides = array<i32>} : memref<20x20x128xf32, #tpu.memory_space<vmem>>, vector<20x20x128xf32>,
    %30 = vector.shape_cast %27 : vector<256x128xf32> to vector<16x16x128xf32>
    %c2 = arith.constant 2 : index
    %c2_12 = arith.constant 2 : index
    %c0_13 = arith.constant 0 : index
    %31 = vector.load %arg9[%c2, %c2_12, %c0_13] : memref<20x20x128xf32, #tpu.memory_space<vmem>>, vector<16x16x128xf32>
    tpu.vector_store %arg9[%c2, %c2_12, %c0_13], %30 {strides = array<i32>} : memref<20x20x128xf32, #tpu.memory_space<vmem>>, vector<16x16x128xf32>,
    %c0_14 = arith.constant 0 : index
    %c0_15 = arith.constant 0 : index
    %c0_16 = arith.constant 0 : index
    %32 = vector.load %arg9[%c0_14, %c0_15, %c0_16] : memref<20x20x128xf32, #tpu.memory_space<vmem>>, vector<20x20x128xf32>
    %33 = vector.extract_strided_slice %32 {offsets = [0, 0, 0], sizes = [16, 16, 128], strides = [1, 1, 1]} : vector<20x20x128xf32> to vector<16x16x128xf32>
    %34 = vector.shape_cast %33 : vector<16x16x128xf32> to vector<256x128xf32>
    %35 = vector.extract_strided_slice %32 {offsets = [0, 2, 0], sizes = [16, 16, 128], strides = [1, 1, 1]} : vector<20x20x128xf32> to vector<16x16x128xf32>
    %36 = vector.shape_cast %35 : vector<16x16x128xf32> to vector<256x128xf32>
    %37 = vector.extract_strided_slice %32 {offsets = [0, 4, 0], sizes = [16, 16, 128], strides = [1, 1, 1]} : vector<20x20x128xf32> to vector<16x16x128xf32>
    %38 = vector.shape_cast %37 : vector<16x16x128xf32> to vector<256x128xf32>
    %39 = vector.extract_strided_slice %32 {offsets = [2, 0, 0], sizes = [16, 16, 128], strides = [1, 1, 1]} : vector<20x20x128xf32> to vector<16x16x128xf32>
    %40 = vector.shape_cast %39 : vector<16x16x128xf32> to vector<256x128xf32>
    %41 = vector.extract_strided_slice %32 {offsets = [2, 2, 0], sizes = [16, 16, 128], strides = [1, 1, 1]} : vector<20x20x128xf32> to vector<16x16x128xf32>
    %42 = vector.shape_cast %41 : vector<16x16x128xf32> to vector<256x128xf32>
    %43 = vector.extract_strided_slice %32 {offsets = [2, 4, 0], sizes = [16, 16, 128], strides = [1, 1, 1]} : vector<20x20x128xf32> to vector<16x16x128xf32>
    %44 = vector.shape_cast %43 : vector<16x16x128xf32> to vector<256x128xf32>
    %45 = vector.extract_strided_slice %32 {offsets = [4, 0, 0], sizes = [16, 16, 128], strides = [1, 1, 1]} : vector<20x20x128xf32> to vector<16x16x128xf32>
    %46 = vector.shape_cast %45 : vector<16x16x128xf32> to vector<256x128xf32>
    %47 = vector.extract_strided_slice %32 {offsets = [4, 2, 0], sizes = [16, 16, 128], strides = [1, 1, 1]} : vector<20x20x128xf32> to vector<16x16x128xf32>
    %48 = vector.shape_cast %47 : vector<16x16x128xf32> to vector<256x128xf32>
    %49 = vector.extract_strided_slice %32 {offsets = [4, 4, 0], sizes = [16, 16, 128], strides = [1, 1, 1]} : vector<20x20x128xf32> to vector<16x16x128xf32>
    %50 = vector.shape_cast %49 : vector<16x16x128xf32> to vector<256x128xf32>
    %51 = tpu.concatenate %34, %36, %38, %40, %42, %44, %46, %48, %50 in 1 : vector<256x128xf32>, vector<256x128xf32>, vector<256x128xf32>, vector<256x128xf32>, vector<256x128xf32>, vector<256x128xf32>, vector<256x128xf32>, vector<256x128xf32>, vector<256x128xf32> -> vector<256x1152xf32>
    %c0_17 = arith.constant 0 : index
    %c0_18 = arith.constant 0 : index
    %52 = vector.load %arg4[%c0_17, %c0_18] : memref<1152x128xf32, #tpu.memory_space<vmem>>, vector<1152x128xf32>
    %cst_19 = arith.constant dense<0.000000e+00> : vector<256x128xf32>
    %53 = tpu.matmul %51, %52, %cst_19 {dimension_numbers = #tpu.dot_dimension_numbers<[1], [0], [0], [1], [0, 0, 1, 1], [], []>} : vector<256x1152xf32>, vector<1152x128xf32>, vector<256x128xf32> -> vector<256x128xf32>
    %c0_20 = arith.constant 0 : index
    %c0_21 = arith.constant 0 : index
    %54 = vector.load %arg5[%c0_20, %c0_21] : memref<1x128xf32, #tpu.memory_space<vmem>>, vector<1x128xf32>
    %55 = vector.broadcast %54 : vector<1x128xf32> to vector<256x128xf32>
    %56 = arith.addf %53, %55 : vector<256x128xf32>
    %cst_22 = arith.constant 0.000000e+00 : f32
    %57 = vector.broadcast %cst_22 : f32 to vector<256x128xf32>
    %58 = arith.maximumf %56, %57 : vector<256x128xf32>
    %59 = vector.extract_strided_slice %1 {offsets = [2, 2, 0], sizes = [16, 16, 128], strides = [1, 1, 1]} : vector<20x20x128xf32> to vector<16x16x128xf32>
    %60 = vector.shape_cast %59 : vector<16x16x128xf32> to vector<256x128xf32>
    %c0_23 = arith.constant 0 : index
    %c0_24 = arith.constant 0 : index
    %61 = vector.load %arg6[%c0_23, %c0_24] : memref<128x128xf32, #tpu.memory_space<vmem>>, vector<128x128xf32>
    %cst_25 = arith.constant dense<0.000000e+00> : vector<256x128xf32>
    %62 = tpu.matmul %60, %61, %cst_25 {dimension_numbers = #tpu.dot_dimension_numbers<[1], [0], [0], [1], [0, 0, 1, 1], [], []>} : vector<256x128xf32>, vector<128x128xf32>, vector<256x128xf32> -> vector<256x128xf32>
    %c0_26 = arith.constant 0 : index
    %c0_27 = arith.constant 0 : index
    %63 = vector.load %arg7[%c0_26, %c0_27] : memref<1x128xf32, #tpu.memory_space<vmem>>, vector<1x128xf32>
    %64 = vector.broadcast %63 : vector<1x128xf32> to vector<256x128xf32>
    %65 = arith.addf %62, %64 : vector<256x128xf32>
    %66 = arith.addf %58, %65 : vector<256x128xf32>
    %67 = vector.shape_cast %66 : vector<256x128xf32> to vector<16x16x128xf32>
    %c0_28 = arith.constant 0 : index
    %c0_29 = arith.constant 0 : index
    %c0_30 = arith.constant 0 : index
    %c0_31 = arith.constant 0 : index
    %68 = vector.load %arg8[%c0_28, %c0_29, %c0_30, %c0_31] : memref<1x16x16x128xf32, #tpu.memory_space<vmem>>, vector<1x16x16x128xf32>
    %69 = vector.shape_cast %68 : vector<1x16x16x128xf32> to vector<16x16x128xf32>
    %70 = vector.shape_cast %67 : vector<16x16x128xf32> to vector<1x16x16x128xf32>
    tpu.vector_store %arg8[%c0_28, %c0_29, %c0_30, %c0_31], %70 {strides = array<i32>} : memref<1x16x16x128xf32, #tpu.memory_space<vmem>>, vector<1x16x16x128xf32>,
    return
  }
  func.func @transform_0(%arg0: i32) -> (i32, i32, i32, i32) {
    %c0_i32 = arith.constant 0 : i32
    %c0_i32_0 = arith.constant 0 : i32
    %c0_i32_1 = arith.constant 0 : i32
    %c0_i32_2 = arith.constant 0 : i32
    return %arg0, %c0_i32, %c0_i32_0, %c0_i32_1 : i32, i32, i32, i32
  }
  func.func @transform_1(%arg0: i32) -> (i32, i32) {
    %c0_i32 = arith.constant 0 : i32
    %c0_i32_0 = arith.constant 0 : i32
    %c0_i32_1 = arith.constant 0 : i32
    return %c0_i32, %c0_i32_0 : i32, i32
  }
  func.func @transform_2(%arg0: i32) -> (i32, i32) {
    %c0_i32 = arith.constant 0 : i32
    %c0_i32_0 = arith.constant 0 : i32
    %c0_i32_1 = arith.constant 0 : i32
    return %c0_i32, %c0_i32_0 : i32, i32
  }
  func.func @transform_3(%arg0: i32) -> (i32, i32) {
    %c0_i32 = arith.constant 0 : i32
    %c0_i32_0 = arith.constant 0 : i32
    %c0_i32_1 = arith.constant 0 : i32
    return %c0_i32, %c0_i32_0 : i32, i32
  }
  func.func @transform_4(%arg0: i32) -> (i32, i32) {
    %c0_i32 = arith.constant 0 : i32
    %c0_i32_0 = arith.constant 0 : i32
    %c0_i32_1 = arith.constant 0 : i32
    return %c0_i32, %c0_i32_0 : i32, i32
  }
  func.func @transform_5(%arg0: i32) -> (i32, i32) {
    %c0_i32 = arith.constant 0 : i32
    %c0_i32_0 = arith.constant 0 : i32
    %c0_i32_1 = arith.constant 0 : i32
    return %c0_i32, %c0_i32_0 : i32, i32
  }
  func.func @transform_6(%arg0: i32) -> (i32, i32) {
    %c0_i32 = arith.constant 0 : i32
    %c0_i32_0 = arith.constant 0 : i32
    %c0_i32_1 = arith.constant 0 : i32
    return %c0_i32, %c0_i32_0 : i32, i32
  }
  func.func @transform_7(%arg0: i32) -> (i32, i32, i32, i32) {
    %c0_i32 = arith.constant 0 : i32
    %c0_i32_0 = arith.constant 0 : i32
    %c0_i32_1 = arith.constant 0 : i32
    %c0_i32_2 = arith.constant 0 : i32
    return %arg0, %c0_i32, %c0_i32_0, %c0_i32_1 : i32, i32, i32, i32
  }
}

</mosaic_0001>

<llo_original>
// kernel: tpu_custom_call.1
$region0: #{tpu_custom_call.1}
  #allocation0 [shape = 'u32[]', space=smem, size = 0x4, offset = 0x4, fixed_abs, tag = 'smem constant byte address 0x4 - core index']
  #allocation1 [shape = 'u32[144,128]{1,0:T(1,128)}', space=vmem, size = 0x12000, scoped, tag = 'internal scratch']
  #allocation2 [shape = 'f32[20,20,128]{2,1,0:T(8,128)}', space=vmem, size = 0x3c000, scoped, tag = 'scratch operand']
  %s0 = inlined_call_operand.vmem [shape: f32[2,20,20,128], index: 0, kind: input, shape index: {}]
  %s1 = inlined_call_operand.vmem [shape: f32[1152,128], index: 1, kind: input, shape index: {}]
  %s2 = inlined_call_operand.vmem [shape: f32[1,128], index: 2, kind: input, shape index: {}]
  %s3 = inlined_call_operand.hbm [shape: f32[1152,128], index: 3, kind: input, shape index: {}]
  %s4 = inlined_call_operand.vmem [shape: f32[1,128], index: 4, kind: input, shape index: {}]
  %s5 = inlined_call_operand.vmem [shape: f32[128,128], index: 5, kind: input, shape index: {}]
  %s6 = inlined_call_operand.vmem [shape: f32[1,128], index: 6, kind: input, shape index: {}]
  %s7 = inlined_call_operand.hbm [shape: f32[2,16,16,128], index: 7, kind: output, shape index: {}]
  %s8 = sld [smem:[#allocation0]]
  $region65: #{tpu_custom_call.1} parent=0
    _
  %s10 = ssub.s32 1, %s8
  %s11 = scalar_select 0, %s10, %s8
  $region1: #{tpu_custom_call.1} parent=0
    #allocation3 [shape = 'u8[589824]{0}', space=vmem, size = 0x90000, scoped, tag = 'input window, operand 3, single buffered']
    #allocation4 [shape = 's32[2]{0}', space=sflag, size = 0x8, scoped, tag = 'scoped memory for tpu_custom_call.1']
    #allocation5 [shape = 's32[2]{0}', space=sflag, size = 0x8, scoped, tag = 'scoped memory for tpu_custom_call.1']
    #allocation6 [shape = 'u8[262144]{0}', space=vmem, size = 0x40000, scoped, tag = 'output window, operand 0']
    %12 = vsyncpa [#allocation4], 0
    %13 = vsyncpa [#allocation5], 0
    %s14 = scalar_lea.sflag [#allocation5], 1
    %15 = vsyncpa %s14, 0
    loop: start=0, step=1, limit=4
    $region2: #{tpu_custom_call.1} parent=1 // loop_pre_header
      _
    $region3: #{tpu_custom_call.1} parent=1 // loop_header
      %s17 = sphi 0, %s21
      %p18 = scmp.ge.s32.totalorder %s17, 4
      %s27 = sphi 0, %s29
      %s30 = sphi 0, %s27
      %s31 = sphi 0, %s30
      %s47 = sphi 0, %s31
      %s51 = sphi 0, %s51
      %s53 = sphi 0, %s51
      %s54 = sphi 0, %s53
      %s68 = sphi 0, %s54
      %s72 = sphi 0, %s72
      %s74 = sphi 0, %s72
      %s75 = sphi 0, %s74
      %s89 = sphi 0, %s75
      %s93 = sphi 0, %s93
      %s95 = sphi 0, %s93
      %s96 = sphi 0, %s95
      %s110 = sphi 0, %s96
      %s114 = sphi 0, %s114
      %s116 = sphi 0, %s114
      %s117 = sphi 0, %s116
      %s131 = sphi 0, %s117
      %s135 = sphi 0, %s135
      %s137 = sphi 0, %s135
      %s138 = sphi 0, %s137
      %s152 = sphi 0, %s138
      %s156 = sphi 0, %s156
      %s158 = sphi 0, %s156
      %s159 = sphi 0, %s158
      %s173 = sphi 0, %s159
      %s179 = sphi 0, %s181
      %s182 = sphi 0, %s179
      %s183 = sphi 0, %s182
      %s199 = sphi 0, %s183
    $region4: #{tpu_custom_call.1} parent=1 // loop_header_branch
      %20 = sbr.rel (%p18) target = $region8
    $region5: #{tpu_custom_call.1} parent=1 // loop_body
      %s22 = ssub.s32 %s17, 1
      %s23 = ssub.s32 %s17, 2
      %s24 = sadd.s32 %s17, 1
      %s25 = ssub.s32 %s17, %s24
      %p26 = scmp.eq.s32.totalorder %s25, 0
      %s28 = sadd.s32 %s27, 1
      %s29 = scalar_select %p26, %s27, %s28
      %p32 = pneg %p26
      %p33 = scmp.eq.s32.totalorder %s17, 1
      %p34 = por %p32, %p33
      %p35 = scmp.ne.s32.totalorder %s27, %s30
      %p36 = scmp.eq.s32.totalorder %s17, 0
      %p37 = por %p35, %p36
      %p38 = scmp.ne.s32.totalorder %s27, %s30
      %p39 = scmp.eq.s32.totalorder %s22, 1
      %p40 = por %p38, %p39
      %p41 = scmp.ne.s32.totalorder %s30, %s31
      %p42 = scmp.eq.s32.totalorder %s22, 0
      %p43 = por %p41, %p42
      %p44 = scmp.ne.s32.totalorder %s30, %s31
      %p45 = scmp.eq.s32.totalorder %s23, 1
      %p46 = por %p44, %p45
      %p48 = scmp.ne.s32.totalorder %s31, %s47
      %p49 = scmp.eq.s32.totalorder %s23, 0
      %p50 = por %p48, %p49
      %s52 = sadd.s32 %s51, 1
      %p55 = scmp.eq.s32.totalorder %s17, 1
      %p56 = scmp.ne.s32.totalorder %s51, %s53
      %p57 = scmp.eq.s32.totalorder %s17, 0
      %p58 = por %p56, %p57
      %p59 = scmp.ne.s32.totalorder %s51, %s53
      %p60 = scmp.eq.s32.totalorder %s22, 1
      %p61 = por %p59, %p60
      %p62 = scmp.ne.s32.totalorder %s53, %s54
      %p63 = scmp.eq.s32.totalorder %s22, 0
      %p64 = por %p62, %p63
      %p65 = scmp.ne.s32.totalorder %s53, %s54
      %p66 = scmp.eq.s32.totalorder %s23, 1
      %p67 = por %p65, %p66
      %p69 = scmp.ne.s32.totalorder %s54, %s68
      %p70 = scmp.eq.s32.totalorder %s23, 0
      %p71 = por %p69, %p70
      %s73 = sadd.s32 %s72, 1
      %p76 = scmp.eq.s32.totalorder %s17, 1
      %p77 = scmp.ne.s32.totalorder %s72, %s74
      %p78 = scmp.eq.s32.totalorder %s17, 0
      %p79 = por %p77, %p78
      %p80 = scmp.ne.s32.totalorder %s72, %s74
      %p81 = scmp.eq.s32.totalorder %s22, 1
      %p82 = por %p80, %p81
      %p83 = scmp.ne.s32.totalorder %s74, %s75
      %p84 = scmp.eq.s32.totalorder %s22, 0
      %p85 = por %p83, %p84
      %p86 = scmp.ne.s32.totalorder %s74, %s75
      %p87 = scmp.eq.s32.totalorder %s23, 1
      %p88 = por %p86, %p87
      %p90 = scmp.ne.s32.totalorder %s75, %s89
      %p91 = scmp.eq.s32.totalorder %s23, 0
      %p92 = por %p90, %p91
      %s94 = sadd.s32 %s93, 1
      %p97 = scmp.eq.s32.totalorder %s17, 1
      %p98 = scmp.ne.s32.totalorder %s93, %s95
      %p99 = scmp.eq.s32.totalorder %s17, 0
      %p100 = por %p98, %p99
      %p101 = scmp.ne.s32.totalorder %s93, %s95
      %p102 = scmp.eq.s32.totalorder %s22, 1
      %p103 = por %p101, %p102
      %p104 = scmp.ne.s32.totalorder %s95, %s96
      %p105 = scmp.eq.s32.totalorder %s22, 0
      %p106 = por %p104, %p105
      %p107 = scmp.ne.s32.totalorder %s95, %s96
      %p108 = scmp.eq.s32.totalorder %s23, 1
      %p109 = por %p107, %p108
      %p111 = scmp.ne.s32.totalorder %s96, %s110
      %p112 = scmp.eq.s32.totalorder %s23, 0
      %p113 = por %p111, %p112
      %s115 = sadd.s32 %s114, 1
      %p118 = scmp.eq.s32.totalorder %s17, 1
      %p119 = scmp.ne.s32.totalorder %s114, %s116
      %p120 = scmp.eq.s32.totalorder %s17, 0
      %p121 = por %p119, %p120
      %p122 = scmp.ne.s32.totalorder %s114, %s116
      %p123 = scmp.eq.s32.totalorder %s22, 1
      %p124 = por %p122, %p123
      %p125 = scmp.ne.s32.totalorder %s116, %s117
      %p126 = scmp.eq.s32.totalorder %s22, 0
      %p127 = por %p125, %p126
      %p128 = scmp.ne.s32.totalorder %s116, %s117
      %p129 = scmp.eq.s32.totalorder %s23, 1
      %p130 = por %p128, %p129
      %p132 = scmp.ne.s32.totalorder %s117, %s131
      %p133 = scmp.eq.s32.totalorder %s23, 0
      %p134 = por %p132, %p133
      %s136 = sadd.s32 %s135, 1
      %p139 = scmp.eq.s32.totalorder %s17, 1
      %p140 = scmp.ne.s32.totalorder %s135, %s137
      %p141 = scmp.eq.s32.totalorder %s17, 0
      %p142 = por %p140, %p141
      %p143 = scmp.ne.s32.totalorder %s135, %s137
      %p144 = scmp.eq.s32.totalorder %s22, 1
      %p145 = por %p143, %p144
      %p146 = scmp.ne.s32.totalorder %s137, %s138
      %p147 = scmp.eq.s32.totalorder %s22, 0
      %p148 = por %p146, %p147
      %p149 = scmp.ne.s32.totalorder %s137, %s138
      %p150 = scmp.eq.s32.totalorder %s23, 1
      %p151 = por %p149, %p150
      %p153 = scmp.ne.s32.totalorder %s138, %s152
      %p154 = scmp.eq.s32.totalorder %s23, 0
      %p155 = por %p153, %p154
      %s157 = sadd.s32 %s156, 1
      %p160 = scmp.eq.s32.totalorder %s17, 1
      %p161 = scmp.ne.s32.totalorder %s156, %s158
      %p162 = scmp.eq.s32.totalorder %s17, 0
      %p163 = por %p161, %p162
      %p164 = scmp.ne.s32.totalorder %s156, %s158
      %p165 = scmp.eq.s32.totalorder %s22, 1
      %p166 = por %p164, %p165
      %p167 = scmp.ne.s32.totalorder %s158, %s159
      %p168 = scmp.eq.s32.totalorder %s22, 0
      %p169 = por %p167, %p168
      %p170 = scmp.ne.s32.totalorder %s158, %s159
      %p171 = scmp.eq.s32.totalorder %s23, 1
      %p172 = por %p170, %p171
      %p174 = scmp.ne.s32.totalorder %s159, %s173
      %p175 = scmp.eq.s32.totalorder %s23, 0
      %p176 = por %p174, %p175
      %s177 = ssub.s32 %s17, %s24
      %p178 = scmp.eq.s32.totalorder %s177, 0
      %s180 = sadd.s32 %s179, 1
      %s181 = scalar_select %p178, %s179, %s180
      %p184 = pneg %p178
      %p185 = scmp.eq.s32.totalorder %s17, 1
      %p186 = por %p184, %p185
      %p187 = scmp.ne.s32.totalorder %s179, %s182
      %p188 = scmp.eq.s32.totalorder %s17, 0
      %p189 = por %p187, %p188
      %p190 = scmp.ne.s32.totalorder %s179, %s182
      %p191 = scmp.eq.s32.totalorder %s22, 1
      %p192 = por %p190, %p191
      %p193 = scmp.ne.s32.totalorder %s182, %s183
      %p194 = scmp.eq.s32.totalorder %s22, 0
      %p195 = por %p193, %p194
      %p196 = scmp.ne.s32.totalorder %s182, %s183
      %p197 = scmp.eq.s32.totalorder %s23, 1
      %p198 = por %p196, %p197
      %p200 = scmp.ne.s32.totalorder %s183, %s199
      %p201 = scmp.eq.s32.totalorder %s23, 0
      %p202 = por %p200, %p201
      %p203 = scmp.le.s32.totalorder 1, %s17
      %p204 = scmp.lt.s32.totalorder %s17, 3
      %p205 = pnand %p203, %p204
      %p206 = pneg %p205
      // Predicated region
      $region9: #{tpu_custom_call.1} parent=5 // pred_check
        _
      $region10: #{tpu_custom_call.1} parent=5 // pred_check_branch
        %208 = sbr.rel (%p205) target = $region12
      $region11: #{tpu_custom_call.1} parent=5 // pred_region
        %s209 = ssub.s32 %s17, 1
        // Predicated region
        $region13: #{tpu_custom_call.1} parent=11 // pred_check
          %p210 = pneg %p64
        $region14: #{tpu_custom_call.1} parent=11 // pred_check_branch
          %212 = sbr.rel (%p210) target = $region16
        $region15: #{tpu_custom_call.1} parent=11 // pred_region
          _
        $region16: #{tpu_custom_call.1} parent=11 // pred_fallthru
          _
        // Predicated region
        $region17: #{tpu_custom_call.1} parent=11 // pred_check
          %p213 = pneg %p85
        $region18: #{tpu_custom_call.1} parent=11 // pred_check_branch
          %215 = sbr.rel (%p213) target = $region20
        $region19: #{tpu_custom_call.1} parent=11 // pred_region
          _
        $region20: #{tpu_custom_call.1} parent=11 // pred_fallthru
          _
        // Predicated region
        $region21: #{tpu_custom_call.1} parent=11 // pred_check
          %p216 = pneg %p106
        $region22: #{tpu_custom_call.1} parent=11 // pred_check_branch
          %218 = sbr.rel (%p216) target = $region24
        $region23: #{tpu_custom_call.1} parent=11 // pred_region
          %s220 = ssub.s32 18432, 18432
          %221 = vsyncadd [#allocation4], %s220
          %s222 = sshll.u32 [#allocation3], 4
          %s223 = int_to_ptr.vmem [resolvable:$true] %s222
          %228 = dma.hbm_to_vmem [thread:$0]  %s3, 18432, %s223, [#allocation4], 128, 128, 8
        $region24: #{tpu_custom_call.1} parent=11 // pred_fallthru
          _
        // Predicated region
        $region25: #{tpu_custom_call.1} parent=11 // pred_check
          %p229 = pneg %p127
        $region26: #{tpu_custom_call.1} parent=11 // pred_check_branch
          %231 = sbr.rel (%p229) target = $region28
        $region27: #{tpu_custom_call.1} parent=11 // pred_region
          _
        $region28: #{tpu_custom_call.1} parent=11 // pred_fallthru
          _
        // Predicated region
        $region29: #{tpu_custom_call.1} parent=11 // pred_check
          %p232 = pneg %p148
        $region30: #{tpu_custom_call.1} parent=11 // pred_check_branch
          %234 = sbr.rel (%p232) target = $region32
        $region31: #{tpu_custom_call.1} parent=11 // pred_region
          _
        $region32: #{tpu_custom_call.1} parent=11 // pred_fallthru
          _
        // Predicated region
        $region33: #{tpu_custom_call.1} parent=11 // pred_check
          %p235 = pneg %p169
        $region34: #{tpu_custom_call.1} parent=11 // pred_check_branch
          %237 = sbr.rel (%p235) target = $region36
        $region35: #{tpu_custom_call.1} parent=11 // pred_region
          _
        $region36: #{tpu_custom_call.1} parent=11 // pred_fallthru
          _
      $region12: #{tpu_custom_call.1} parent=5 // pred_fallthru
        _
      %p238 = scmp.lt.s32.totalorder %s17, 2
      // Predicated region
      $region37: #{tpu_custom_call.1} parent=5 // pred_check
        %p239 = pneg %p238
      $region38: #{tpu_custom_call.1} parent=5 // pred_check_branch
        %241 = sbr.rel (%p239) target = $region40
      $region39: #{tpu_custom_call.1} parent=5 // pred_region
        // Predicated region
        $region41: #{tpu_custom_call.1} parent=39 // pred_check
          %p242 = pneg %p37
        $region42: #{tpu_custom_call.1} parent=39 // pred_check_branch
          %244 = sbr.rel (%p242) target = $region44
        $region43: #{tpu_custom_call.1} parent=39 // pred_region
          %p245 = scmp.lt.s32.totalorder %s17, 1
          %s246 = scalar_select %p245, %s17, 1
          %s247 = smul.addr %s246, 60
          %s248 = smul.addr %s247, 8
          %s249 = scalar_lea.vmem %s0, %s248
        $region44: #{tpu_custom_call.1} parent=39 // pred_fallthru
          _
      $region40: #{tpu_custom_call.1} parent=5 // pred_fallthru
        _
      %p250 = scmp.le.s32.totalorder 1, %s17
      %p251 = scmp.lt.s32.totalorder %s17, 3
      %p252 = pnand %p250, %p251
      %p253 = pneg %p252
      // Predicated region
      $region45: #{tpu_custom_call.1} parent=5 // pred_check
        _
      $region46: #{tpu_custom_call.1} parent=5 // pred_check_branch
        %255 = sbr.rel (%p252) target = $region48
      $region47: #{tpu_custom_call.1} parent=5 // pred_region
        %s256 = ssub.s32 %s17, 1
        // Predicated region
        $region49: #{tpu_custom_call.1} parent=47 // pred_check
          %p257 = pneg %p106
        $region50: #{tpu_custom_call.1} parent=47 // pred_check_branch
          %259 = sbr.rel (%p257) target = $region52
        $region51: #{tpu_custom_call.1} parent=47 // pred_region
          %260 = dma.done [#allocation4], 18432
        $region52: #{tpu_custom_call.1} parent=47 // pred_fallthru
          _
        %p261 = scmp.lt.s32.totalorder %s22, 1
        %s262 = scalar_select %p261, %s22, 1
        %s263 = smul.addr %s262, 60
        %s264 = smul.addr %s263, 8
        %s265 = scalar_lea.vmem %s0, %s264
        %p266 = pneg %p43
        %p267 = pneg %p40
        %p268 = pneg %p64
        %p269 = pneg %p61
        %p270 = pneg %p85
        %p271 = pneg %p82
        %p272 = pneg %p106
        %p273 = pneg %p103
        %p274 = pneg %p127
        %p275 = pneg %p124
        %p276 = pneg %p148
        %p277 = pneg %p145
        %p278 = pneg %p169
        %p279 = pneg %p166
        %p280 = pneg %p195
        %p281 = pneg %p192
        %s282 = sand.u32 %s182, 1
        %s283 = scalar_lea.sflag [#allocation5], %s282
        %s284 = sand.u32 %s182, 1
        %s285 = smul.addr %s284, 256
        %s286 = scalar_lea.vmem [#allocation6], %s285
        %p287 = scmp.lt.s32.totalorder %s22, 1
        %s288 = scalar_select %p287, %s22, 1
        %s289 = smul.addr %s288, 60
        %s290 = smul.addr %s289, 8
        %s291 = scalar_lea.vmem %s0, %s290
        %v292 = vld [vmem:[%s291] sm:$0xff]
        %v293 = vld [vmem:[%s291 + $0x8] sm:$0xff]
        %v294 = vld [vmem:[%s291 + $0x10] sm:$0xf]
        %v295 = vld [vmem:[%s291 + $0x18] sm:$0xff]
        %v296 = vld [vmem:[%s291 + $0x20] sm:$0xff]
        %v297 = vld [vmem:[%s291 + $0x28] sm:$0xf]
        %v298 = vld [vmem:[%s291 + $0x30] sm:$0xff]
        %v299 = vld [vmem:[%s291 + $0x38] sm:$0xff]
        %v300 = vld [vmem:[%s291 + $0x40] sm:$0xf]
        %v301 = vld [vmem:[%s291 + $0x48] sm:$0xff]
        %v302 = vld [vmem:[%s291 + $0x50] sm:$0xff]
        %v303 = vld [vmem:[%s291 + $0x58] sm:$0xf]
        %v304 = vld [vmem:[%s291 + $0x60] sm:$0xff]
        %v305 = vld [vmem:[%s291 + $0x68] sm:$0xff]
        %v306 = vld [vmem:[%s291 + $0x70] sm:$0xf]
        %v307 = vld [vmem:[%s291 + $0x78] sm:$0xff]
        %v308 = vld [vmem:[%s291 + $0x80] sm:$0xff]
        %v309 = vld [vmem:[%s291 + $0x88] sm:$0xf]
        %v310 = vld [vmem:[%s291 + $0x90] sm:$0xff]
        %v311 = vld [vmem:[%s291 + $0x98] sm:$0xff]
        %v312 = vld [vmem:[%s291 + $0xa0] sm:$0xf]
        %v313 = vld [vmem:[%s291 + $0xa8] sm:$0xff]
        %v314 = vld [vmem:[%s291 + $0xb0] sm:$0xff]
        %v315 = vld [vmem:[%s291 + $0xb8] sm:$0xf]
        %v316 = vld [vmem:[%s291 + $0xc0] sm:$0xff]
        %v317 = vld [vmem:[%s291 + $0xc8] sm:$0xff]
        %v318 = vld [vmem:[%s291 + $0xd0] sm:$0xf]
        %v319 = vld [vmem:[%s291 + $0xd8] sm:$0xff]
        %v320 = vld [vmem:[%s291 + $0xe0] sm:$0xff]
        %v321 = vld [vmem:[%s291 + $0xe8] sm:$0xf]
        %v322 = vld [vmem:[%s291 + $0xf0] sm:$0xff]
        %v323 = vld [vmem:[%s291 + $0xf8] sm:$0xff]
        %v324 = vld [vmem:[%s291 + $0x100] sm:$0xf]
        %v325 = vld [vmem:[%s291 + $0x108] sm:$0xff]
        %v326 = vld [vmem:[%s291 + $0x110] sm:$0xff]
        %v327 = vld [vmem:[%s291 + $0x118] sm:$0xf]
        %v328 = vld [vmem:[%s291 + $0x120] sm:$0xff]
        %v329 = vld [vmem:[%s291 + $0x128] sm:$0xff]
        %v330 = vld [vmem:[%s291 + $0x130] sm:$0xf]
        %v331 = vld [vmem:[%s291 + $0x138] sm:$0xff]
        %v332 = vld [vmem:[%s291 + $0x140] sm:$0xff]
        %v333 = vld [vmem:[%s291 + $0x148] sm:$0xf]
        %v334 = vld [vmem:[%s291 + $0x150] sm:$0xff]
        %v335 = vld [vmem:[%s291 + $0x158] sm:$0xff]
        %v336 = vld [vmem:[%s291 + $0x160] sm:$0xf]
        %v337 = vld [vmem:[%s291 + $0x168] sm:$0xff]
        %v338 = vld [vmem:[%s291 + $0x170] sm:$0xff]
        %v339 = vld [vmem:[%s291 + $0x178] sm:$0xf]
        %v340 = vld [vmem:[%s291 + $0x180] sm:$0xff]
        %v341 = vld [vmem:[%s291 + $0x188] sm:$0xff]
        %v342 = vld [vmem:[%s291 + $0x190] sm:$0xf]
        %v343 = vld [vmem:[%s291 + $0x198] sm:$0xff]
        %v344 = vld [vmem:[%s291 + $0x1a0] sm:$0xff]
        %v345 = vld [vmem:[%s291 + $0x1a8] sm:$0xf]
        %v346 = vld [vmem:[%s291 + $0x1b0] sm:$0xff]
        %v347 = vld [vmem:[%s291 + $0x1b8] sm:$0xff]
        %v348 = vld [vmem:[%s291 + $0x1c0] sm:$0xf]
        %v349 = vld [vmem:[%s291 + $0x1c8] sm:$0xff]
        %v350 = vld [vmem:[%s291 + $0x1d0] sm:$0xff]
        %v351 = vld [vmem:[%s291 + $0x1d8] sm:$0xf]
        %vm400 = vcmask 1045504
        %v401 = vrot.slane %v292, 2
        %v402 = vrot.slane %v293, 2
        %v403 = vsel %vm400, %v401, %v402
        %v404 = vrot.slane %v294, 2
        %v405 = vsel %vm400, %v402, %v404
        %v406 = vrot.slane %v295, 2
        %v407 = vrot.slane %v296, 2
        %v408 = vsel %vm400, %v406, %v407
        %v409 = vrot.slane %v297, 2
        %v410 = vsel %vm400, %v407, %v409
        %v411 = vrot.slane %v298, 2
        %v412 = vrot.slane %v299, 2
        %v413 = vsel %vm400, %v411, %v412
        %v414 = vrot.slane %v300, 2
        %v415 = vsel %vm400, %v412, %v414
        %v416 = vrot.slane %v301, 2
        %v417 = vrot.slane %v302, 2
        %v418 = vsel %vm400, %v416, %v417
        %v419 = vrot.slane %v303, 2
        %v420 = vsel %vm400, %v417, %v419
        %v421 = vrot.slane %v304, 2
        %v422 = vrot.slane %v305, 2
        %v423 = vsel %vm400, %v421, %v422
        %v424 = vrot.slane %v306, 2
        %v425 = vsel %vm400, %v422, %v424
        %v426 = vrot.slane %v307, 2
        %v427 = vrot.slane %v308, 2
        %v428 = vsel %vm400, %v426, %v427
        %v429 = vrot.slane %v309, 2
        %v430 = vsel %vm400, %v427, %v429
        %v431 = vrot.slane %v310, 2
        %v432 = vrot.slane %v311, 2
        %v433 = vsel %vm400, %v431, %v432
        %v434 = vrot.slane %v312, 2
        %v435 = vsel %vm400, %v432, %v434
        %v436 = vrot.slane %v313, 2
        %v437 = vrot.slane %v314, 2
        %v438 = vsel %vm400, %v436, %v437
        %v439 = vrot.slane %v315, 2
        %v440 = vsel %vm400, %v437, %v439
        %v441 = vrot.slane %v316, 2
        %v442 = vrot.slane %v317, 2
        %v443 = vsel %vm400, %v441, %v442
        %v444 = vrot.slane %v318, 2
        %v445 = vsel %vm400, %v442, %v444
        %v446 = vrot.slane %v319, 2
        %v447 = vrot.slane %v320, 2
        %v448 = vsel %vm400, %v446, %v447
        %v449 = vrot.slane %v321, 2
        %v450 = vsel %vm400, %v447, %v449
        %v451 = vrot.slane %v322, 2
        %v452 = vrot.slane %v323, 2
        %v453 = vsel %vm400, %v451, %v452
        %v454 = vrot.slane %v324, 2
        %v455 = vsel %vm400, %v452, %v454
        %v456 = vrot.slane %v325, 2
        %v457 = vrot.slane %v326, 2
        %v458 = vsel %vm400, %v456, %v457
        %v459 = vrot.slane %v327, 2
        %v460 = vsel %vm400, %v457, %v459
        %v461 = vrot.slane %v328, 2
        %v462 = vrot.slane %v329, 2
        %v463 = vsel %vm400, %v461, %v462
        %v464 = vrot.slane %v330, 2
        %v465 = vsel %vm400, %v462, %v464
        %v466 = vrot.slane %v331, 2
        %v467 = vrot.slane %v332, 2
        %v468 = vsel %vm400, %v466, %v467
        %v469 = vrot.slane %v333, 2
        %v470 = vsel %vm400, %v467, %v469
        %v471 = vrot.slane %v334, 2
        %v472 = vrot.slane %v335, 2
        %v473 = vsel %vm400, %v471, %v472
        %v474 = vrot.slane %v336, 2
        %v475 = vsel %vm400, %v472, %v474
        %v476 = vrot.slane %v337, 2
        %v477 = vrot.slane %v338, 2
        %v478 = vsel %vm400, %v476, %v477
        %v479 = vrot.slane %v339, 2
        %v480 = vsel %vm400, %v477, %v479
        %vm513 = vcmask 1043456
        %v514 = vrot.slane %v292, 4
        %v515 = vrot.slane %v293, 4
        %v516 = vsel %vm513, %v514, %v515
        %v517 = vrot.slane %v294, 4
        %v518 = vsel %vm513, %v515, %v517
        %v519 = vrot.slane %v295, 4
        %v520 = vrot.slane %v296, 4
        %v521 = vsel %vm513, %v519, %v520
        %v522 = vrot.slane %v297, 4
        %v523 = vsel %vm513, %v520, %v522
        %v524 = vrot.slane %v298, 4
        %v525 = vrot.slane %v299, 4
        %v526 = vsel %vm513, %v524, %v525
        %v527 = vrot.slane %v300, 4
        %v528 = vsel %vm513, %v525, %v527
        %v529 = vrot.slane %v301, 4
        %v530 = vrot.slane %v302, 4
        %v531 = vsel %vm513, %v529, %v530
        %v532 = vrot.slane %v303, 4
        %v533 = vsel %vm513, %v530, %v532
        %v534 = vrot.slane %v304, 4
        %v535 = vrot.slane %v305, 4
        %v536 = vsel %vm513, %v534, %v535
        %v537 = vrot.slane %v306, 4
        %v538 = vsel %vm513, %v535, %v537
        %v539 = vrot.slane %v307, 4
        %v540 = vrot.slane %v308, 4
        %v541 = vsel %vm513, %v539, %v540
        %v542 = vrot.slane %v309, 4
        %v543 = vsel %vm513, %v540, %v542
        %v544 = vrot.slane %v310, 4
        %v545 = vrot.slane %v311, 4
        %v546 = vsel %vm513, %v544, %v545
        %v547 = vrot.slane %v312, 4
        %v548 = vsel %vm513, %v545, %v547
        %v549 = vrot.slane %v313, 4
        %v550 = vrot.slane %v314, 4
        %v551 = vsel %vm513, %v549, %v550
        %v552 = vrot.slane %v315, 4
        %v553 = vsel %vm513, %v550, %v552
        %v554 = vrot.slane %v316, 4
        %v555 = vrot.slane %v317, 4
        %v556 = vsel %vm513, %v554, %v555
        %v557 = vrot.slane %v318, 4
        %v558 = vsel %vm513, %v555, %v557
        %v559 = vrot.slane %v319, 4
        %v560 = vrot.slane %v320, 4
        %v561 = vsel %vm513, %v559, %v560
        %v562 = vrot.slane %v321, 4
        %v563 = vsel %vm513, %v560, %v562
        %v564 = vrot.slane %v322, 4
        %v565 = vrot.slane %v323, 4
        %v566 = vsel %vm513, %v564, %v565
        %v567 = vrot.slane %v324, 4
        %v568 = vsel %vm513, %v565, %v567
        %v569 = vrot.slane %v325, 4
        %v570 = vrot.slane %v326, 4
        %v571 = vsel %vm513, %v569, %v570
        %v572 = vrot.slane %v327, 4
        %v573 = vsel %vm513, %v570, %v572
        %v574 = vrot.slane %v328, 4
        %v575 = vrot.slane %v329, 4
        %v576 = vsel %vm513, %v574, %v575
        %v577 = vrot.slane %v330, 4
        %v578 = vsel %vm513, %v575, %v577
        %v579 = vrot.slane %v331, 4
        %v580 = vrot.slane %v332, 4
        %v581 = vsel %vm513, %v579, %v580
        %v582 = vrot.slane %v333, 4
        %v583 = vsel %vm513, %v580, %v582
        %v584 = vrot.slane %v334, 4
        %v585 = vrot.slane %v335, 4
        %v586 = vsel %vm513, %v584, %v585
        %v587 = vrot.slane %v336, 4
        %v588 = vsel %vm513, %v585, %v587
        %v589 = vrot.slane %v337, 4
        %v590 = vrot.slane %v338, 4
        %v591 = vsel %vm513, %v589, %v590
        %v592 = vrot.slane %v339, 4
        %v593 = vsel %vm513, %v590, %v592
        %v632 = vrot.slane %v340, 2
        %v633 = vrot.slane %v341, 2
        %v634 = vsel %vm400, %v632, %v633
        %v635 = vrot.slane %v342, 2
        %v636 = vsel %vm400, %v633, %v635
        %v637 = vrot.slane %v343, 2
        %v638 = vrot.slane %v344, 2
        %v639 = vsel %vm400, %v637, %v638
        %v640 = vrot.slane %v345, 2
        %v641 = vsel %vm400, %v638, %v640
        %v646 = vrot.slane %v340, 4
        %v647 = vrot.slane %v341, 4
        %v648 = vsel %vm513, %v646, %v647
        %v649 = vrot.slane %v342, 4
        %v650 = vsel %vm513, %v647, %v649
        %v651 = vrot.slane %v343, 4
        %v652 = vrot.slane %v344, 4
        %v653 = vsel %vm513, %v651, %v652
        %v654 = vrot.slane %v345, 4
        %v655 = vsel %vm513, %v652, %v654
        %v666 = vrot.slane %v346, 2
        %v667 = vrot.slane %v347, 2
        %v668 = vsel %vm400, %v666, %v667
        %v669 = vrot.slane %v348, 2
        %v670 = vsel %vm400, %v667, %v669
        %v671 = vrot.slane %v349, 2
        %v672 = vrot.slane %v350, 2
        %v673 = vsel %vm400, %v671, %v672
        %v674 = vrot.slane %v351, 2
        %v675 = vsel %vm400, %v672, %v674
        %v680 = vrot.slane %v346, 4
        %v681 = vrot.slane %v347, 4
        %v682 = vsel %vm513, %v680, %v681
        %v683 = vrot.slane %v348, 4
        %v684 = vsel %vm513, %v681, %v683
        %v685 = vrot.slane %v349, 4
        %v686 = vrot.slane %v350, 4
        %v687 = vsel %vm513, %v685, %v686
        %v688 = vrot.slane %v351, 4
        %v689 = vsel %vm513, %v686, %v688
        %v694 = vld [vmem:[%s1] sm:$0xff]
        %v695 = vld [vmem:[%s1 + $0x8] sm:$0xff]
        %v696 = vld [vmem:[%s1 + $0x10] sm:$0xff]
        %v697 = vld [vmem:[%s1 + $0x18] sm:$0xff]
        %v698 = vld [vmem:[%s1 + $0x20] sm:$0xff]
        %v699 = vld [vmem:[%s1 + $0x28] sm:$0xff]
        %v700 = vld [vmem:[%s1 + $0x30] sm:$0xff]
        %v701 = vld [vmem:[%s1 + $0x38] sm:$0xff]
        %v702 = vld [vmem:[%s1 + $0x40] sm:$0xff]
        %v703 = vld [vmem:[%s1 + $0x48] sm:$0xff]
        %v704 = vld [vmem:[%s1 + $0x50] sm:$0xff]
        %v705 = vld [vmem:[%s1 + $0x58] sm:$0xff]
        %v706 = vld [vmem:[%s1 + $0x60] sm:$0xff]
        %v707 = vld [vmem:[%s1 + $0x68] sm:$0xff]
        %v708 = vld [vmem:[%s1 + $0x70] sm:$0xff]
        %v709 = vld [vmem:[%s1 + $0x78] sm:$0xff]
        %v710 = vld [vmem:[%s1 + $0x80] sm:$0xff]
        %v711 = vld [vmem:[%s1 + $0x88] sm:$0xff]
        %v712 = vld [vmem:[%s1 + $0x90] sm:$0xff]
        %v713 = vld [vmem:[%s1 + $0x98] sm:$0xff]
        %v714 = vld [vmem:[%s1 + $0xa0] sm:$0xff]
        %v715 = vld [vmem:[%s1 + $0xa8] sm:$0xff]
        %v716 = vld [vmem:[%s1 + $0xb0] sm:$0xff]
        %v717 = vld [vmem:[%s1 + $0xb8] sm:$0xff]
        %v718 = vld [vmem:[%s1 + $0xc0] sm:$0xff]
        %v719 = vld [vmem:[%s1 + $0xc8] sm:$0xff]
        %v720 = vld [vmem:[%s1 + $0xd0] sm:$0xff]
        %v721 = vld [vmem:[%s1 + $0xd8] sm:$0xff]
        %v722 = vld [vmem:[%s1 + $0xe0] sm:$0xff]
        %v723 = vld [vmem:[%s1 + $0xe8] sm:$0xff]
        %v724 = vld [vmem:[%s1 + $0xf0] sm:$0xff]
        %v725 = vld [vmem:[%s1 + $0xf8] sm:$0xff]
        %v726 = vld [vmem:[%s1 + $0x100] sm:$0xff]
        %v727 = vld [vmem:[%s1 + $0x108] sm:$0xff]
        %v728 = vld [vmem:[%s1 + $0x110] sm:$0xff]
        %v729 = vld [vmem:[%s1 + $0x118] sm:$0xff]
        %v730 = vld [vmem:[%s1 + $0x120] sm:$0xff]
        %v731 = vld [vmem:[%s1 + $0x128] sm:$0xff]
        %v732 = vld [vmem:[%s1 + $0x130] sm:$0xff]
        %v733 = vld [vmem:[%s1 + $0x138] sm:$0xff]
        %v734 = vld [vmem:[%s1 + $0x140] sm:$0xff]
        %v735 = vld [vmem:[%s1 + $0x148] sm:$0xff]
        %v736 = vld [vmem:[%s1 + $0x150] sm:$0xff]
        %v737 = vld [vmem:[%s1 + $0x158] sm:$0xff]
        %v738 = vld [vmem:[%s1 + $0x160] sm:$0xff]
        %v739 = vld [vmem:[%s1 + $0x168] sm:$0xff]
        %v740 = vld [vmem:[%s1 + $0x170] sm:$0xff]
        %v741 = vld [vmem:[%s1 + $0x178] sm:$0xff]
        %v742 = vld [vmem:[%s1 + $0x180] sm:$0xff]
        %v743 = vld [vmem:[%s1 + $0x188] sm:$0xff]
        %v744 = vld [vmem:[%s1 + $0x190] sm:$0xff]
        %v745 = vld [vmem:[%s1 + $0x198] sm:$0xff]
        %v746 = vld [vmem:[%s1 + $0x1a0] sm:$0xff]
        %v747 = vld [vmem:[%s1 + $0x1a8] sm:$0xff]
        %v748 = vld [vmem:[%s1 + $0x1b0] sm:$0xff]
        %v749 = vld [vmem:[%s1 + $0x1b8] sm:$0xff]
        %v750 = vld [vmem:[%s1 + $0x1c0] sm:$0xff]
        %v751 = vld [vmem:[%s1 + $0x1c8] sm:$0xff]
        %v752 = vld [vmem:[%s1 + $0x1d0] sm:$0xff]
        %v753 = vld [vmem:[%s1 + $0x1d8] sm:$0xff]
        %v754 = vld [vmem:[%s1 + $0x1e0] sm:$0xff]
        %v755 = vld [vmem:[%s1 + $0x1e8] sm:$0xff]
        %v756 = vld [vmem:[%s1 + $0x1f0] sm:$0xff]
        %v757 = vld [vmem:[%s1 + $0x1f8] sm:$0xff]
        %v758 = vld [vmem:[%s1 + $0x200] sm:$0xff]
        %v759 = vld [vmem:[%s1 + $0x208] sm:$0xff]
        %v760 = vld [vmem:[%s1 + $0x210] sm:$0xff]
        %v761 = vld [vmem:[%s1 + $0x218] sm:$0xff]
        %v762 = vld [vmem:[%s1 + $0x220] sm:$0xff]
        %v763 = vld [vmem:[%s1 + $0x228] sm:$0xff]
        %v764 = vld [vmem:[%s1 + $0x230] sm:$0xff]
        %v765 = vld [vmem:[%s1 + $0x238] sm:$0xff]
        %v766 = vld [vmem:[%s1 + $0x240] sm:$0xff]
        %v767 = vld [vmem:[%s1 + $0x248] sm:$0xff]
        %v768 = vld [vmem:[%s1 + $0x250] sm:$0xff]
        %v769 = vld [vmem:[%s1 + $0x258] sm:$0xff]
        %v770 = vld [vmem:[%s1 + $0x260] sm:$0xff]
        %v771 = vld [vmem:[%s1 + $0x268] sm:$0xff]
        %v772 = vld [vmem:[%s1 + $0x270] sm:$0xff]
        %v773 = vld [vmem:[%s1 + $0x278] sm:$0xff]
        %v774 = vld [vmem:[%s1 + $0x280] sm:$0xff]
        %v775 = vld [vmem:[%s1 + $0x288] sm:$0xff]
        %v776 = vld [vmem:[%s1 + $0x290] sm:$0xff]
        %v777 = vld [vmem:[%s1 + $0x298] sm:$0xff]
        %v778 = vld [vmem:[%s1 + $0x2a0] sm:$0xff]
        %v779 = vld [vmem:[%s1 + $0x2a8] sm:$0xff]
        %v780 = vld [vmem:[%s1 + $0x2b0] sm:$0xff]
        %v781 = vld [vmem:[%s1 + $0x2b8] sm:$0xff]
        %v782 = vld [vmem:[%s1 + $0x2c0] sm:$0xff]
        %v783 = vld [vmem:[%s1 + $0x2c8] sm:$0xff]
        %v784 = vld [vmem:[%s1 + $0x2d0] sm:$0xff]
        %v785 = vld [vmem:[%s1 + $0x2d8] sm:$0xff]
        %v786 = vld [vmem:[%s1 + $0x2e0] sm:$0xff]
        %v787 = vld [vmem:[%s1 + $0x2e8] sm:$0xff]
        %v788 = vld [vmem:[%s1 + $0x2f0] sm:$0xff]
        %v789 = vld [vmem:[%s1 + $0x2f8] sm:$0xff]
        %v790 = vld [vmem:[%s1 + $0x300] sm:$0xff]
        %v791 = vld [vmem:[%s1 + $0x308] sm:$0xff]
        %v792 = vld [vmem:[%s1 + $0x310] sm:$0xff]
        %v793 = vld [vmem:[%s1 + $0x318] sm:$0xff]
        %v794 = vld [vmem:[%s1 + $0x320] sm:$0xff]
        %v795 = vld [vmem:[%s1 + $0x328] sm:$0xff]
        %v796 = vld [vmem:[%s1 + $0x330] sm:$0xff]
        %v797 = vld [vmem:[%s1 + $0x338] sm:$0xff]
        %v798 = vld [vmem:[%s1 + $0x340] sm:$0xff]
        %v799 = vld [vmem:[%s1 + $0x348] sm:$0xff]
        %v800 = vld [vmem:[%s1 + $0x350] sm:$0xff]
        %v801 = vld [vmem:[%s1 + $0x358] sm:$0xff]
        %v802 = vld [vmem:[%s1 + $0x360] sm:$0xff]
        %v803 = vld [vmem:[%s1 + $0x368] sm:$0xff]
        %v804 = vld [vmem:[%s1 + $0x370] sm:$0xff]
        %v805 = vld [vmem:[%s1 + $0x378] sm:$0xff]
        %v806 = vld [vmem:[%s1 + $0x380] sm:$0xff]
        %v807 = vld [vmem:[%s1 + $0x388] sm:$0xff]
        %v808 = vld [vmem:[%s1 + $0x390] sm:$0xff]
        %v809 = vld [vmem:[%s1 + $0x398] sm:$0xff]
        %v810 = vld [vmem:[%s1 + $0x3a0] sm:$0xff]
        %v811 = vld [vmem:[%s1 + $0x3a8] sm:$0xff]
        %v812 = vld [vmem:[%s1 + $0x3b0] sm:$0xff]
        %v813 = vld [vmem:[%s1 + $0x3b8] sm:$0xff]
        %v814 = vld [vmem:[%s1 + $0x3c0] sm:$0xff]
        %v815 = vld [vmem:[%s1 + $0x3c8] sm:$0xff]
        %v816 = vld [vmem:[%s1 + $0x3d0] sm:$0xff]
        %v817 = vld [vmem:[%s1 + $0x3d8] sm:$0xff]
        %v818 = vld [vmem:[%s1 + $0x3e0] sm:$0xff]
        %v819 = vld [vmem:[%s1 + $0x3e8] sm:$0xff]
        %v820 = vld [vmem:[%s1 + $0x3f0] sm:$0xff]
        %v821 = vld [vmem:[%s1 + $0x3f8] sm:$0xff]
        %v822 = vld [vmem:[%s1 + $0x400] sm:$0xff]
        %v823 = vld [vmem:[%s1 + $0x408] sm:$0xff]
        %v824 = vld [vmem:[%s1 + $0x410] sm:$0xff]
        %v825 = vld [vmem:[%s1 + $0x418] sm:$0xff]
        %v826 = vld [vmem:[%s1 + $0x420] sm:$0xff]
        %v827 = vld [vmem:[%s1 + $0x428] sm:$0xff]
        %v828 = vld [vmem:[%s1 + $0x430] sm:$0xff]
        %v829 = vld [vmem:[%s1 + $0x438] sm:$0xff]
        %v830 = vld [vmem:[%s1 + $0x440] sm:$0xff]
        %v831 = vld [vmem:[%s1 + $0x448] sm:$0xff]
        %v832 = vld [vmem:[%s1 + $0x450] sm:$0xff]
        %v833 = vld [vmem:[%s1 + $0x458] sm:$0xff]
        %v834 = vld [vmem:[%s1 + $0x460] sm:$0xff]
        %v835 = vld [vmem:[%s1 + $0x468] sm:$0xff]
        %v836 = vld [vmem:[%s1 + $0x470] sm:$0xff]
        %v837 = vld [vmem:[%s1 + $0x478] sm:$0xff]
        %v838 = vld [vmem:[%s2] sm:$0x1]
        %v840 = vlaneseq
        %v841 = vshrl.u32 %v840, 7
        %v842 = vsub.s32 0, %v841
        %v843 = vrot.slane %v838, %v842
        %845 = vmatprep.subr.mxu0 0.0
        %846 = vmatpush1.msra.mxu0 %v709
        %847 = vmatprep.subr.mxu0 0.0
        %848 = vmatpush1.msra.mxu0 %v708
        %849 = vmatprep.subr.mxu0 0.0
        %850 = vmatpush1.msra.mxu0 %v707
        %851 = vmatprep.subr.mxu0 0.0
        %852 = vmatpush1.msra.mxu0 %v706
        %853 = vmatprep.subr.mxu0 0.0
        %854 = vmatpush1.msra.mxu0 %v705
        %855 = vmatprep.subr.mxu0 0.0
        %856 = vmatpush1.msra.mxu0 %v704
        %857 = vmatprep.subr.mxu0 0.0
        %858 = vmatpush1.msra.mxu0 %v703
        %859 = vmatprep.subr.mxu0 0.0
        %860 = vmatpush1.msra.mxu0 %v702
        %861 = vmatprep.subr.mxu0 0.0
        %862 = vmatpush1.msra.mxu0 %v701
        %863 = vmatprep.subr.mxu0 0.0
        %864 = vmatpush1.msra.mxu0 %v700
        %865 = vmatprep.subr.mxu0 0.0
        %866 = vmatpush1.msra.mxu0 %v699
        %867 = vmatprep.subr.mxu0 0.0
        %868 = vmatpush1.msra.mxu0 %v698
        %869 = vmatprep.subr.mxu0 0.0
        %870 = vmatpush1.msra.mxu0 %v697
        %871 = vmatprep.subr.mxu0 0.0
        %872 = vmatpush1.msra.mxu0 %v696
        %873 = vmatprep.subr.mxu0 0.0
        %874 = vmatpush1.msra.mxu0 %v695
        %875 = vmatprep.subr.mxu0 0.0
        %876 = vmatpush1.msra.mxu0 %v694
        %877 = vmatprep.subr.mxu0 0.0
        %878 = vmatpush2.msra.mxu0 %v725
        %879 = vmatprep.subr.mxu0 0.0
        %880 = vmatpush2.msra.mxu0 %v724
        %881 = vmatprep.subr.mxu0 0.0
        %882 = vmatpush2.msra.mxu0 %v723
        %883 = vmatprep.subr.mxu0 0.0
        %884 = vmatpush2.msra.mxu0 %v722
        %885 = vmatprep.subr.mxu0 0.0
        %886 = vmatpush2.msra.mxu0 %v721
        %887 = vmatprep.subr.mxu0 0.0
        %888 = vmatpush2.msra.mxu0 %v720
        %889 = vmatprep.subr.mxu0 0.0
        %890 = vmatpush2.msra.mxu0 %v719
        %891 = vmatprep.subr.mxu0 0.0
        %892 = vmatpush2.msra.mxu0 %v718
        %893 = vmatprep.subr.mxu0 0.0
        %894 = vmatpush2.msra.mxu0 %v717
        %895 = vmatprep.subr.mxu0 0.0
        %896 = vmatpush2.msra.mxu0 %v716
        %897 = vmatprep.subr.mxu0 0.0
        %898 = vmatpush2.msra.mxu0 %v715
        %899 = vmatprep.subr.mxu0 0.0
        %900 = vmatpush2.msra.mxu0 %v714
        %901 = vmatprep.subr.mxu0 0.0
        %902 = vmatpush2.msra.mxu0 %v713
        %903 = vmatprep.subr.mxu0 0.0
        %904 = vmatpush2.msra.mxu0 %v712
        %905 = vmatprep.subr.mxu0 0.0
        %906 = vmatpush2.msra.mxu0 %v711
        %907 = vmatprep.subr.mxu0 0.0
        %908 = vmatpush2.msra.mxu0 %v710
        %909 = vmatprep.mubr.f32.mxu0 %v403
        %910 = vmatmul.mubr.f32.gmra.mxu0 %v292
        %v911 = vpop.f32.mrf.mxu0
        %v912 = vadd.f32 %v843, %v911
        %v913 = vpop.f32.mrf.mxu0
        %914 = vmatprep.mubr.f32.mxu0 %v405
        %915 = vmatmul.mubr.f32.gmra.mxu0 %v293
        %v916 = vpop.f32.mrf.mxu0
        %v917 = vadd.f32 %v843, %v916
        %v918 = vpop.f32.mrf.mxu0
        %919 = vmatprep.mubr.f32.mxu0 %v408
        %920 = vmatmul.mubr.f32.gmra.mxu0 %v295
        %v921 = vpop.f32.mrf.mxu0
        %v922 = vadd.f32 %v843, %v921
        %v923 = vpop.f32.mrf.mxu0
        %924 = vmatprep.mubr.f32.mxu0 %v410
        %925 = vmatmul.mubr.f32.gmra.mxu0 %v296
        %v926 = vpop.f32.mrf.mxu0
        %v927 = vadd.f32 %v843, %v926
        %v928 = vpop.f32.mrf.mxu0
        %929 = vmatprep.mubr.f32.mxu0 %v413
        %930 = vmatmul.mubr.f32.gmra.mxu0 %v298
        %v931 = vpop.f32.mrf.mxu0
        %v932 = vadd.f32 %v843, %v931
        %v933 = vpop.f32.mrf.mxu0
        %934 = vmatprep.mubr.f32.mxu0 %v415
        %935 = vmatmul.mubr.f32.gmra.mxu0 %v299
        %v936 = vpop.f32.mrf.mxu0
        %v937 = vadd.f32 %v843, %v936
        %v938 = vpop.f32.mrf.mxu0
        %939 = vmatprep.mubr.f32.mxu0 %v418
        %940 = vmatmul.mubr.f32.gmra.mxu0 %v301
        %v941 = vpop.f32.mrf.mxu0
        %v942 = vadd.f32 %v843, %v941
        %v943 = vpop.f32.mrf.mxu0
        %944 = vmatprep.mubr.f32.mxu0 %v420
        %945 = vmatmul.mubr.f32.gmra.mxu0 %v302
        %v946 = vpop.f32.mrf.mxu0
        %v947 = vadd.f32 %v843, %v946
        %v948 = vpop.f32.mrf.mxu0
        %949 = vmatprep.mubr.f32.mxu0 %v423
        %950 = vmatmul.mubr.f32.gmra.mxu0 %v304
        %v951 = vpop.f32.mrf.mxu0
        %v952 = vadd.f32 %v843, %v951
        %v953 = vpop.f32.mrf.mxu0
        %954 = vmatprep.mubr.f32.mxu0 %v425
        %955 = vmatmul.mubr.f32.gmra.mxu0 %v305
        %v956 = vpop.f32.mrf.mxu0
        %v957 = vadd.f32 %v843, %v956
        %v958 = vpop.f32.mrf.mxu0
        %959 = vmatprep.mubr.f32.mxu0 %v428
        %960 = vmatmul.mubr.f32.gmra.mxu0 %v307
        %v961 = vpop.f32.mrf.mxu0
        %v962 = vadd.f32 %v843, %v961
        %v963 = vpop.f32.mrf.mxu0
        %964 = vmatprep.mubr.f32.mxu0 %v430
        %965 = vmatmul.mubr.f32.gmra.mxu0 %v308
        %v966 = vpop.f32.mrf.mxu0
        %v967 = vadd.f32 %v843, %v966
        %v968 = vpop.f32.mrf.mxu0
        %969 = vmatprep.mubr.f32.mxu0 %v433
        %970 = vmatmul.mubr.f32.gmra.mxu0 %v310
        %v971 = vpop.f32.mrf.mxu0
        %v972 = vadd.f32 %v843, %v971
        %v973 = vpop.f32.mrf.mxu0
        %974 = vmatprep.mubr.f32.mxu0 %v435
        %975 = vmatmul.mubr.f32.gmra.mxu0 %v311
        %v976 = vpop.f32.mrf.mxu0
        %v977 = vadd.f32 %v843, %v976
        %v978 = vpop.f32.mrf.mxu0
        %979 = vmatprep.mubr.f32.mxu0 %v438
        %980 = vmatmul.mubr.f32.gmra.mxu0 %v313
        %v981 = vpop.f32.mrf.mxu0
        %v982 = vadd.f32 %v843, %v981
        %v983 = vpop.f32.mrf.mxu0
        %984 = vmatprep.mubr.f32.mxu0 %v440
        %985 = vmatmul.mubr.f32.gmra.mxu0 %v314
        %v986 = vpop.f32.mrf.mxu0
        %v987 = vadd.f32 %v843, %v986
        %v988 = vpop.f32.mrf.mxu0
        %989 = vmatprep.mubr.f32.mxu0 %v443
        %990 = vmatmul.mubr.f32.gmra.mxu0 %v316
        %v991 = vpop.f32.mrf.mxu0
        %v992 = vadd.f32 %v843, %v991
        %v993 = vpop.f32.mrf.mxu0
        %994 = vmatprep.mubr.f32.mxu0 %v445
        %995 = vmatmul.mubr.f32.gmra.mxu0 %v317
        %v996 = vpop.f32.mrf.mxu0
        %v997 = vadd.f32 %v843, %v996
        %v998 = vpop.f32.mrf.mxu0
        %999 = vmatprep.mubr.f32.mxu0 %v448
        %1000 = vmatmul.mubr.f32.gmra.mxu0 %v319
        %v1001 = vpop.f32.mrf.mxu0
        %v1002 = vadd.f32 %v843, %v1001
        %v1003 = vpop.f32.mrf.mxu0
        %1004 = vmatprep.mubr.f32.mxu0 %v450
        %1005 = vmatmul.mubr.f32.gmra.mxu0 %v320
        %v1006 = vpop.f32.mrf.mxu0
        %v1007 = vadd.f32 %v843, %v1006
        %v1008 = vpop.f32.mrf.mxu0
        %1009 = vmatprep.mubr.f32.mxu0 %v453
        %1010 = vmatmul.mubr.f32.gmra.mxu0 %v322
        %v1011 = vpop.f32.mrf.mxu0
        %v1012 = vadd.f32 %v843, %v1011
        %v1013 = vpop.f32.mrf.mxu0
        %1014 = vmatprep.mubr.f32.mxu0 %v455
        %1015 = vmatmul.mubr.f32.gmra.mxu0 %v323
        %v1016 = vpop.f32.mrf.mxu0
        %v1017 = vadd.f32 %v843, %v1016
        %v1018 = vpop.f32.mrf.mxu0
        %1019 = vmatprep.mubr.f32.mxu0 %v458
        %1020 = vmatmul.mubr.f32.gmra.mxu0 %v325
        %v1021 = vpop.f32.mrf.mxu0
        %v1022 = vadd.f32 %v843, %v1021
        %v1023 = vpop.f32.mrf.mxu0
        %1024 = vmatprep.mubr.f32.mxu0 %v460
        %1025 = vmatmul.mubr.f32.gmra.mxu0 %v326
        %v1026 = vpop.f32.mrf.mxu0
        %v1027 = vadd.f32 %v843, %v1026
        %v1028 = vpop.f32.mrf.mxu0
        %1029 = vmatprep.mubr.f32.mxu0 %v463
        %1030 = vmatmul.mubr.f32.gmra.mxu0 %v328
        %v1031 = vpop.f32.mrf.mxu0
        %v1032 = vadd.f32 %v843, %v1031
        %v1033 = vpop.f32.mrf.mxu0
        %1034 = vmatprep.mubr.f32.mxu0 %v465
        %1035 = vmatmul.mubr.f32.gmra.mxu0 %v329
        %v1036 = vpop.f32.mrf.mxu0
        %v1037 = vadd.f32 %v843, %v1036
        %v1038 = vpop.f32.mrf.mxu0
        %1039 = vmatprep.mubr.f32.mxu0 %v468
        %1040 = vmatmul.mubr.f32.gmra.mxu0 %v331
        %v1041 = vpop.f32.mrf.mxu0
        %v1042 = vadd.f32 %v843, %v1041
        %v1043 = vpop.f32.mrf.mxu0
        %1044 = vmatprep.mubr.f32.mxu0 %v470
        %1045 = vmatmul.mubr.f32.gmra.mxu0 %v332
        %v1046 = vpop.f32.mrf.mxu0
        %v1047 = vadd.f32 %v843, %v1046
        %v1048 = vpop.f32.mrf.mxu0
        %1049 = vmatprep.mubr.f32.mxu0 %v473
        %1050 = vmatmul.mubr.f32.gmra.mxu0 %v334
        %v1051 = vpop.f32.mrf.mxu0
        %v1052 = vadd.f32 %v843, %v1051
        %v1053 = vpop.f32.mrf.mxu0
        %1054 = vmatprep.mubr.f32.mxu0 %v475
        %1055 = vmatmul.mubr.f32.gmra.mxu0 %v335
        %v1056 = vpop.f32.mrf.mxu0
        %v1057 = vadd.f32 %v843, %v1056
        %v1058 = vpop.f32.mrf.mxu0
        %1059 = vmatprep.mubr.f32.mxu0 %v478
        %1060 = vmatmul.mubr.f32.gmra.mxu0 %v337
        %v1061 = vpop.f32.mrf.mxu0
        %v1062 = vadd.f32 %v843, %v1061
        %v1063 = vpop.f32.mrf.mxu0
        %1064 = vmatprep.mubr.f32.mxu0 %v480
        %1065 = vmatmul.mubr.f32.gmra.mxu0 %v338
        %v1066 = vpop.f32.mrf.mxu0
        %v1067 = vadd.f32 %v843, %v1066
        %v1068 = vpop.f32.mrf.mxu0
        %1069 = vdwg.mxu0
        %1070 = vmatprep.subr.mxu0 0.0
        %1071 = vmatpush1.msra.mxu0 %v741
        %1072 = vmatprep.subr.mxu0 0.0
        %1073 = vmatpush1.msra.mxu0 %v740
        %1074 = vmatprep.subr.mxu0 0.0
        %1075 = vmatpush1.msra.mxu0 %v739
        %1076 = vmatprep.subr.mxu0 0.0
        %1077 = vmatpush1.msra.mxu0 %v738
        %1078 = vmatprep.subr.mxu0 0.0
        %1079 = vmatpush1.msra.mxu0 %v737
        %1080 = vmatprep.subr.mxu0 0.0
        %1081 = vmatpush1.msra.mxu0 %v736
        %1082 = vmatprep.subr.mxu0 0.0
        %1083 = vmatpush1.msra.mxu0 %v735
        %1084 = vmatprep.subr.mxu0 0.0
        %1085 = vmatpush1.msra.mxu0 %v734
        %1086 = vmatprep.subr.mxu0 0.0
        %1087 = vmatpush1.msra.mxu0 %v733
        %1088 = vmatprep.subr.mxu0 0.0
        %1089 = vmatpush1.msra.mxu0 %v732
        %1090 = vmatprep.subr.mxu0 0.0
        %1091 = vmatpush1.msra.mxu0 %v731
        %1092 = vmatprep.subr.mxu0 0.0
        %1093 = vmatpush1.msra.mxu0 %v730
        %1094 = vmatprep.subr.mxu0 0.0
        %1095 = vmatpush1.msra.mxu0 %v729
        %1096 = vmatprep.subr.mxu0 0.0
        %1097 = vmatpush1.msra.mxu0 %v728
        %1098 = vmatprep.subr.mxu0 0.0
        %1099 = vmatpush1.msra.mxu0 %v727
        %1100 = vmatprep.subr.mxu0 0.0
        %1101 = vmatpush1.msra.mxu0 %v726
        %1102 = vmatprep.subr.mxu0 0.0
        %1103 = vmatpush2.msra.mxu0 %v757
        %1104 = vmatprep.subr.mxu0 0.0
        %1105 = vmatpush2.msra.mxu0 %v756
        %1106 = vmatprep.subr.mxu0 0.0
        %1107 = vmatpush2.msra.mxu0 %v755
        %1108 = vmatprep.subr.mxu0 0.0
        %1109 = vmatpush2.msra.mxu0 %v754
        %1110 = vmatprep.subr.mxu0 0.0
        %1111 = vmatpush2.msra.mxu0 %v753
        %1112 = vmatprep.subr.mxu0 0.0
        %1113 = vmatpush2.msra.mxu0 %v752
        %1114 = vmatprep.subr.mxu0 0.0
        %1115 = vmatpush2.msra.mxu0 %v751
        %1116 = vmatprep.subr.mxu0 0.0
        %1117 = vmatpush2.msra.mxu0 %v750
        %1118 = vmatprep.subr.mxu0 0.0
        %1119 = vmatpush2.msra.mxu0 %v749
        %1120 = vmatprep.subr.mxu0 0.0
        %1121 = vmatpush2.msra.mxu0 %v748
        %1122 = vmatprep.subr.mxu0 0.0
        %1123 = vmatpush2.msra.mxu0 %v747
        %1124 = vmatprep.subr.mxu0 0.0
        %1125 = vmatpush2.msra.mxu0 %v746
        %1126 = vmatprep.subr.mxu0 0.0
        %1127 = vmatpush2.msra.mxu0 %v745
        %1128 = vmatprep.subr.mxu0 0.0
        %1129 = vmatpush2.msra.mxu0 %v744
        %1130 = vmatprep.subr.mxu0 0.0
        %1131 = vmatpush2.msra.mxu0 %v743
        %1132 = vmatprep.subr.mxu0 0.0
        %1133 = vmatpush2.msra.mxu0 %v742
        %1134 = vmatprep.mubr.f32.mxu0 %v298
        %1135 = vmatmul.mubr.f32.gmra.mxu0 %v516
        %v1136 = vpop.f32.mrf.mxu0
        %v1137 = vadd.f32 %v912, %v1136
        %v1138 = vpop.f32.mrf.mxu0
        %1139 = vmatprep.mubr.f32.mxu0 %v299
        %1140 = vmatmul.mubr.f32.gmra.mxu0 %v518
        %v1141 = vpop.f32.mrf.mxu0
        %v1142 = vadd.f32 %v917, %v1141
        %v1143 = vpop.f32.mrf.mxu0
        %1144 = vmatprep.mubr.f32.mxu0 %v301
        %1145 = vmatmul.mubr.f32.gmra.mxu0 %v521
        %v1146 = vpop.f32.mrf.mxu0
        %v1147 = vadd.f32 %v922, %v1146
        %v1148 = vpop.f32.mrf.mxu0
        %1149 = vmatprep.mubr.f32.mxu0 %v302
        %1150 = vmatmul.mubr.f32.gmra.mxu0 %v523
        %v1151 = vpop.f32.mrf.mxu0
        %v1152 = vadd.f32 %v927, %v1151
        %v1153 = vpop.f32.mrf.mxu0
        %1154 = vmatprep.mubr.f32.mxu0 %v304
        %1155 = vmatmul.mubr.f32.gmra.mxu0 %v526
        %v1156 = vpop.f32.mrf.mxu0
        %v1157 = vadd.f32 %v932, %v1156
        %v1158 = vpop.f32.mrf.mxu0
        %1159 = vmatprep.mubr.f32.mxu0 %v305
        %1160 = vmatmul.mubr.f32.gmra.mxu0 %v528
        %v1161 = vpop.f32.mrf.mxu0
        %v1162 = vadd.f32 %v937, %v1161
        %v1163 = vpop.f32.mrf.mxu0
        %1164 = vmatprep.mubr.f32.mxu0 %v307
        %1165 = vmatmul.mubr.f32.gmra.mxu0 %v531
        %v1166 = vpop.f32.mrf.mxu0
        %v1167 = vadd.f32 %v942, %v1166
        %v1168 = vpop.f32.mrf.mxu0
        %1169 = vmatprep.mubr.f32.mxu0 %v308
        %1170 = vmatmul.mubr.f32.gmra.mxu0 %v533
        %v1171 = vpop.f32.mrf.mxu0
        %v1172 = vadd.f32 %v947, %v1171
        %v1173 = vpop.f32.mrf.mxu0
        %1174 = vmatprep.mubr.f32.mxu0 %v310
        %1175 = vmatmul.mubr.f32.gmra.mxu0 %v536
        %v1176 = vpop.f32.mrf.mxu0
        %v1177 = vadd.f32 %v952, %v1176
        %v1178 = vpop.f32.mrf.mxu0
        %1179 = vmatprep.mubr.f32.mxu0 %v311
        %1180 = vmatmul.mubr.f32.gmra.mxu0 %v538
        %v1181 = vpop.f32.mrf.mxu0
        %v1182 = vadd.f32 %v957, %v1181
        %v1183 = vpop.f32.mrf.mxu0
        %1184 = vmatprep.mubr.f32.mxu0 %v313
        %1185 = vmatmul.mubr.f32.gmra.mxu0 %v541
        %v1186 = vpop.f32.mrf.mxu0
        %v1187 = vadd.f32 %v962, %v1186
        %v1188 = vpop.f32.mrf.mxu0
        %1189 = vmatprep.mubr.f32.mxu0 %v314
        %1190 = vmatmul.mubr.f32.gmra.mxu0 %v543
        %v1191 = vpop.f32.mrf.mxu0
        %v1192 = vadd.f32 %v967, %v1191
        %v1193 = vpop.f32.mrf.mxu0
        %1194 = vmatprep.mubr.f32.mxu0 %v316
        %1195 = vmatmul.mubr.f32.gmra.mxu0 %v546
        %v1196 = vpop.f32.mrf.mxu0
        %v1197 = vadd.f32 %v972, %v1196
        %v1198 = vpop.f32.mrf.mxu0
        %1199 = vmatprep.mubr.f32.mxu0 %v317
        %1200 = vmatmul.mubr.f32.gmra.mxu0 %v548
        %v1201 = vpop.f32.mrf.mxu0
        %v1202 = vadd.f32 %v977, %v1201
        %v1203 = vpop.f32.mrf.mxu0
        %1204 = vmatprep.mubr.f32.mxu0 %v319
        %1205 = vmatmul.mubr.f32.gmra.mxu0 %v551
        %v1206 = vpop.f32.mrf.mxu0
        %v1207 = vadd.f32 %v982, %v1206
        %v1208 = vpop.f32.mrf.mxu0
        %1209 = vmatprep.mubr.f32.mxu0 %v320
        %1210 = vmatmul.mubr.f32.gmra.mxu0 %v553
        %v1211 = vpop.f32.mrf.mxu0
        %v1212 = vadd.f32 %v987, %v1211
        %v1213 = vpop.f32.mrf.mxu0
        %1214 = vmatprep.mubr.f32.mxu0 %v322
        %1215 = vmatmul.mubr.f32.gmra.mxu0 %v556
        %v1216 = vpop.f32.mrf.mxu0
        %v1217 = vadd.f32 %v992, %v1216
        %v1218 = vpop.f32.mrf.mxu0
        %1219 = vmatprep.mubr.f32.mxu0 %v323
        %1220 = vmatmul.mubr.f32.gmra.mxu0 %v558
        %v1221 = vpop.f32.mrf.mxu0
        %v1222 = vadd.f32 %v997, %v1221
        %v1223 = vpop.f32.mrf.mxu0
        %1224 = vmatprep.mubr.f32.mxu0 %v325
        %1225 = vmatmul.mubr.f32.gmra.mxu0 %v561
        %v1226 = vpop.f32.mrf.mxu0
        %v1227 = vadd.f32 %v1002, %v1226
        %v1228 = vpop.f32.mrf.mxu0
        %1229 = vmatprep.mubr.f32.mxu0 %v326
        %1230 = vmatmul.mubr.f32.gmra.mxu0 %v563
        %v1231 = vpop.f32.mrf.mxu0
        %v1232 = vadd.f32 %v1007, %v1231
        %v1233 = vpop.f32.mrf.mxu0
        %1234 = vmatprep.mubr.f32.mxu0 %v328
        %1235 = vmatmul.mubr.f32.gmra.mxu0 %v566
        %v1236 = vpop.f32.mrf.mxu0
        %v1237 = vadd.f32 %v1012, %v1236
        %v1238 = vpop.f32.mrf.mxu0
        %1239 = vmatprep.mubr.f32.mxu0 %v329
        %1240 = vmatmul.mubr.f32.gmra.mxu0 %v568
        %v1241 = vpop.f32.mrf.mxu0
        %v1242 = vadd.f32 %v1017, %v1241
        %v1243 = vpop.f32.mrf.mxu0
        %1244 = vmatprep.mubr.f32.mxu0 %v331
        %1245 = vmatmul.mubr.f32.gmra.mxu0 %v571
        %v1246 = vpop.f32.mrf.mxu0
        %v1247 = vadd.f32 %v1022, %v1246
        %v1248 = vpop.f32.mrf.mxu0
        %1249 = vmatprep.mubr.f32.mxu0 %v332
        %1250 = vmatmul.mubr.f32.gmra.mxu0 %v573
        %v1251 = vpop.f32.mrf.mxu0
        %v1252 = vadd.f32 %v1027, %v1251
        %v1253 = vpop.f32.mrf.mxu0
        %1254 = vmatprep.mubr.f32.mxu0 %v334
        %1255 = vmatmul.mubr.f32.gmra.mxu0 %v576
        %v1256 = vpop.f32.mrf.mxu0
        %v1257 = vadd.f32 %v1032, %v1256
        %v1258 = vpop.f32.mrf.mxu0
        %1259 = vmatprep.mubr.f32.mxu0 %v335
        %1260 = vmatmul.mubr.f32.gmra.mxu0 %v578
        %v1261 = vpop.f32.mrf.mxu0
        %v1262 = vadd.f32 %v1037, %v1261
        %v1263 = vpop.f32.mrf.mxu0
        %1264 = vmatprep.mubr.f32.mxu0 %v337
        %1265 = vmatmul.mubr.f32.gmra.mxu0 %v581
        %v1266 = vpop.f32.mrf.mxu0
        %v1267 = vadd.f32 %v1042, %v1266
        %v1268 = vpop.f32.mrf.mxu0
        %1269 = vmatprep.mubr.f32.mxu0 %v338
        %1270 = vmatmul.mubr.f32.gmra.mxu0 %v583
        %v1271 = vpop.f32.mrf.mxu0
        %v1272 = vadd.f32 %v1047, %v1271
        %v1273 = vpop.f32.mrf.mxu0
        %1274 = vmatprep.mubr.f32.mxu0 %v340
        %1275 = vmatmul.mubr.f32.gmra.mxu0 %v586
        %v1276 = vpop.f32.mrf.mxu0
        %v1277 = vadd.f32 %v1052, %v1276
        %v1278 = vpop.f32.mrf.mxu0
        %1279 = vmatprep.mubr.f32.mxu0 %v341
        %1280 = vmatmul.mubr.f32.gmra.mxu0 %v588
        %v1281 = vpop.f32.mrf.mxu0
        %v1282 = vadd.f32 %v1057, %v1281
        %v1283 = vpop.f32.mrf.mxu0
        %1284 = vmatprep.mubr.f32.mxu0 %v343
        %1285 = vmatmul.mubr.f32.gmra.mxu0 %v591
        %v1286 = vpop.f32.mrf.mxu0
        %v1287 = vadd.f32 %v1062, %v1286
        %v1288 = vpop.f32.mrf.mxu0
        %1289 = vmatprep.mubr.f32.mxu0 %v344
        %1290 = vmatmul.mubr.f32.gmra.mxu0 %v593
        %v1291 = vpop.f32.mrf.mxu0
        %v1292 = vadd.f32 %v1067, %v1291
        %v1293 = vpop.f32.mrf.mxu0
        %1294 = vdwg.mxu0
        %1295 = vmatprep.subr.mxu0 0.0
        %1296 = vmatpush1.msra.mxu0 %v773
        %1297 = vmatprep.subr.mxu0 0.0
        %1298 = vmatpush1.msra.mxu0 %v772
        %1299 = vmatprep.subr.mxu0 0.0
        %1300 = vmatpush1.msra.mxu0 %v771
        %1301 = vmatprep.subr.mxu0 0.0
        %1302 = vmatpush1.msra.mxu0 %v770
        %1303 = vmatprep.subr.mxu0 0.0
        %1304 = vmatpush1.msra.mxu0 %v769
        %1305 = vmatprep.subr.mxu0 0.0
        %1306 = vmatpush1.msra.mxu0 %v768
        %1307 = vmatprep.subr.mxu0 0.0
        %1308 = vmatpush1.msra.mxu0 %v767
        %1309 = vmatprep.subr.mxu0 0.0
        %1310 = vmatpush1.msra.mxu0 %v766
        %1311 = vmatprep.subr.mxu0 0.0
        %1312 = vmatpush1.msra.mxu0 %v765
        %1313 = vmatprep.subr.mxu0 0.0
        %1314 = vmatpush1.msra.mxu0 %v764
        %1315 = vmatprep.subr.mxu0 0.0
        %1316 = vmatpush1.msra.mxu0 %v763
        %1317 = vmatprep.subr.mxu0 0.0
        %1318 = vmatpush1.msra.mxu0 %v762
        %1319 = vmatprep.subr.mxu0 0.0
        %1320 = vmatpush1.msra.mxu0 %v761
        %1321 = vmatprep.subr.mxu0 0.0
        %1322 = vmatpush1.msra.mxu0 %v760
        %1323 = vmatprep.subr.mxu0 0.0
        %1324 = vmatpush1.msra.mxu0 %v759
        %1325 = vmatprep.subr.mxu0 0.0
        %1326 = vmatpush1.msra.mxu0 %v758
        %1327 = vmatprep.subr.mxu0 0.0
        %1328 = vmatpush2.msra.mxu0 %v789
        %1329 = vmatprep.subr.mxu0 0.0
        %1330 = vmatpush2.msra.mxu0 %v788
        %1331 = vmatprep.subr.mxu0 0.0
        %1332 = vmatpush2.msra.mxu0 %v787
        %1333 = vmatprep.subr.mxu0 0.0
        %1334 = vmatpush2.msra.mxu0 %v786
        %1335 = vmatprep.subr.mxu0 0.0
        %1336 = vmatpush2.msra.mxu0 %v785
        %1337 = vmatprep.subr.mxu0 0.0
        %1338 = vmatpush2.msra.mxu0 %v784
        %1339 = vmatprep.subr.mxu0 0.0
        %1340 = vmatpush2.msra.mxu0 %v783
        %1341 = vmatprep.subr.mxu0 0.0
        %1342 = vmatpush2.msra.mxu0 %v782
        %1343 = vmatprep.subr.mxu0 0.0
        %1344 = vmatpush2.msra.mxu0 %v781
        %1345 = vmatprep.subr.mxu0 0.0
        %1346 = vmatpush2.msra.mxu0 %v780
        %1347 = vmatprep.subr.mxu0 0.0
        %1348 = vmatpush2.msra.mxu0 %v779
        %1349 = vmatprep.subr.mxu0 0.0
        %1350 = vmatpush2.msra.mxu0 %v778
        %1351 = vmatprep.subr.mxu0 0.0
        %1352 = vmatpush2.msra.mxu0 %v777
        %1353 = vmatprep.subr.mxu0 0.0
        %1354 = vmatpush2.msra.mxu0 %v776
        %1355 = vmatprep.subr.mxu0 0.0
        %1356 = vmatpush2.msra.mxu0 %v775
        %1357 = vmatprep.subr.mxu0 0.0
        %1358 = vmatpush2.msra.mxu0 %v774
        %1359 = vmatprep.mubr.f32.mxu0 %v526
        %1360 = vmatmul.mubr.f32.gmra.mxu0 %v413
        %v1361 = vpop.f32.mrf.mxu0
        %v1362 = vadd.f32 %v1137, %v1361
        %v1363 = vpop.f32.mrf.mxu0
        %1364 = vmatprep.mubr.f32.mxu0 %v528
        %1365 = vmatmul.mubr.f32.gmra.mxu0 %v415
        %v1366 = vpop.f32.mrf.mxu0
        %v1367 = vadd.f32 %v1142, %v1366
        %v1368 = vpop.f32.mrf.mxu0
        %1369 = vmatprep.mubr.f32.mxu0 %v531
        %1370 = vmatmul.mubr.f32.gmra.mxu0 %v418
        %v1371 = vpop.f32.mrf.mxu0
        %v1372 = vadd.f32 %v1147, %v1371
        %v1373 = vpop.f32.mrf.mxu0
        %1374 = vmatprep.mubr.f32.mxu0 %v533
        %1375 = vmatmul.mubr.f32.gmra.mxu0 %v420
        %v1376 = vpop.f32.mrf.mxu0
        %v1377 = vadd.f32 %v1152, %v1376
        %v1378 = vpop.f32.mrf.mxu0
        %1379 = vmatprep.mubr.f32.mxu0 %v536
        %1380 = vmatmul.mubr.f32.gmra.mxu0 %v423
        %v1381 = vpop.f32.mrf.mxu0
        %v1382 = vadd.f32 %v1157, %v1381
        %v1383 = vpop.f32.mrf.mxu0
        %1384 = vmatprep.mubr.f32.mxu0 %v538
        %1385 = vmatmul.mubr.f32.gmra.mxu0 %v425
        %v1386 = vpop.f32.mrf.mxu0
        %v1387 = vadd.f32 %v1162, %v1386
        %v1388 = vpop.f32.mrf.mxu0
        %1389 = vmatprep.mubr.f32.mxu0 %v541
        %1390 = vmatmul.mubr.f32.gmra.mxu0 %v428
        %v1391 = vpop.f32.mrf.mxu0
        %v1392 = vadd.f32 %v1167, %v1391
        %v1393 = vpop.f32.mrf.mxu0
        %1394 = vmatprep.mubr.f32.mxu0 %v543
        %1395 = vmatmul.mubr.f32.gmra.mxu0 %v430
        %v1396 = vpop.f32.mrf.mxu0
        %v1397 = vadd.f32 %v1172, %v1396
        %v1398 = vpop.f32.mrf.mxu0
        %1399 = vmatprep.mubr.f32.mxu0 %v546
        %1400 = vmatmul.mubr.f32.gmra.mxu0 %v433
        %v1401 = vpop.f32.mrf.mxu0
        %v1402 = vadd.f32 %v1177, %v1401
        %v1403 = vpop.f32.mrf.mxu0
        %1404 = vmatprep.mubr.f32.mxu0 %v548
        %1405 = vmatmul.mubr.f32.gmra.mxu0 %v435
        %v1406 = vpop.f32.mrf.mxu0
        %v1407 = vadd.f32 %v1182, %v1406
        %v1408 = vpop.f32.mrf.mxu0
        %1409 = vmatprep.mubr.f32.mxu0 %v551
        %1410 = vmatmul.mubr.f32.gmra.mxu0 %v438
        %v1411 = vpop.f32.mrf.mxu0
        %v1412 = vadd.f32 %v1187, %v1411
        %v1413 = vpop.f32.mrf.mxu0
        %1414 = vmatprep.mubr.f32.mxu0 %v553
        %1415 = vmatmul.mubr.f32.gmra.mxu0 %v440
        %v1416 = vpop.f32.mrf.mxu0
        %v1417 = vadd.f32 %v1192, %v1416
        %v1418 = vpop.f32.mrf.mxu0
        %1419 = vmatprep.mubr.f32.mxu0 %v556
        %1420 = vmatmul.mubr.f32.gmra.mxu0 %v443
        %v1421 = vpop.f32.mrf.mxu0
        %v1422 = vadd.f32 %v1197, %v1421
        %v1423 = vpop.f32.mrf.mxu0
        %1424 = vmatprep.mubr.f32.mxu0 %v558
        %1425 = vmatmul.mubr.f32.gmra.mxu0 %v445
        %v1426 = vpop.f32.mrf.mxu0
        %v1427 = vadd.f32 %v1202, %v1426
        %v1428 = vpop.f32.mrf.mxu0
        %1429 = vmatprep.mubr.f32.mxu0 %v561
        %1430 = vmatmul.mubr.f32.gmra.mxu0 %v448
        %v1431 = vpop.f32.mrf.mxu0
        %v1432 = vadd.f32 %v1207, %v1431
        %v1433 = vpop.f32.mrf.mxu0
        %1434 = vmatprep.mubr.f32.mxu0 %v563
        %1435 = vmatmul.mubr.f32.gmra.mxu0 %v450
        %v1436 = vpop.f32.mrf.mxu0
        %v1437 = vadd.f32 %v1212, %v1436
        %v1438 = vpop.f32.mrf.mxu0
        %1439 = vmatprep.mubr.f32.mxu0 %v566
        %1440 = vmatmul.mubr.f32.gmra.mxu0 %v453
        %v1441 = vpop.f32.mrf.mxu0
        %v1442 = vadd.f32 %v1217, %v1441
        %v1443 = vpop.f32.mrf.mxu0
        %1444 = vmatprep.mubr.f32.mxu0 %v568
        %1445 = vmatmul.mubr.f32.gmra.mxu0 %v455
        %v1446 = vpop.f32.mrf.mxu0
        %v1447 = vadd.f32 %v1222, %v1446
        %v1448 = vpop.f32.mrf.mxu0
        %1449 = vmatprep.mubr.f32.mxu0 %v571
        %1450 = vmatmul.mubr.f32.gmra.mxu0 %v458
        %v1451 = vpop.f32.mrf.mxu0
        %v1452 = vadd.f32 %v1227, %v1451
        %v1453 = vpop.f32.mrf.mxu0
        %1454 = vmatprep.mubr.f32.mxu0 %v573
        %1455 = vmatmul.mubr.f32.gmra.mxu0 %v460
        %v1456 = vpop.f32.mrf.mxu0
        %v1457 = vadd.f32 %v1232, %v1456
        %v1458 = vpop.f32.mrf.mxu0
        %1459 = vmatprep.mubr.f32.mxu0 %v576
        %1460 = vmatmul.mubr.f32.gmra.mxu0 %v463
        %v1461 = vpop.f32.mrf.mxu0
        %v1462 = vadd.f32 %v1237, %v1461
        %v1463 = vpop.f32.mrf.mxu0
        %1464 = vmatprep.mubr.f32.mxu0 %v578
        %1465 = vmatmul.mubr.f32.gmra.mxu0 %v465
        %v1466 = vpop.f32.mrf.mxu0
        %v1467 = vadd.f32 %v1242, %v1466
        %v1468 = vpop.f32.mrf.mxu0
        %1469 = vmatprep.mubr.f32.mxu0 %v581
        %1470 = vmatmul.mubr.f32.gmra.mxu0 %v468
        %v1471 = vpop.f32.mrf.mxu0
        %v1472 = vadd.f32 %v1247, %v1471
        %v1473 = vpop.f32.mrf.mxu0
        %1474 = vmatprep.mubr.f32.mxu0 %v583
        %1475 = vmatmul.mubr.f32.gmra.mxu0 %v470
        %v1476 = vpop.f32.mrf.mxu0
        %v1477 = vadd.f32 %v1252, %v1476
        %v1478 = vpop.f32.mrf.mxu0
        %1479 = vmatprep.mubr.f32.mxu0 %v586
        %1480 = vmatmul.mubr.f32.gmra.mxu0 %v473
        %v1481 = vpop.f32.mrf.mxu0
        %v1482 = vadd.f32 %v1257, %v1481
        %v1483 = vpop.f32.mrf.mxu0
        %1484 = vmatprep.mubr.f32.mxu0 %v588
        %1485 = vmatmul.mubr.f32.gmra.mxu0 %v475
        %v1486 = vpop.f32.mrf.mxu0
        %v1487 = vadd.f32 %v1262, %v1486
        %v1488 = vpop.f32.mrf.mxu0
        %1489 = vmatprep.mubr.f32.mxu0 %v591
        %1490 = vmatmul.mubr.f32.gmra.mxu0 %v478
        %v1491 = vpop.f32.mrf.mxu0
        %v1492 = vadd.f32 %v1267, %v1491
        %v1493 = vpop.f32.mrf.mxu0
        %1494 = vmatprep.mubr.f32.mxu0 %v593
        %1495 = vmatmul.mubr.f32.gmra.mxu0 %v480
        %v1496 = vpop.f32.mrf.mxu0
        %v1497 = vadd.f32 %v1272, %v1496
        %v1498 = vpop.f32.mrf.mxu0
        %1499 = vmatprep.mubr.f32.mxu0 %v648
        %1500 = vmatmul.mubr.f32.gmra.mxu0 %v634
        %v1501 = vpop.f32.mrf.mxu0
        %v1502 = vadd.f32 %v1277, %v1501
        %v1503 = vpop.f32.mrf.mxu0
        %1504 = vmatprep.mubr.f32.mxu0 %v650
        %1505 = vmatmul.mubr.f32.gmra.mxu0 %v636
        %v1506 = vpop.f32.mrf.mxu0
        %v1507 = vadd.f32 %v1282, %v1506
        %v1508 = vpop.f32.mrf.mxu0
        %1509 = vmatprep.mubr.f32.mxu0 %v653
        %1510 = vmatmul.mubr.f32.gmra.mxu0 %v639
        %v1511 = vpop.f32.mrf.mxu0
        %v1512 = vadd.f32 %v1287, %v1511
        %v1513 = vpop.f32.mrf.mxu0
        %1514 = vmatprep.mubr.f32.mxu0 %v655
        %1515 = vmatmul.mubr.f32.gmra.mxu0 %v641
        %v1516 = vpop.f32.mrf.mxu0
        %v1517 = vadd.f32 %v1292, %v1516
        %v1518 = vpop.f32.mrf.mxu0
        %1519 = vdwg.mxu0
        %1520 = vmatprep.subr.mxu0 0.0
        %1521 = vmatpush1.msra.mxu0 %v805
        %1522 = vmatprep.subr.mxu0 0.0
        %1523 = vmatpush1.msra.mxu0 %v804
        %1524 = vmatprep.subr.mxu0 0.0
        %1525 = vmatpush1.msra.mxu0 %v803
        %1526 = vmatprep.subr.mxu0 0.0
        %1527 = vmatpush1.msra.mxu0 %v802
        %1528 = vmatprep.subr.mxu0 0.0
        %1529 = vmatpush1.msra.mxu0 %v801
        %1530 = vmatprep.subr.mxu0 0.0
        %1531 = vmatpush1.msra.mxu0 %v800
        %1532 = vmatprep.subr.mxu0 0.0
        %1533 = vmatpush1.msra.mxu0 %v799
        %1534 = vmatprep.subr.mxu0 0.0
        %1535 = vmatpush1.msra.mxu0 %v798
        %1536 = vmatprep.subr.mxu0 0.0
        %1537 = vmatpush1.msra.mxu0 %v797
        %1538 = vmatprep.subr.mxu0 0.0
        %1539 = vmatpush1.msra.mxu0 %v796
        %1540 = vmatprep.subr.mxu0 0.0
        %1541 = vmatpush1.msra.mxu0 %v795
        %1542 = vmatprep.subr.mxu0 0.0
        %1543 = vmatpush1.msra.mxu0 %v794
        %1544 = vmatprep.subr.mxu0 0.0
        %1545 = vmatpush1.msra.mxu0 %v793
        %1546 = vmatprep.subr.mxu0 0.0
        %1547 = vmatpush1.msra.mxu0 %v792
        %1548 = vmatprep.subr.mxu0 0.0
        %1549 = vmatpush1.msra.mxu0 %v791
        %1550 = vmatprep.subr.mxu0 0.0
        %1551 = vmatpush1.msra.mxu0 %v790
        %1552 = vmatprep.subr.mxu0 0.0
        %1553 = vmatpush2.msra.mxu0 %v821
        %1554 = vmatprep.subr.mxu0 0.0
        %1555 = vmatpush2.msra.mxu0 %v820
        %1556 = vmatprep.subr.mxu0 0.0
        %1557 = vmatpush2.msra.mxu0 %v819
        %1558 = vmatprep.subr.mxu0 0.0
        %1559 = vmatpush2.msra.mxu0 %v818
        %1560 = vmatprep.subr.mxu0 0.0
        %1561 = vmatpush2.msra.mxu0 %v817
        %1562 = vmatprep.subr.mxu0 0.0
        %1563 = vmatpush2.msra.mxu0 %v816
        %1564 = vmatprep.subr.mxu0 0.0
        %1565 = vmatpush2.msra.mxu0 %v815
        %1566 = vmatprep.subr.mxu0 0.0
        %1567 = vmatpush2.msra.mxu0 %v814
        %1568 = vmatprep.subr.mxu0 0.0
        %1569 = vmatpush2.msra.mxu0 %v813
        %1570 = vmatprep.subr.mxu0 0.0
        %1571 = vmatpush2.msra.mxu0 %v812
        %1572 = vmatprep.subr.mxu0 0.0
        %1573 = vmatpush2.msra.mxu0 %v811
        %1574 = vmatprep.subr.mxu0 0.0
        %1575 = vmatpush2.msra.mxu0 %v810
        %1576 = vmatprep.subr.mxu0 0.0
        %1577 = vmatpush2.msra.mxu0 %v809
        %1578 = vmatprep.subr.mxu0 0.0
        %1579 = vmatpush2.msra.mxu0 %v808
        %1580 = vmatprep.subr.mxu0 0.0
        %1581 = vmatpush2.msra.mxu0 %v807
        %1582 = vmatprep.subr.mxu0 0.0
        %1583 = vmatpush2.msra.mxu0 %v806
        %1584 = vmatprep.mubr.f32.mxu0 %v423
        %1585 = vmatmul.mubr.f32.gmra.mxu0 %v304
        %v1586 = vpop.f32.mrf.mxu0
        %v1587 = vadd.f32 %v1362, %v1586
        %v1588 = vpop.f32.mrf.mxu0
        %1589 = vmatprep.mubr.f32.mxu0 %v425
        %1590 = vmatmul.mubr.f32.gmra.mxu0 %v305
        %v1591 = vpop.f32.mrf.mxu0
        %v1592 = vadd.f32 %v1367, %v1591
        %v1593 = vpop.f32.mrf.mxu0
        %1594 = vmatprep.mubr.f32.mxu0 %v428
        %1595 = vmatmul.mubr.f32.gmra.mxu0 %v307
        %v1596 = vpop.f32.mrf.mxu0
        %v1597 = vadd.f32 %v1372, %v1596
        %v1598 = vpop.f32.mrf.mxu0
        %1599 = vmatprep.mubr.f32.mxu0 %v430
        %1600 = vmatmul.mubr.f32.gmra.mxu0 %v308
        %v1601 = vpop.f32.mrf.mxu0
        %v1602 = vadd.f32 %v1377, %v1601
        %v1603 = vpop.f32.mrf.mxu0
        %1604 = vmatprep.mubr.f32.mxu0 %v433
        %1605 = vmatmul.mubr.f32.gmra.mxu0 %v310
        %v1606 = vpop.f32.mrf.mxu0
        %v1607 = vadd.f32 %v1382, %v1606
        %v1608 = vpop.f32.mrf.mxu0
        %1609 = vmatprep.mubr.f32.mxu0 %v435
        %1610 = vmatmul.mubr.f32.gmra.mxu0 %v311
        %v1611 = vpop.f32.mrf.mxu0
        %v1612 = vadd.f32 %v1387, %v1611
        %v1613 = vpop.f32.mrf.mxu0
        %1614 = vmatprep.mubr.f32.mxu0 %v438
        %1615 = vmatmul.mubr.f32.gmra.mxu0 %v313
        %v1616 = vpop.f32.mrf.mxu0
        %v1617 = vadd.f32 %v1392, %v1616
        %v1618 = vpop.f32.mrf.mxu0
        %1619 = vmatprep.mubr.f32.mxu0 %v440
        %1620 = vmatmul.mubr.f32.gmra.mxu0 %v314
        %v1621 = vpop.f32.mrf.mxu0
        %v1622 = vadd.f32 %v1397, %v1621
        %v1623 = vpop.f32.mrf.mxu0
        %1624 = vmatprep.mubr.f32.mxu0 %v443
        %1625 = vmatmul.mubr.f32.gmra.mxu0 %v316
        %v1626 = vpop.f32.mrf.mxu0
        %v1627 = vadd.f32 %v1402, %v1626
        %v1628 = vpop.f32.mrf.mxu0
        %1629 = vmatprep.mubr.f32.mxu0 %v445
        %1630 = vmatmul.mubr.f32.gmra.mxu0 %v317
        %v1631 = vpop.f32.mrf.mxu0
        %v1632 = vadd.f32 %v1407, %v1631
        %v1633 = vpop.f32.mrf.mxu0
        %1634 = vmatprep.mubr.f32.mxu0 %v448
        %1635 = vmatmul.mubr.f32.gmra.mxu0 %v319
        %v1636 = vpop.f32.mrf.mxu0
        %v1637 = vadd.f32 %v1412, %v1636
        %v1638 = vpop.f32.mrf.mxu0
        %1639 = vmatprep.mubr.f32.mxu0 %v450
        %1640 = vmatmul.mubr.f32.gmra.mxu0 %v320
        %v1641 = vpop.f32.mrf.mxu0
        %v1642 = vadd.f32 %v1417, %v1641
        %v1643 = vpop.f32.mrf.mxu0
        %1644 = vmatprep.mubr.f32.mxu0 %v453
        %1645 = vmatmul.mubr.f32.gmra.mxu0 %v322
        %v1646 = vpop.f32.mrf.mxu0
        %v1647 = vadd.f32 %v1422, %v1646
        %v1648 = vpop.f32.mrf.mxu0
        %1649 = vmatprep.mubr.f32.mxu0 %v455
        %1650 = vmatmul.mubr.f32.gmra.mxu0 %v323
        %v1651 = vpop.f32.mrf.mxu0
        %v1652 = vadd.f32 %v1427, %v1651
        %v1653 = vpop.f32.mrf.mxu0
        %1654 = vmatprep.mubr.f32.mxu0 %v458
        %1655 = vmatmul.mubr.f32.gmra.mxu0 %v325
        %v1656 = vpop.f32.mrf.mxu0
        %v1657 = vadd.f32 %v1432, %v1656
        %v1658 = vpop.f32.mrf.mxu0
        %1659 = vmatprep.mubr.f32.mxu0 %v460
        %1660 = vmatmul.mubr.f32.gmra.mxu0 %v326
        %v1661 = vpop.f32.mrf.mxu0
        %v1662 = vadd.f32 %v1437, %v1661
        %v1663 = vpop.f32.mrf.mxu0
        %1664 = vmatprep.mubr.f32.mxu0 %v463
        %1665 = vmatmul.mubr.f32.gmra.mxu0 %v328
        %v1666 = vpop.f32.mrf.mxu0
        %v1667 = vadd.f32 %v1442, %v1666
        %v1668 = vpop.f32.mrf.mxu0
        %1669 = vmatprep.mubr.f32.mxu0 %v465
        %1670 = vmatmul.mubr.f32.gmra.mxu0 %v329
        %v1671 = vpop.f32.mrf.mxu0
        %v1672 = vadd.f32 %v1447, %v1671
        %v1673 = vpop.f32.mrf.mxu0
        %1674 = vmatprep.mubr.f32.mxu0 %v468
        %1675 = vmatmul.mubr.f32.gmra.mxu0 %v331
        %v1676 = vpop.f32.mrf.mxu0
        %v1677 = vadd.f32 %v1452, %v1676
        %v1678 = vpop.f32.mrf.mxu0
        %1679 = vmatprep.mubr.f32.mxu0 %v470
        %1680 = vmatmul.mubr.f32.gmra.mxu0 %v332
        %v1681 = vpop.f32.mrf.mxu0
        %v1682 = vadd.f32 %v1457, %v1681
        %v1683 = vpop.f32.mrf.mxu0
        %1684 = vmatprep.mubr.f32.mxu0 %v473
        %1685 = vmatmul.mubr.f32.gmra.mxu0 %v334
        %v1686 = vpop.f32.mrf.mxu0
        %v1687 = vadd.f32 %v1462, %v1686
        %v1688 = vpop.f32.mrf.mxu0
        %1689 = vmatprep.mubr.f32.mxu0 %v475
        %1690 = vmatmul.mubr.f32.gmra.mxu0 %v335
        %v1691 = vpop.f32.mrf.mxu0
        %v1692 = vadd.f32 %v1467, %v1691
        %v1693 = vpop.f32.mrf.mxu0
        %1694 = vmatprep.mubr.f32.mxu0 %v478
        %1695 = vmatmul.mubr.f32.gmra.mxu0 %v337
        %v1696 = vpop.f32.mrf.mxu0
        %v1697 = vadd.f32 %v1472, %v1696
        %v1698 = vpop.f32.mrf.mxu0
        %1699 = vmatprep.mubr.f32.mxu0 %v480
        %1700 = vmatmul.mubr.f32.gmra.mxu0 %v338
        %v1701 = vpop.f32.mrf.mxu0
        %v1702 = vadd.f32 %v1477, %v1701
        %v1703 = vpop.f32.mrf.mxu0
        %1704 = vmatprep.mubr.f32.mxu0 %v634
        %1705 = vmatmul.mubr.f32.gmra.mxu0 %v340
        %v1706 = vpop.f32.mrf.mxu0
        %v1707 = vadd.f32 %v1482, %v1706
        %v1708 = vpop.f32.mrf.mxu0
        %1709 = vmatprep.mubr.f32.mxu0 %v636
        %1710 = vmatmul.mubr.f32.gmra.mxu0 %v341
        %v1711 = vpop.f32.mrf.mxu0
        %v1712 = vadd.f32 %v1487, %v1711
        %v1713 = vpop.f32.mrf.mxu0
        %1714 = vmatprep.mubr.f32.mxu0 %v639
        %1715 = vmatmul.mubr.f32.gmra.mxu0 %v343
        %v1716 = vpop.f32.mrf.mxu0
        %v1717 = vadd.f32 %v1492, %v1716
        %v1718 = vpop.f32.mrf.mxu0
        %1719 = vmatprep.mubr.f32.mxu0 %v641
        %1720 = vmatmul.mubr.f32.gmra.mxu0 %v344
        %v1721 = vpop.f32.mrf.mxu0
        %v1722 = vadd.f32 %v1497, %v1721
        %v1723 = vpop.f32.mrf.mxu0
        %1724 = vmatprep.mubr.f32.mxu0 %v668
        %1725 = vmatmul.mubr.f32.gmra.mxu0 %v346
        %v1726 = vpop.f32.mrf.mxu0
        %v1727 = vadd.f32 %v1502, %v1726
        %v1728 = vpop.f32.mrf.mxu0
        %1729 = vmatprep.mubr.f32.mxu0 %v670
        %1730 = vmatmul.mubr.f32.gmra.mxu0 %v347
        %v1731 = vpop.f32.mrf.mxu0
        %v1732 = vadd.f32 %v1507, %v1731
        %v1733 = vpop.f32.mrf.mxu0
        %1734 = vmatprep.mubr.f32.mxu0 %v673
        %1735 = vmatmul.mubr.f32.gmra.mxu0 %v349
        %v1736 = vpop.f32.mrf.mxu0
        %v1737 = vadd.f32 %v1512, %v1736
        %v1738 = vpop.f32.mrf.mxu0
        %1739 = vmatprep.mubr.f32.mxu0 %v675
        %1740 = vmatmul.mubr.f32.gmra.mxu0 %v350
        %v1741 = vpop.f32.mrf.mxu0
        %v1742 = vadd.f32 %v1517, %v1741
        %v1743 = vpop.f32.mrf.mxu0
        %1744 = vdwg.mxu0
        %1745 = vmatprep.subr.mxu0 0.0
        %1746 = vmatpush1.msra.mxu0 %v837
        %1747 = vmatprep.subr.mxu0 0.0
        %1748 = vmatpush1.msra.mxu0 %v836
        %1749 = vmatprep.subr.mxu0 0.0
        %1750 = vmatpush1.msra.mxu0 %v835
        %1751 = vmatprep.subr.mxu0 0.0
        %1752 = vmatpush1.msra.mxu0 %v834
        %1753 = vmatprep.subr.mxu0 0.0
        %1754 = vmatpush1.msra.mxu0 %v833
        %1755 = vmatprep.subr.mxu0 0.0
        %1756 = vmatpush1.msra.mxu0 %v832
        %1757 = vmatprep.subr.mxu0 0.0
        %1758 = vmatpush1.msra.mxu0 %v831
        %1759 = vmatprep.subr.mxu0 0.0
        %1760 = vmatpush1.msra.mxu0 %v830
        %1761 = vmatprep.subr.mxu0 0.0
        %1762 = vmatpush1.msra.mxu0 %v829
        %1763 = vmatprep.subr.mxu0 0.0
        %1764 = vmatpush1.msra.mxu0 %v828
        %1765 = vmatprep.subr.mxu0 0.0
        %1766 = vmatpush1.msra.mxu0 %v827
        %1767 = vmatprep.subr.mxu0 0.0
        %1768 = vmatpush1.msra.mxu0 %v826
        %1769 = vmatprep.subr.mxu0 0.0
        %1770 = vmatpush1.msra.mxu0 %v825
        %1771 = vmatprep.subr.mxu0 0.0
        %1772 = vmatpush1.msra.mxu0 %v824
        %1773 = vmatprep.subr.mxu0 0.0
        %1774 = vmatpush1.msra.mxu0 %v823
        %1775 = vmatprep.subr.mxu0 0.0
        %1776 = vmatpush1.msra.mxu0 %v822
        %1777 = vmatprep.subr.mxu0 0.0
        %1778 = vmatpush2.msra.mxu0 0.0
        %1779 = vmatprep.subr.mxu0 0.0
        %1780 = vmatpush2.msra.mxu0 0.0
        %1781 = vmatprep.subr.mxu0 0.0
        %1782 = vmatpush2.msra.mxu0 0.0
        %1783 = vmatprep.subr.mxu0 0.0
        %1784 = vmatpush2.msra.mxu0 0.0
        %1785 = vmatprep.subr.mxu0 0.0
        %1786 = vmatpush2.msra.mxu0 0.0
        %1787 = vmatprep.subr.mxu0 0.0
        %1788 = vmatpush2.msra.mxu0 0.0
        %1789 = vmatprep.subr.mxu0 0.0
        %1790 = vmatpush2.msra.mxu0 0.0
        %1791 = vmatprep.subr.mxu0 0.0
        %1792 = vmatpush2.msra.mxu0 0.0
        %1793 = vmatprep.subr.mxu0 0.0
        %1794 = vmatpush2.msra.mxu0 0.0
        %1795 = vmatprep.subr.mxu0 0.0
        %1796 = vmatpush2.msra.mxu0 0.0
        %1797 = vmatprep.subr.mxu0 0.0
        %1798 = vmatpush2.msra.mxu0 0.0
        %1799 = vmatprep.subr.mxu0 0.0
        %1800 = vmatpush2.msra.mxu0 0.0
        %1801 = vmatprep.subr.mxu0 0.0
        %1802 = vmatpush2.msra.mxu0 0.0
        %1803 = vmatprep.subr.mxu0 0.0
        %1804 = vmatpush2.msra.mxu0 0.0
        %1805 = vmatprep.subr.mxu0 0.0
        %1806 = vmatpush2.msra.mxu0 0.0
        %1807 = vmatprep.subr.mxu0 0.0
        %1808 = vmatpush2.msra.mxu0 0.0
        %1809 = vmatprep.mubr.f32.mxu0 0.0
        %1810 = vmatmul.mubr.f32.gmra.mxu0 %v536
        %v1811 = vpop.f32.mrf.mxu0
        %v1812 = vadd.f32 %v1587, %v1811
        %v1813 = vpop.f32.mrf.mxu0
        %1814 = vmatprep.mubr.f32.mxu0 0.0
        %1815 = vmatmul.mubr.f32.gmra.mxu0 %v538
        %v1816 = vpop.f32.mrf.mxu0
        %v1817 = vadd.f32 %v1592, %v1816
        %v1818 = vpop.f32.mrf.mxu0
        %1819 = vmatprep.mubr.f32.mxu0 0.0
        %1820 = vmatmul.mubr.f32.gmra.mxu0 %v541
        %v1821 = vpop.f32.mrf.mxu0
        %v1822 = vadd.f32 %v1597, %v1821
        %v1823 = vpop.f32.mrf.mxu0
        %1824 = vmatprep.mubr.f32.mxu0 0.0
        %1825 = vmatmul.mubr.f32.gmra.mxu0 %v543
        %v1826 = vpop.f32.mrf.mxu0
        %v1827 = vadd.f32 %v1602, %v1826
        %v1828 = vpop.f32.mrf.mxu0
        %1829 = vmatprep.mubr.f32.mxu0 0.0
        %1830 = vmatmul.mubr.f32.gmra.mxu0 %v546
        %v1831 = vpop.f32.mrf.mxu0
        %v1832 = vadd.f32 %v1607, %v1831
        %v1833 = vpop.f32.mrf.mxu0
        %1834 = vmatprep.mubr.f32.mxu0 0.0
        %1835 = vmatmul.mubr.f32.gmra.mxu0 %v548
        %v1836 = vpop.f32.mrf.mxu0
        %v1837 = vadd.f32 %v1612, %v1836
        %v1838 = vpop.f32.mrf.mxu0
        %1839 = vmatprep.mubr.f32.mxu0 0.0
        %1840 = vmatmul.mubr.f32.gmra.mxu0 %v551
        %v1841 = vpop.f32.mrf.mxu0
        %v1842 = vadd.f32 %v1617, %v1841
        %v1843 = vpop.f32.mrf.mxu0
        %1844 = vmatprep.mubr.f32.mxu0 0.0
        %1845 = vmatmul.mubr.f32.gmra.mxu0 %v553
        %v1846 = vpop.f32.mrf.mxu0
        %v1847 = vadd.f32 %v1622, %v1846
        %v1848 = vpop.f32.mrf.mxu0
        %1849 = vmatprep.mubr.f32.mxu0 0.0
        %1850 = vmatmul.mubr.f32.gmra.mxu0 %v556
        %v1851 = vpop.f32.mrf.mxu0
        %v1852 = vadd.f32 %v1627, %v1851
        %v1853 = vpop.f32.mrf.mxu0
        %1854 = vmatprep.mubr.f32.mxu0 0.0
        %1855 = vmatmul.mubr.f32.gmra.mxu0 %v558
        %v1856 = vpop.f32.mrf.mxu0
        %v1857 = vadd.f32 %v1632, %v1856
        %v1858 = vpop.f32.mrf.mxu0
        %1859 = vmatprep.mubr.f32.mxu0 0.0
        %1860 = vmatmul.mubr.f32.gmra.mxu0 %v561
        %v1861 = vpop.f32.mrf.mxu0
        %v1862 = vadd.f32 %v1637, %v1861
        %v1863 = vpop.f32.mrf.mxu0
        %1864 = vmatprep.mubr.f32.mxu0 0.0
        %1865 = vmatmul.mubr.f32.gmra.mxu0 %v563
        %v1866 = vpop.f32.mrf.mxu0
        %v1867 = vadd.f32 %v1642, %v1866
        %v1868 = vpop.f32.mrf.mxu0
        %1869 = vmatprep.mubr.f32.mxu0 0.0
        %1870 = vmatmul.mubr.f32.gmra.mxu0 %v566
        %v1871 = vpop.f32.mrf.mxu0
        %v1872 = vadd.f32 %v1647, %v1871
        %v1873 = vpop.f32.mrf.mxu0
        %1874 = vmatprep.mubr.f32.mxu0 0.0
        %1875 = vmatmul.mubr.f32.gmra.mxu0 %v568
        %v1876 = vpop.f32.mrf.mxu0
        %v1877 = vadd.f32 %v1652, %v1876
        %v1878 = vpop.f32.mrf.mxu0
        %1879 = vmatprep.mubr.f32.mxu0 0.0
        %1880 = vmatmul.mubr.f32.gmra.mxu0 %v571
        %v1881 = vpop.f32.mrf.mxu0
        %v1882 = vadd.f32 %v1657, %v1881
        %v1883 = vpop.f32.mrf.mxu0
        %1884 = vmatprep.mubr.f32.mxu0 0.0
        %1885 = vmatmul.mubr.f32.gmra.mxu0 %v573
        %v1886 = vpop.f32.mrf.mxu0
        %v1887 = vadd.f32 %v1662, %v1886
        %v1888 = vpop.f32.mrf.mxu0
        %1889 = vmatprep.mubr.f32.mxu0 0.0
        %1890 = vmatmul.mubr.f32.gmra.mxu0 %v576
        %v1891 = vpop.f32.mrf.mxu0
        %v1892 = vadd.f32 %v1667, %v1891
        %v1893 = vpop.f32.mrf.mxu0
        %1894 = vmatprep.mubr.f32.mxu0 0.0
        %1895 = vmatmul.mubr.f32.gmra.mxu0 %v578
        %v1896 = vpop.f32.mrf.mxu0
        %v1897 = vadd.f32 %v1672, %v1896
        %v1898 = vpop.f32.mrf.mxu0
        %1899 = vmatprep.mubr.f32.mxu0 0.0
        %1900 = vmatmul.mubr.f32.gmra.mxu0 %v581
        %v1901 = vpop.f32.mrf.mxu0
        %v1902 = vadd.f32 %v1677, %v1901
        %v1903 = vpop.f32.mrf.mxu0
        %1904 = vmatprep.mubr.f32.mxu0 0.0
        %1905 = vmatmul.mubr.f32.gmra.mxu0 %v583
        %v1906 = vpop.f32.mrf.mxu0
        %v1907 = vadd.f32 %v1682, %v1906
        %v1908 = vpop.f32.mrf.mxu0
        %1909 = vmatprep.mubr.f32.mxu0 0.0
        %1910 = vmatmul.mubr.f32.gmra.mxu0 %v586
        %v1911 = vpop.f32.mrf.mxu0
        %v1912 = vadd.f32 %v1687, %v1911
        %v1913 = vpop.f32.mrf.mxu0
        %1914 = vmatprep.mubr.f32.mxu0 0.0
        %1915 = vmatmul.mubr.f32.gmra.mxu0 %v588
        %v1916 = vpop.f32.mrf.mxu0
        %v1917 = vadd.f32 %v1692, %v1916
        %v1918 = vpop.f32.mrf.mxu0
        %1919 = vmatprep.mubr.f32.mxu0 0.0
        %1920 = vmatmul.mubr.f32.gmra.mxu0 %v591
        %v1921 = vpop.f32.mrf.mxu0
        %v1922 = vadd.f32 %v1697, %v1921
        %v1923 = vpop.f32.mrf.mxu0
        %1924 = vmatprep.mubr.f32.mxu0 0.0
        %1925 = vmatmul.mubr.f32.gmra.mxu0 %v593
        %v1926 = vpop.f32.mrf.mxu0
        %v1927 = vadd.f32 %v1702, %v1926
        %v1928 = vpop.f32.mrf.mxu0
        %1929 = vmatprep.mubr.f32.mxu0 0.0
        %1930 = vmatmul.mubr.f32.gmra.mxu0 %v648
        %v1931 = vpop.f32.mrf.mxu0
        %v1932 = vadd.f32 %v1707, %v1931
        %v1933 = vpop.f32.mrf.mxu0
        %1934 = vmatprep.mubr.f32.mxu0 0.0
        %1935 = vmatmul.mubr.f32.gmra.mxu0 %v650
        %v1936 = vpop.f32.mrf.mxu0
        %v1937 = vadd.f32 %v1712, %v1936
        %v1938 = vpop.f32.mrf.mxu0
        %1939 = vmatprep.mubr.f32.mxu0 0.0
        %1940 = vmatmul.mubr.f32.gmra.mxu0 %v653
        %v1941 = vpop.f32.mrf.mxu0
        %v1942 = vadd.f32 %v1717, %v1941
        %v1943 = vpop.f32.mrf.mxu0
        %1944 = vmatprep.mubr.f32.mxu0 0.0
        %1945 = vmatmul.mubr.f32.gmra.mxu0 %v655
        %v1946 = vpop.f32.mrf.mxu0
        %v1947 = vadd.f32 %v1722, %v1946
        %v1948 = vpop.f32.mrf.mxu0
        %1949 = vmatprep.mubr.f32.mxu0 0.0
        %1950 = vmatmul.mubr.f32.gmra.mxu0 %v682
        %v1951 = vpop.f32.mrf.mxu0
        %v1952 = vadd.f32 %v1727, %v1951
        %v1953 = vpop.f32.mrf.mxu0
        %1954 = vmatprep.mubr.f32.mxu0 0.0
        %1955 = vmatmul.mubr.f32.gmra.mxu0 %v684
        %v1956 = vpop.f32.mrf.mxu0
        %v1957 = vadd.f32 %v1732, %v1956
        %v1958 = vpop.f32.mrf.mxu0
        %1959 = vmatprep.mubr.f32.mxu0 0.0
        %1960 = vmatmul.mubr.f32.gmra.mxu0 %v687
        %v1961 = vpop.f32.mrf.mxu0
        %v1962 = vadd.f32 %v1737, %v1961
        %v1963 = vpop.f32.mrf.mxu0
        %1964 = vmatprep.mubr.f32.mxu0 0.0
        %1965 = vmatmul.mubr.f32.gmra.mxu0 %v689
        %v1966 = vpop.f32.mrf.mxu0
        %v1967 = vadd.f32 %v1742, %v1966
        %v1968 = vpop.f32.mrf.mxu0
        %1969 = vdwg.mxu0
        %v1970 = vmax.f32 %v1812, 0.0
        %v1971 = vmax.f32 %v1817, 0.0
        %v1972 = vmax.f32 %v1822, 0.0
        %v1973 = vmax.f32 %v1827, 0.0
        %v1974 = vmax.f32 %v1832, 0.0
        %v1975 = vmax.f32 %v1837, 0.0
        %v1976 = vmax.f32 %v1842, 0.0
        %v1977 = vmax.f32 %v1847, 0.0
        %v1978 = vmax.f32 %v1852, 0.0
        %v1979 = vmax.f32 %v1857, 0.0
        %v1980 = vmax.f32 %v1862, 0.0
        %v1981 = vmax.f32 %v1867, 0.0
        %v1982 = vmax.f32 %v1872, 0.0
        %v1983 = vmax.f32 %v1877, 0.0
        %v1984 = vmax.f32 %v1882, 0.0
        %v1985 = vmax.f32 %v1887, 0.0
        %v1986 = vmax.f32 %v1892, 0.0
        %v1987 = vmax.f32 %v1897, 0.0
        %v1988 = vmax.f32 %v1902, 0.0
        %v1989 = vmax.f32 %v1907, 0.0
        %v1990 = vmax.f32 %v1912, 0.0
        %v1991 = vmax.f32 %v1917, 0.0
        %v1992 = vmax.f32 %v1922, 0.0
        %v1993 = vmax.f32 %v1927, 0.0
        %v1994 = vmax.f32 %v1932, 0.0
        %v1995 = vmax.f32 %v1937, 0.0
        %v1996 = vmax.f32 %v1942, 0.0
        %v1997 = vmax.f32 %v1947, 0.0
        %v1998 = vmax.f32 %v1952, 0.0
        %v1999 = vmax.f32 %v1957, 0.0
        %v2000 = vmax.f32 %v1962, 0.0
        %v2001 = vmax.f32 %v1967, 0.0
        %2002 = vst [vmem:[#allocation2] sm:$0xff] 0.0
        %2003 = vst [vmem:[#allocation2 + $0x8] sm:$0xff] 0.0
        %2004 = vst [vmem:[#allocation2 + $0x10] sm:$0xf] 0.0
        %2005 = vst [vmem:[#allocation2 + $0x18] sm:$0xff] 0.0
        %2006 = vst [vmem:[#allocation2 + $0x20] sm:$0xff] 0.0
        %2007 = vst [vmem:[#allocation2 + $0x28] sm:$0xf] 0.0
        %2008 = vst [vmem:[#allocation2 + $0x30] sm:$0xff] 0.0
        %2009 = vst [vmem:[#allocation2 + $0x38] sm:$0xff] 0.0
        %2010 = vst [vmem:[#allocation2 + $0x40] sm:$0xf] 0.0
        %2011 = vst [vmem:[#allocation2 + $0x48] sm:$0xff] 0.0
        %2012 = vst [vmem:[#allocation2 + $0x50] sm:$0xff] 0.0
        %2013 = vst [vmem:[#allocation2 + $0x58] sm:$0xf] 0.0
        %2014 = vst [vmem:[#allocation2 + $0x60] sm:$0xff] 0.0
        %2015 = vst [vmem:[#allocation2 + $0x68] sm:$0xff] 0.0
        %2016 = vst [vmem:[#allocation2 + $0x70] sm:$0xf] 0.0
        %2017 = vst [vmem:[#allocation2 + $0x78] sm:$0xff] 0.0
        %2018 = vst [vmem:[#allocation2 + $0x80] sm:$0xff] 0.0
        %2019 = vst [vmem:[#allocation2 + $0x88] sm:$0xf] 0.0
        %2020 = vst [vmem:[#allocation2 + $0x90] sm:$0xff] 0.0
        %2021 = vst [vmem:[#allocation2 + $0x98] sm:$0xff] 0.0
        %2022 = vst [vmem:[#allocation2 + $0xa0] sm:$0xf] 0.0
        %2023 = vst [vmem:[#allocation2 + $0xa8] sm:$0xff] 0.0
        %2024 = vst [vmem:[#allocation2 + $0xb0] sm:$0xff] 0.0
        %2025 = vst [vmem:[#allocation2 + $0xb8] sm:$0xf] 0.0
        %2026 = vst [vmem:[#allocation2 + $0xc0] sm:$0xff] 0.0
        %2027 = vst [vmem:[#allocation2 + $0xc8] sm:$0xff] 0.0
        %2028 = vst [vmem:[#allocation2 + $0xd0] sm:$0xf] 0.0
        %2029 = vst [vmem:[#allocation2 + $0xd8] sm:$0xff] 0.0
        %2030 = vst [vmem:[#allocation2 + $0xe0] sm:$0xff] 0.0
        %2031 = vst [vmem:[#allocation2 + $0xe8] sm:$0xf] 0.0
        %2032 = vst [vmem:[#allocation2 + $0xf0] sm:$0xff] 0.0
        %2033 = vst [vmem:[#allocation2 + $0xf8] sm:$0xff] 0.0
        %2034 = vst [vmem:[#allocation2 + $0x100] sm:$0xf] 0.0
        %2035 = vst [vmem:[#allocation2 + $0x108] sm:$0xff] 0.0
        %2036 = vst [vmem:[#allocation2 + $0x110] sm:$0xff] 0.0
        %2037 = vst [vmem:[#allocation2 + $0x118] sm:$0xf] 0.0
        %2038 = vst [vmem:[#allocation2 + $0x120] sm:$0xff] 0.0
        %2039 = vst [vmem:[#allocation2 + $0x128] sm:$0xff] 0.0
        %2040 = vst [vmem:[#allocation2 + $0x130] sm:$0xf] 0.0
        %2041 = vst [vmem:[#allocation2 + $0x138] sm:$0xff] 0.0
        %2042 = vst [vmem:[#allocation2 + $0x140] sm:$0xff] 0.0
        %2043 = vst [vmem:[#allocation2 + $0x148] sm:$0xf] 0.0
        %2044 = vst [vmem:[#allocation2 + $0x150] sm:$0xff] 0.0
        %2045 = vst [vmem:[#allocation2 + $0x158] sm:$0xff] 0.0
        %2046 = vst [vmem:[#allocation2 + $0x160] sm:$0xf] 0.0
        %2047 = vst [vmem:[#allocation2 + $0x168] sm:$0xff] 0.0
        %2048 = vst [vmem:[#allocation2 + $0x170] sm:$0xff] 0.0
        %2049 = vst [vmem:[#allocation2 + $0x178] sm:$0xf] 0.0
        %2050 = vst [vmem:[#allocation2 + $0x180] sm:$0xff] 0.0
        %2051 = vst [vmem:[#allocation2 + $0x188] sm:$0xff] 0.0
        %2052 = vst [vmem:[#allocation2 + $0x190] sm:$0xf] 0.0
        %2053 = vst [vmem:[#allocation2 + $0x198] sm:$0xff] 0.0
        %2054 = vst [vmem:[#allocation2 + $0x1a0] sm:$0xff] 0.0
        %2055 = vst [vmem:[#allocation2 + $0x1a8] sm:$0xf] 0.0
        %2056 = vst [vmem:[#allocation2 + $0x1b0] sm:$0xff] 0.0
        %2057 = vst [vmem:[#allocation2 + $0x1b8] sm:$0xff] 0.0
        %2058 = vst [vmem:[#allocation2 + $0x1c0] sm:$0xf] 0.0
        %2059 = vst [vmem:[#allocation2 + $0x1c8] sm:$0xff] 0.0
        %2060 = vst [vmem:[#allocation2 + $0x1d0] sm:$0xff] 0.0
        %2061 = vst [vmem:[#allocation2 + $0x1d8] sm:$0xf] 0.0
        %s2062 = scalar_lea.vmem [#allocation2], 48
        %2063 = vst [vmem:[%s2062 + $0x2] sm:$0xff] %v1970
        %2064 = vst [vmem:[%s2062 + $0xa] sm:$0xff] %v1971
        %2065 = vst [vmem:[%s2062 + $0x1a] sm:$0xff] %v1972
        %2066 = vst [vmem:[%s2062 + $0x22] sm:$0xff] %v1973
        %2067 = vst [vmem:[%s2062 + $0x32] sm:$0xff] %v1974
        %2068 = vst [vmem:[%s2062 + $0x3a] sm:$0xff] %v1975
        %2069 = vst [vmem:[%s2062 + $0x4a] sm:$0xff] %v1976
        %2070 = vst [vmem:[%s2062 + $0x52] sm:$0xff] %v1977
        %2071 = vst [vmem:[%s2062 + $0x62] sm:$0xff] %v1978
        %2072 = vst [vmem:[%s2062 + $0x6a] sm:$0xff] %v1979
        %2073 = vst [vmem:[%s2062 + $0x7a] sm:$0xff] %v1980
        %2074 = vst [vmem:[%s2062 + $0x82] sm:$0xff] %v1981
        %2075 = vst [vmem:[%s2062 + $0x92] sm:$0xff] %v1982
        %2076 = vst [vmem:[%s2062 + $0x9a] sm:$0xff] %v1983
        %2077 = vst [vmem:[%s2062 + $0xaa] sm:$0xff] %v1984
        %2078 = vst [vmem:[%s2062 + $0xb2] sm:$0xff] %v1985
        %2079 = vst [vmem:[%s2062 + $0xc2] sm:$0xff] %v1986
        %2080 = vst [vmem:[%s2062 + $0xca] sm:$0xff] %v1987
        %2081 = vst [vmem:[%s2062 + $0xda] sm:$0xff] %v1988
        %2082 = vst [vmem:[%s2062 + $0xe2] sm:$0xff] %v1989
        %2083 = vst [vmem:[%s2062 + $0xf2] sm:$0xff] %v1990
        %2084 = vst [vmem:[%s2062 + $0xfa] sm:$0xff] %v1991
        %2085 = vst [vmem:[%s2062 + $0x10a] sm:$0xff] %v1992
        %2086 = vst [vmem:[%s2062 + $0x112] sm:$0xff] %v1993
        %2087 = vst [vmem:[%s2062 + $0x122] sm:$0xff] %v1994
        %2088 = vst [vmem:[%s2062 + $0x12a] sm:$0xff] %v1995
        %2089 = vst [vmem:[%s2062 + $0x13a] sm:$0xff] %v1996
        %2090 = vst [vmem:[%s2062 + $0x142] sm:$0xff] %v1997
        %2091 = vst [vmem:[%s2062 + $0x152] sm:$0xff] %v1998
        %2092 = vst [vmem:[%s2062 + $0x15a] sm:$0xff] %v1999
        %2093 = vst [vmem:[%s2062 + $0x16a] sm:$0xff] %v2000
        %2094 = vst [vmem:[%s2062 + $0x172] sm:$0xff] %v2001
        %v2095 = vld [vmem:[#allocation2] sm:$0xff]
        %v2096 = vld [vmem:[#allocation2 + $0x8] sm:$0xff]
        %v2097 = vld [vmem:[#allocation2 + $0x10] sm:$0xf]
        %v2098 = vld [vmem:[#allocation2 + $0x18] sm:$0xff]
        %v2099 = vld [vmem:[#allocation2 + $0x20] sm:$0xff]
        %v2100 = vld [vmem:[#allocation2 + $0x28] sm:$0xf]
        %v2101 = vld [vmem:[#allocation2 + $0x30] sm:$0xff]
        %v2102 = vld [vmem:[#allocation2 + $0x38] sm:$0xff]
        %v2103 = vld [vmem:[#allocation2 + $0x40] sm:$0xf]
        %v2104 = vld [vmem:[#allocation2 + $0x48] sm:$0xff]
        %v2105 = vld [vmem:[#allocation2 + $0x50] sm:$0xff]
        %v2106 = vld [vmem:[#allocation2 + $0x58] sm:$0xf]
        %v2107 = vld [vmem:[#allocation2 + $0x60] sm:$0xff]
        %v2108 = vld [vmem:[#allocation2 + $0x68] sm:$0xff]
        %v2109 = vld [vmem:[#allocation2 + $0x70] sm:$0xf]
        %v2110 = vld [vmem:[#allocation2 + $0x78] sm:$0xff]
        %v2111 = vld [vmem:[#allocation2 + $0x80] sm:$0xff]
        %v2112 = vld [vmem:[#allocation2 + $0x88] sm:$0xf]
        %v2113 = vld [vmem:[#allocation2 + $0x90] sm:$0xff]
        %v2114 = vld [vmem:[#allocation2 + $0x98] sm:$0xff]
        %v2115 = vld [vmem:[#allocation2 + $0xa0] sm:$0xf]
        %v2116 = vld [vmem:[#allocation2 + $0xa8] sm:$0xff]
        %v2117 = vld [vmem:[#allocation2 + $0xb0] sm:$0xff]
        %v2118 = vld [vmem:[#allocation2 + $0xb8] sm:$0xf]
        %v2119 = vld [vmem:[#allocation2 + $0xc0] sm:$0xff]
        %v2120 = vld [vmem:[#allocation2 + $0xc8] sm:$0xff]
        %v2121 = vld [vmem:[#allocation2 + $0xd0] sm:$0xf]
        %v2122 = vld [vmem:[#allocation2 + $0xd8] sm:$0xff]
        %v2123 = vld [vmem:[#allocation2 + $0xe0] sm:$0xff]
        %v2124 = vld [vmem:[#allocation2 + $0xe8] sm:$0xf]
        %v2125 = vld [vmem:[#allocation2 + $0xf0] sm:$0xff]
        %v2126 = vld [vmem:[#allocation2 + $0xf8] sm:$0xff]
        %v2127 = vld [vmem:[#allocation2 + $0x100] sm:$0xf]
        %v2128 = vld [vmem:[#allocation2 + $0x108] sm:$0xff]
        %v2129 = vld [vmem:[#allocation2 + $0x110] sm:$0xff]
        %v2130 = vld [vmem:[#allocation2 + $0x118] sm:$0xf]
        %v2131 = vld [vmem:[#allocation2 + $0x120] sm:$0xff]
        %v2132 = vld [vmem:[#allocation2 + $0x128] sm:$0xff]
        %v2133 = vld [vmem:[#allocation2 + $0x130] sm:$0xf]
        %v2134 = vld [vmem:[#allocation2 + $0x138] sm:$0xff]
        %v2135 = vld [vmem:[#allocation2 + $0x140] sm:$0xff]
        %v2136 = vld [vmem:[#allocation2 + $0x148] sm:$0xf]
        %v2137 = vld [vmem:[#allocation2 + $0x150] sm:$0xff]
        %v2138 = vld [vmem:[#allocation2 + $0x158] sm:$0xff]
        %v2139 = vld [vmem:[#allocation2 + $0x160] sm:$0xf]
        %v2140 = vld [vmem:[#allocation2 + $0x168] sm:$0xff]
        %v2141 = vld [vmem:[#allocation2 + $0x170] sm:$0xff]
        %v2142 = vld [vmem:[#allocation2 + $0x178] sm:$0xf]
        %v2143 = vld [vmem:[#allocation2 + $0x180] sm:$0xff]
        %v2144 = vld [vmem:[#allocation2 + $0x188] sm:$0xff]
        %v2145 = vld [vmem:[#allocation2 + $0x190] sm:$0xf]
        %v2146 = vld [vmem:[#allocation2 + $0x198] sm:$0xff]
        %v2147 = vld [vmem:[#allocation2 + $0x1a0] sm:$0xff]
        %v2148 = vld [vmem:[#allocation2 + $0x1a8] sm:$0xf]
        %v2149 = vld [vmem:[#allocation2 + $0x1b0] sm:$0xff]
        %v2150 = vld [vmem:[#allocation2 + $0x1b8] sm:$0xff]
        %v2151 = vld [vmem:[#allocation2 + $0x1c0] sm:$0xf]
        %v2152 = vld [vmem:[#allocation2 + $0x1c8] sm:$0xff]
        %v2153 = vld [vmem:[#allocation2 + $0x1d0] sm:$0xff]
        %v2154 = vld [vmem:[#allocation2 + $0x1d8] sm:$0xf]
        %v2203 = vrot.slane %v2095, 2
        %v2204 = vrot.slane %v2096, 2
        %v2205 = vsel %vm400, %v2203, %v2204
        %v2206 = vrot.slane %v2097, 2
        %v2207 = vsel %vm400, %v2204, %v2206
        %v2208 = vrot.slane %v2098, 2
        %v2209 = vrot.slane %v2099, 2
        %v2210 = vsel %vm400, %v2208, %v2209
        %v2211 = vrot.slane %v2100, 2
        %v2212 = vsel %vm400, %v2209, %v2211
        %v2213 = vrot.slane %v2101, 2
        %v2214 = vrot.slane %v2102, 2
        %v2215 = vsel %vm400, %v2213, %v2214
        %v2216 = vrot.slane %v2103, 2
        %v2217 = vsel %vm400, %v2214, %v2216
        %v2218 = vrot.slane %v2104, 2
        %v2219 = vrot.slane %v2105, 2
        %v2220 = vsel %vm400, %v2218, %v2219
        %v2221 = vrot.slane %v2106, 2
        %v2222 = vsel %vm400, %v2219, %v2221
        %v2223 = vrot.slane %v2107, 2
        %v2224 = vrot.slane %v2108, 2
        %v2225 = vsel %vm400, %v2223, %v2224
        %v2226 = vrot.slane %v2109, 2
        %v2227 = vsel %vm400, %v2224, %v2226
        %v2228 = vrot.slane %v2110, 2
        %v2229 = vrot.slane %v2111, 2
        %v2230 = vsel %vm400, %v2228, %v2229
        %v2231 = vrot.slane %v2112, 2
        %v2232 = vsel %vm400, %v2229, %v2231
        %v2233 = vrot.slane %v2113, 2
        %v2234 = vrot.slane %v2114, 2
        %v2235 = vsel %vm400, %v2233, %v2234
        %v2236 = vrot.slane %v2115, 2
        %v2237 = vsel %vm400, %v2234, %v2236
        %v2238 = vrot.slane %v2116, 2
        %v2239 = vrot.slane %v2117, 2
        %v2240 = vsel %vm400, %v2238, %v2239
        %v2241 = vrot.slane %v2118, 2
        %v2242 = vsel %vm400, %v2239, %v2241
        %v2243 = vrot.slane %v2119, 2
        %v2244 = vrot.slane %v2120, 2
        %v2245 = vsel %vm400, %v2243, %v2244
        %v2246 = vrot.slane %v2121, 2
        %v2247 = vsel %vm400, %v2244, %v2246
        %v2248 = vrot.slane %v2122, 2
        %v2249 = vrot.slane %v2123, 2
        %v2250 = vsel %vm400, %v2248, %v2249
        %v2251 = vrot.slane %v2124, 2
        %v2252 = vsel %vm400, %v2249, %v2251
        %v2253 = vrot.slane %v2125, 2
        %v2254 = vrot.slane %v2126, 2
        %v2255 = vsel %vm400, %v2253, %v2254
        %v2256 = vrot.slane %v2127, 2
        %v2257 = vsel %vm400, %v2254, %v2256
        %v2258 = vrot.slane %v2128, 2
        %v2259 = vrot.slane %v2129, 2
        %v2260 = vsel %vm400, %v2258, %v2259
        %v2261 = vrot.slane %v2130, 2
        %v2262 = vsel %vm400, %v2259, %v2261
        %v2263 = vrot.slane %v2131, 2
        %v2264 = vrot.slane %v2132, 2
        %v2265 = vsel %vm400, %v2263, %v2264
        %v2266 = vrot.slane %v2133, 2
        %v2267 = vsel %vm400, %v2264, %v2266
        %v2268 = vrot.slane %v2134, 2
        %v2269 = vrot.slane %v2135, 2
        %v2270 = vsel %vm400, %v2268, %v2269
        %v2271 = vrot.slane %v2136, 2
        %v2272 = vsel %vm400, %v2269, %v2271
        %v2273 = vrot.slane %v2137, 2
        %v2274 = vrot.slane %v2138, 2
        %v2275 = vsel %vm400, %v2273, %v2274
        %v2276 = vrot.slane %v2139, 2
        %v2277 = vsel %vm400, %v2274, %v2276
        %v2278 = vrot.slane %v2140, 2
        %v2279 = vrot.slane %v2141, 2
        %v2280 = vsel %vm400, %v2278, %v2279
        %v2281 = vrot.slane %v2142, 2
        %v2282 = vsel %vm400, %v2279, %v2281
        %v2315 = vrot.slane %v2095, 4
        %v2316 = vrot.slane %v2096, 4
        %v2317 = vsel %vm513, %v2315, %v2316
        %v2318 = vrot.slane %v2097, 4
        %v2319 = vsel %vm513, %v2316, %v2318
        %v2320 = vrot.slane %v2098, 4
        %v2321 = vrot.slane %v2099, 4
        %v2322 = vsel %vm513, %v2320, %v2321
        %v2323 = vrot.slane %v2100, 4
        %v2324 = vsel %vm513, %v2321, %v2323
        %v2325 = vrot.slane %v2101, 4
        %v2326 = vrot.slane %v2102, 4
        %v2327 = vsel %vm513, %v2325, %v2326
        %v2328 = vrot.slane %v2103, 4
        %v2329 = vsel %vm513, %v2326, %v2328
        %v2330 = vrot.slane %v2104, 4
        %v2331 = vrot.slane %v2105, 4
        %v2332 = vsel %vm513, %v2330, %v2331
        %v2333 = vrot.slane %v2106, 4
        %v2334 = vsel %vm513, %v2331, %v2333
        %v2335 = vrot.slane %v2107, 4
        %v2336 = vrot.slane %v2108, 4
        %v2337 = vsel %vm513, %v2335, %v2336
        %v2338 = vrot.slane %v2109, 4
        %v2339 = vsel %vm513, %v2336, %v2338
        %v2340 = vrot.slane %v2110, 4
        %v2341 = vrot.slane %v2111, 4
        %v2342 = vsel %vm513, %v2340, %v2341
        %v2343 = vrot.slane %v2112, 4
        %v2344 = vsel %vm513, %v2341, %v2343
        %v2345 = vrot.slane %v2113, 4
        %v2346 = vrot.slane %v2114, 4
        %v2347 = vsel %vm513, %v2345, %v2346
        %v2348 = vrot.slane %v2115, 4
        %v2349 = vsel %vm513, %v2346, %v2348
        %v2350 = vrot.slane %v2116, 4
        %v2351 = vrot.slane %v2117, 4
        %v2352 = vsel %vm513, %v2350, %v2351
        %v2353 = vrot.slane %v2118, 4
        %v2354 = vsel %vm513, %v2351, %v2353
        %v2355 = vrot.slane %v2119, 4
        %v2356 = vrot.slane %v2120, 4
        %v2357 = vsel %vm513, %v2355, %v2356
        %v2358 = vrot.slane %v2121, 4
        %v2359 = vsel %vm513, %v2356, %v2358
        %v2360 = vrot.slane %v2122, 4
        %v2361 = vrot.slane %v2123, 4
        %v2362 = vsel %vm513, %v2360, %v2361
        %v2363 = vrot.slane %v2124, 4
        %v2364 = vsel %vm513, %v2361, %v2363
        %v2365 = vrot.slane %v2125, 4
        %v2366 = vrot.slane %v2126, 4
        %v2367 = vsel %vm513, %v2365, %v2366
        %v2368 = vrot.slane %v2127, 4
        %v2369 = vsel %vm513, %v2366, %v2368
        %v2370 = vrot.slane %v2128, 4
        %v2371 = vrot.slane %v2129, 4
        %v2372 = vsel %vm513, %v2370, %v2371
        %v2373 = vrot.slane %v2130, 4
        %v2374 = vsel %vm513, %v2371, %v2373
        %v2375 = vrot.slane %v2131, 4
        %v2376 = vrot.slane %v2132, 4
        %v2377 = vsel %vm513, %v2375, %v2376
        %v2378 = vrot.slane %v2133, 4
        %v2379 = vsel %vm513, %v2376, %v2378
        %v2380 = vrot.slane %v2134, 4
        %v2381 = vrot.slane %v2135, 4
        %v2382 = vsel %vm513, %v2380, %v2381
        %v2383 = vrot.slane %v2136, 4
        %v2384 = vsel %vm513, %v2381, %v2383
        %v2385 = vrot.slane %v2137, 4
        %v2386 = vrot.slane %v2138, 4
        %v2387 = vsel %vm513, %v2385, %v2386
        %v2388 = vrot.slane %v2139, 4
        %v2389 = vsel %vm513, %v2386, %v2388
        %v2390 = vrot.slane %v2140, 4
        %v2391 = vrot.slane %v2141, 4
        %v2392 = vsel %vm513, %v2390, %v2391
        %v2393 = vrot.slane %v2142, 4
        %v2394 = vsel %vm513, %v2391, %v2393
        %v2433 = vrot.slane %v2143, 2
        %v2434 = vrot.slane %v2144, 2
        %v2435 = vsel %vm400, %v2433, %v2434
        %v2436 = vrot.slane %v2145, 2
        %v2437 = vsel %vm400, %v2434, %v2436
        %v2438 = vrot.slane %v2146, 2
        %v2439 = vrot.slane %v2147, 2
        %v2440 = vsel %vm400, %v2438, %v2439
        %v2441 = vrot.slane %v2148, 2
        %v2442 = vsel %vm400, %v2439, %v2441
        %v2447 = vrot.slane %v2143, 4
        %v2448 = vrot.slane %v2144, 4
        %v2449 = vsel %vm513, %v2447, %v2448
        %v2450 = vrot.slane %v2145, 4
        %v2451 = vsel %vm513, %v2448, %v2450
        %v2452 = vrot.slane %v2146, 4
        %v2453 = vrot.slane %v2147, 4
        %v2454 = vsel %vm513, %v2452, %v2453
        %v2455 = vrot.slane %v2148, 4
        %v2456 = vsel %vm513, %v2453, %v2455
        %v2467 = vrot.slane %v2149, 2
        %v2468 = vrot.slane %v2150, 2
        %v2469 = vsel %vm400, %v2467, %v2468
        %v2470 = vrot.slane %v2151, 2
        %v2471 = vsel %vm400, %v2468, %v2470
        %v2472 = vrot.slane %v2152, 2
        %v2473 = vrot.slane %v2153, 2
        %v2474 = vsel %vm400, %v2472, %v2473
        %v2475 = vrot.slane %v2154, 2
        %v2476 = vsel %vm400, %v2473, %v2475
        %v2481 = vrot.slane %v2149, 4
        %v2482 = vrot.slane %v2150, 4
        %v2483 = vsel %vm513, %v2481, %v2482
        %v2484 = vrot.slane %v2151, 4
        %v2485 = vsel %vm513, %v2482, %v2484
        %v2486 = vrot.slane %v2152, 4
        %v2487 = vrot.slane %v2153, 4
        %v2488 = vsel %vm513, %v2486, %v2487
        %v2489 = vrot.slane %v2154, 4
        %v2490 = vsel %vm513, %v2487, %v2489
        %v2495 = vld [vmem:[#allocation3] sm:$0xff]
        %v2496 = vld [vmem:[#allocation3 + $0x8] sm:$0xff]
        %v2497 = vld [vmem:[#allocation3 + $0x10] sm:$0xff]
        %v2498 = vld [vmem:[#allocation3 + $0x18] sm:$0xff]
        %v2499 = vld [vmem:[#allocation3 + $0x20] sm:$0xff]
        %v2500 = vld [vmem:[#allocation3 + $0x28] sm:$0xff]
        %v2501 = vld [vmem:[#allocation3 + $0x30] sm:$0xff]
        %v2502 = vld [vmem:[#allocation3 + $0x38] sm:$0xff]
        %v2503 = vld [vmem:[#allocation3 + $0x40] sm:$0xff]
        %v2504 = vld [vmem:[#allocation3 + $0x48] sm:$0xff]
        %v2505 = vld [vmem:[#allocation3 + $0x50] sm:$0xff]
        %v2506 = vld [vmem:[#allocation3 + $0x58] sm:$0xff]
        %v2507 = vld [vmem:[#allocation3 + $0x60] sm:$0xff]
        %v2508 = vld [vmem:[#allocation3 + $0x68] sm:$0xff]
        %v2509 = vld [vmem:[#allocation3 + $0x70] sm:$0xff]
        %v2510 = vld [vmem:[#allocation3 + $0x78] sm:$0xff]
        %v2511 = vld [vmem:[#allocation3 + $0x80] sm:$0xff]
        %v2512 = vld [vmem:[#allocation3 + $0x88] sm:$0xff]
        %v2513 = vld [vmem:[#allocation3 + $0x90] sm:$0xff]
        %v2514 = vld [vmem:[#allocation3 + $0x98] sm:$0xff]
        %v2515 = vld [vmem:[#allocation3 + $0xa0] sm:$0xff]
        %v2516 = vld [vmem:[#allocation3 + $0xa8] sm:$0xff]
        %v2517 = vld [vmem:[#allocation3 + $0xb0] sm:$0xff]
        %v2518 = vld [vmem:[#allocation3 + $0xb8] sm:$0xff]
        %v2519 = vld [vmem:[#allocation3 + $0xc0] sm:$0xff]
        %v2520 = vld [vmem:[#allocation3 + $0xc8] sm:$0xff]
        %v2521 = vld [vmem:[#allocation3 + $0xd0] sm:$0xff]
        %v2522 = vld [vmem:[#allocation3 + $0xd8] sm:$0xff]
        %v2523 = vld [vmem:[#allocation3 + $0xe0] sm:$0xff]
        %v2524 = vld [vmem:[#allocation3 + $0xe8] sm:$0xff]
        %v2525 = vld [vmem:[#allocation3 + $0xf0] sm:$0xff]
        %v2526 = vld [vmem:[#allocation3 + $0xf8] sm:$0xff]
        %v2527 = vld [vmem:[#allocation3 + $0x100] sm:$0xff]
        %v2528 = vld [vmem:[#allocation3 + $0x108] sm:$0xff]
        %v2529 = vld [vmem:[#allocation3 + $0x110] sm:$0xff]
        %v2530 = vld [vmem:[#allocation3 + $0x118] sm:$0xff]
        %v2531 = vld [vmem:[#allocation3 + $0x120] sm:$0xff]
        %v2532 = vld [vmem:[#allocation3 + $0x128] sm:$0xff]
        %v2533 = vld [vmem:[#allocation3 + $0x130] sm:$0xff]
        %v2534 = vld [vmem:[#allocation3 + $0x138] sm:$0xff]
        %v2535 = vld [vmem:[#allocation3 + $0x140] sm:$0xff]
        %v2536 = vld [vmem:[#allocation3 + $0x148] sm:$0xff]
        %v2537 = vld [vmem:[#allocation3 + $0x150] sm:$0xff]
        %v2538 = vld [vmem:[#allocation3 + $0x158] sm:$0xff]
        %v2539 = vld [vmem:[#allocation3 + $0x160] sm:$0xff]
        %v2540 = vld [vmem:[#allocation3 + $0x168] sm:$0xff]
        %v2541 = vld [vmem:[#allocation3 + $0x170] sm:$0xff]
        %v2542 = vld [vmem:[#allocation3 + $0x178] sm:$0xff]
        %v2543 = vld [vmem:[#allocation3 + $0x180] sm:$0xff]
        %v2544 = vld [vmem:[#allocation3 + $0x188] sm:$0xff]
        %v2545 = vld [vmem:[#allocation3 + $0x190] sm:$0xff]
        %v2546 = vld [vmem:[#allocation3 + $0x198] sm:$0xff]
        %v2547 = vld [vmem:[#allocation3 + $0x1a0] sm:$0xff]
        %v2548 = vld [vmem:[#allocation3 + $0x1a8] sm:$0xff]
        %v2549 = vld [vmem:[#allocation3 + $0x1b0] sm:$0xff]
        %v2550 = vld [vmem:[#allocation3 + $0x1b8] sm:$0xff]
        %v2551 = vld [vmem:[#allocation3 + $0x1c0] sm:$0xff]
        %v2552 = vld [vmem:[#allocation3 + $0x1c8] sm:$0xff]
        %v2553 = vld [vmem:[#allocation3 + $0x1d0] sm:$0xff]
        %v2554 = vld [vmem:[#allocation3 + $0x1d8] sm:$0xff]
        %v2555 = vld [vmem:[#allocation3 + $0x1e0] sm:$0xff]
        %v2556 = vld [vmem:[#allocation3 + $0x1e8] sm:$0xff]
        %v2557 = vld [vmem:[#allocation3 + $0x1f0] sm:$0xff]
        %v2558 = vld [vmem:[#allocation3 + $0x1f8] sm:$0xff]
        %v2559 = vld [vmem:[#allocation3 + $0x200] sm:$0xff]
        %v2560 = vld [vmem:[#allocation3 + $0x208] sm:$0xff]
        %v2561 = vld [vmem:[#allocation3 + $0x210] sm:$0xff]
        %v2562 = vld [vmem:[#allocation3 + $0x218] sm:$0xff]
        %v2563 = vld [vmem:[#allocation3 + $0x220] sm:$0xff]
        %v2564 = vld [vmem:[#allocation3 + $0x228] sm:$0xff]
        %v2565 = vld [vmem:[#allocation3 + $0x230] sm:$0xff]
        %v2566 = vld [vmem:[#allocation3 + $0x238] sm:$0xff]
        %v2567 = vld [vmem:[#allocation3 + $0x240] sm:$0xff]
        %v2568 = vld [vmem:[#allocation3 + $0x248] sm:$0xff]
        %v2569 = vld [vmem:[#allocation3 + $0x250] sm:$0xff]
        %v2570 = vld [vmem:[#allocation3 + $0x258] sm:$0xff]
        %v2571 = vld [vmem:[#allocation3 + $0x260] sm:$0xff]
        %v2572 = vld [vmem:[#allocation3 + $0x268] sm:$0xff]
        %v2573 = vld [vmem:[#allocation3 + $0x270] sm:$0xff]
        %v2574 = vld [vmem:[#allocation3 + $0x278] sm:$0xff]
        %v2575 = vld [vmem:[#allocation3 + $0x280] sm:$0xff]
        %v2576 = vld [vmem:[#allocation3 + $0x288] sm:$0xff]
        %v2577 = vld [vmem:[#allocation3 + $0x290] sm:$0xff]
        %v2578 = vld [vmem:[#allocation3 + $0x298] sm:$0xff]
        %v2579 = vld [vmem:[#allocation3 + $0x2a0] sm:$0xff]
        %v2580 = vld [vmem:[#allocation3 + $0x2a8] sm:$0xff]
        %v2581 = vld [vmem:[#allocation3 + $0x2b0] sm:$0xff]
        %v2582 = vld [vmem:[#allocation3 + $0x2b8] sm:$0xff]
        %v2583 = vld [vmem:[#allocation3 + $0x2c0] sm:$0xff]
        %v2584 = vld [vmem:[#allocation3 + $0x2c8] sm:$0xff]
        %v2585 = vld [vmem:[#allocation3 + $0x2d0] sm:$0xff]
        %v2586 = vld [vmem:[#allocation3 + $0x2d8] sm:$0xff]
        %v2587 = vld [vmem:[#allocation3 + $0x2e0] sm:$0xff]
        %v2588 = vld [vmem:[#allocation3 + $0x2e8] sm:$0xff]
        %v2589 = vld [vmem:[#allocation3 + $0x2f0] sm:$0xff]
        %v2590 = vld [vmem:[#allocation3 + $0x2f8] sm:$0xff]
        %v2591 = vld [vmem:[#allocation3 + $0x300] sm:$0xff]
        %v2592 = vld [vmem:[#allocation3 + $0x308] sm:$0xff]
        %v2593 = vld [vmem:[#allocation3 + $0x310] sm:$0xff]
        %v2594 = vld [vmem:[#allocation3 + $0x318] sm:$0xff]
        %v2595 = vld [vmem:[#allocation3 + $0x320] sm:$0xff]
        %v2596 = vld [vmem:[#allocation3 + $0x328] sm:$0xff]
        %v2597 = vld [vmem:[#allocation3 + $0x330] sm:$0xff]
        %v2598 = vld [vmem:[#allocation3 + $0x338] sm:$0xff]
        %v2599 = vld [vmem:[#allocation3 + $0x340] sm:$0xff]
        %v2600 = vld [vmem:[#allocation3 + $0x348] sm:$0xff]
        %v2601 = vld [vmem:[#allocation3 + $0x350] sm:$0xff]
        %v2602 = vld [vmem:[#allocation3 + $0x358] sm:$0xff]
        %v2603 = vld [vmem:[#allocation3 + $0x360] sm:$0xff]
        %v2604 = vld [vmem:[#allocation3 + $0x368] sm:$0xff]
        %v2605 = vld [vmem:[#allocation3 + $0x370] sm:$0xff]
        %v2606 = vld [vmem:[#allocation3 + $0x378] sm:$0xff]
        %v2607 = vld [vmem:[#allocation3 + $0x380] sm:$0xff]
        %v2608 = vld [vmem:[#allocation3 + $0x388] sm:$0xff]
        %v2609 = vld [vmem:[#allocation3 + $0x390] sm:$0xff]
        %v2610 = vld [vmem:[#allocation3 + $0x398] sm:$0xff]
        %v2611 = vld [vmem:[#allocation3 + $0x3a0] sm:$0xff]
        %v2612 = vld [vmem:[#allocation3 + $0x3a8] sm:$0xff]
        %v2613 = vld [vmem:[#allocation3 + $0x3b0] sm:$0xff]
        %v2614 = vld [vmem:[#allocation3 + $0x3b8] sm:$0xff]
        %v2615 = vld [vmem:[#allocation3 + $0x3c0] sm:$0xff]
        %v2616 = vld [vmem:[#allocation3 + $0x3c8] sm:$0xff]
        %v2617 = vld [vmem:[#allocation3 + $0x3d0] sm:$0xff]
        %v2618 = vld [vmem:[#allocation3 + $0x3d8] sm:$0xff]
        %v2619 = vld [vmem:[#allocation3 + $0x3e0] sm:$0xff]
        %v2620 = vld [vmem:[#allocation3 + $0x3e8] sm:$0xff]
        %v2621 = vld [vmem:[#allocation3 + $0x3f0] sm:$0xff]
        %v2622 = vld [vmem:[#allocation3 + $0x3f8] sm:$0xff]
        %v2623 = vld [vmem:[#allocation3 + $0x400] sm:$0xff]
        %v2624 = vld [vmem:[#allocation3 + $0x408] sm:$0xff]
        %v2625 = vld [vmem:[#allocation3 + $0x410] sm:$0xff]
        %v2626 = vld [vmem:[#allocation3 + $0x418] sm:$0xff]
        %v2627 = vld [vmem:[#allocation3 + $0x420] sm:$0xff]
        %v2628 = vld [vmem:[#allocation3 + $0x428] sm:$0xff]
        %v2629 = vld [vmem:[#allocation3 + $0x430] sm:$0xff]
        %v2630 = vld [vmem:[#allocation3 + $0x438] sm:$0xff]
        %v2631 = vld [vmem:[#allocation3 + $0x440] sm:$0xff]
        %v2632 = vld [vmem:[#allocation3 + $0x448] sm:$0xff]
        %v2633 = vld [vmem:[#allocation3 + $0x450] sm:$0xff]
        %v2634 = vld [vmem:[#allocation3 + $0x458] sm:$0xff]
        %v2635 = vld [vmem:[#allocation3 + $0x460] sm:$0xff]
        %v2636 = vld [vmem:[#allocation3 + $0x468] sm:$0xff]
        %v2637 = vld [vmem:[#allocation3 + $0x470] sm:$0xff]
        %v2638 = vld [vmem:[#allocation3 + $0x478] sm:$0xff]
        %v2639 = vld [vmem:[%s4] sm:$0x1]
        %v2641 = vlaneseq
        %v2642 = vshrl.u32 %v2641, 7
        %v2643 = vsub.s32 0, %v2642
        %v2644 = vrot.slane %v2639, %v2643
        %2646 = vmatprep.subr.mxu0 0.0
        %2647 = vmatpush1.msra.mxu0 %v2510
        %2648 = vmatprep.subr.mxu0 0.0
        %2649 = vmatpush1.msra.mxu0 %v2509
        %2650 = vmatprep.subr.mxu0 0.0
        %2651 = vmatpush1.msra.mxu0 %v2508
        %2652 = vmatprep.subr.mxu0 0.0
        %2653 = vmatpush1.msra.mxu0 %v2507
        %2654 = vmatprep.subr.mxu0 0.0
        %2655 = vmatpush1.msra.mxu0 %v2506
        %2656 = vmatprep.subr.mxu0 0.0
        %2657 = vmatpush1.msra.mxu0 %v2505
        %2658 = vmatprep.subr.mxu0 0.0
        %2659 = vmatpush1.msra.mxu0 %v2504
        %2660 = vmatprep.subr.mxu0 0.0
        %2661 = vmatpush1.msra.mxu0 %v2503
        %2662 = vmatprep.subr.mxu0 0.0
        %2663 = vmatpush1.msra.mxu0 %v2502
        %2664 = vmatprep.subr.mxu0 0.0
        %2665 = vmatpush1.msra.mxu0 %v2501
        %2666 = vmatprep.subr.mxu0 0.0
        %2667 = vmatpush1.msra.mxu0 %v2500
        %2668 = vmatprep.subr.mxu0 0.0
        %2669 = vmatpush1.msra.mxu0 %v2499
        %2670 = vmatprep.subr.mxu0 0.0
        %2671 = vmatpush1.msra.mxu0 %v2498
        %2672 = vmatprep.subr.mxu0 0.0
        %2673 = vmatpush1.msra.mxu0 %v2497
        %2674 = vmatprep.subr.mxu0 0.0
        %2675 = vmatpush1.msra.mxu0 %v2496
        %2676 = vmatprep.subr.mxu0 0.0
        %2677 = vmatpush1.msra.mxu0 %v2495
        %2678 = vmatprep.subr.mxu0 0.0
        %2679 = vmatpush2.msra.mxu0 %v2526
        %2680 = vmatprep.subr.mxu0 0.0
        %2681 = vmatpush2.msra.mxu0 %v2525
        %2682 = vmatprep.subr.mxu0 0.0
        %2683 = vmatpush2.msra.mxu0 %v2524
        %2684 = vmatprep.subr.mxu0 0.0
        %2685 = vmatpush2.msra.mxu0 %v2523
        %2686 = vmatprep.subr.mxu0 0.0
        %2687 = vmatpush2.msra.mxu0 %v2522
        %2688 = vmatprep.subr.mxu0 0.0
        %2689 = vmatpush2.msra.mxu0 %v2521
        %2690 = vmatprep.subr.mxu0 0.0
        %2691 = vmatpush2.msra.mxu0 %v2520
        %2692 = vmatprep.subr.mxu0 0.0
        %2693 = vmatpush2.msra.mxu0 %v2519
        %2694 = vmatprep.subr.mxu0 0.0
        %2695 = vmatpush2.msra.mxu0 %v2518
        %2696 = vmatprep.subr.mxu0 0.0
        %2697 = vmatpush2.msra.mxu0 %v2517
        %2698 = vmatprep.subr.mxu0 0.0
        %2699 = vmatpush2.msra.mxu0 %v2516
        %2700 = vmatprep.subr.mxu0 0.0
        %2701 = vmatpush2.msra.mxu0 %v2515
        %2702 = vmatprep.subr.mxu0 0.0
        %2703 = vmatpush2.msra.mxu0 %v2514
        %2704 = vmatprep.subr.mxu0 0.0
        %2705 = vmatpush2.msra.mxu0 %v2513
        %2706 = vmatprep.subr.mxu0 0.0
        %2707 = vmatpush2.msra.mxu0 %v2512
        %2708 = vmatprep.subr.mxu0 0.0
        %2709 = vmatpush2.msra.mxu0 %v2511
        %2710 = vmatprep.mubr.f32.mxu0 %v2205
        %2711 = vmatmul.mubr.f32.gmra.mxu0 %v2095
        %v2712 = vpop.f32.mrf.mxu0
        %v2713 = vadd.f32 %v2644, %v2712
        %v2714 = vpop.f32.mrf.mxu0
        %2715 = vmatprep.mubr.f32.mxu0 %v2207
        %2716 = vmatmul.mubr.f32.gmra.mxu0 %v2096
        %v2717 = vpop.f32.mrf.mxu0
        %v2718 = vadd.f32 %v2644, %v2717
        %v2719 = vpop.f32.mrf.mxu0
        %2720 = vmatprep.mubr.f32.mxu0 %v2210
        %2721 = vmatmul.mubr.f32.gmra.mxu0 %v2098
        %v2722 = vpop.f32.mrf.mxu0
        %v2723 = vadd.f32 %v2644, %v2722
        %v2724 = vpop.f32.mrf.mxu0
        %2725 = vmatprep.mubr.f32.mxu0 %v2212
        %2726 = vmatmul.mubr.f32.gmra.mxu0 %v2099
        %v2727 = vpop.f32.mrf.mxu0
        %v2728 = vadd.f32 %v2644, %v2727
        %v2729 = vpop.f32.mrf.mxu0
        %2730 = vmatprep.mubr.f32.mxu0 %v2215
        %2731 = vmatmul.mubr.f32.gmra.mxu0 %v2101
        %v2732 = vpop.f32.mrf.mxu0
        %v2733 = vadd.f32 %v2644, %v2732
        %v2734 = vpop.f32.mrf.mxu0
        %2735 = vmatprep.mubr.f32.mxu0 %v2217
        %2736 = vmatmul.mubr.f32.gmra.mxu0 %v2102
        %v2737 = vpop.f32.mrf.mxu0
        %v2738 = vadd.f32 %v2644, %v2737
        %v2739 = vpop.f32.mrf.mxu0
        %2740 = vmatprep.mubr.f32.mxu0 %v2220
        %2741 = vmatmul.mubr.f32.gmra.mxu0 %v2104
        %v2742 = vpop.f32.mrf.mxu0
        %v2743 = vadd.f32 %v2644, %v2742
        %v2744 = vpop.f32.mrf.mxu0
        %2745 = vmatprep.mubr.f32.mxu0 %v2222
        %2746 = vmatmul.mubr.f32.gmra.mxu0 %v2105
        %v2747 = vpop.f32.mrf.mxu0
        %v2748 = vadd.f32 %v2644, %v2747
        %v2749 = vpop.f32.mrf.mxu0
        %2750 = vmatprep.mubr.f32.mxu0 %v2225
        %2751 = vmatmul.mubr.f32.gmra.mxu0 %v2107
        %v2752 = vpop.f32.mrf.mxu0
        %v2753 = vadd.f32 %v2644, %v2752
        %v2754 = vpop.f32.mrf.mxu0
        %2755 = vmatprep.mubr.f32.mxu0 %v2227
        %2756 = vmatmul.mubr.f32.gmra.mxu0 %v2108
        %v2757 = vpop.f32.mrf.mxu0
        %v2758 = vadd.f32 %v2644, %v2757
        %v2759 = vpop.f32.mrf.mxu0
        %2760 = vmatprep.mubr.f32.mxu0 %v2230
        %2761 = vmatmul.mubr.f32.gmra.mxu0 %v2110
        %v2762 = vpop.f32.mrf.mxu0
        %v2763 = vadd.f32 %v2644, %v2762
        %v2764 = vpop.f32.mrf.mxu0
        %2765 = vmatprep.mubr.f32.mxu0 %v2232
        %2766 = vmatmul.mubr.f32.gmra.mxu0 %v2111
        %v2767 = vpop.f32.mrf.mxu0
        %v2768 = vadd.f32 %v2644, %v2767
        %v2769 = vpop.f32.mrf.mxu0
        %2770 = vmatprep.mubr.f32.mxu0 %v2235
        %2771 = vmatmul.mubr.f32.gmra.mxu0 %v2113
        %v2772 = vpop.f32.mrf.mxu0
        %v2773 = vadd.f32 %v2644, %v2772
        %v2774 = vpop.f32.mrf.mxu0
        %2775 = vmatprep.mubr.f32.mxu0 %v2237
        %2776 = vmatmul.mubr.f32.gmra.mxu0 %v2114
        %v2777 = vpop.f32.mrf.mxu0
        %v2778 = vadd.f32 %v2644, %v2777
        %v2779 = vpop.f32.mrf.mxu0
        %2780 = vmatprep.mubr.f32.mxu0 %v2240
        %2781 = vmatmul.mubr.f32.gmra.mxu0 %v2116
        %v2782 = vpop.f32.mrf.mxu0
        %v2783 = vadd.f32 %v2644, %v2782
        %v2784 = vpop.f32.mrf.mxu0
        %2785 = vmatprep.mubr.f32.mxu0 %v2242
        %2786 = vmatmul.mubr.f32.gmra.mxu0 %v2117
        %v2787 = vpop.f32.mrf.mxu0
        %v2788 = vadd.f32 %v2644, %v2787
        %v2789 = vpop.f32.mrf.mxu0
        %2790 = vmatprep.mubr.f32.mxu0 %v2245
        %2791 = vmatmul.mubr.f32.gmra.mxu0 %v2119
        %v2792 = vpop.f32.mrf.mxu0
        %v2793 = vadd.f32 %v2644, %v2792
        %v2794 = vpop.f32.mrf.mxu0
        %2795 = vmatprep.mubr.f32.mxu0 %v2247
        %2796 = vmatmul.mubr.f32.gmra.mxu0 %v2120
        %v2797 = vpop.f32.mrf.mxu0
        %v2798 = vadd.f32 %v2644, %v2797
        %v2799 = vpop.f32.mrf.mxu0
        %2800 = vmatprep.mubr.f32.mxu0 %v2250
        %2801 = vmatmul.mubr.f32.gmra.mxu0 %v2122
        %v2802 = vpop.f32.mrf.mxu0
        %v2803 = vadd.f32 %v2644, %v2802
        %v2804 = vpop.f32.mrf.mxu0
        %2805 = vmatprep.mubr.f32.mxu0 %v2252
        %2806 = vmatmul.mubr.f32.gmra.mxu0 %v2123
        %v2807 = vpop.f32.mrf.mxu0
        %v2808 = vadd.f32 %v2644, %v2807
        %v2809 = vpop.f32.mrf.mxu0
        %2810 = vmatprep.mubr.f32.mxu0 %v2255
        %2811 = vmatmul.mubr.f32.gmra.mxu0 %v2125
        %v2812 = vpop.f32.mrf.mxu0
        %v2813 = vadd.f32 %v2644, %v2812
        %v2814 = vpop.f32.mrf.mxu0
        %2815 = vmatprep.mubr.f32.mxu0 %v2257
        %2816 = vmatmul.mubr.f32.gmra.mxu0 %v2126
        %v2817 = vpop.f32.mrf.mxu0
        %v2818 = vadd.f32 %v2644, %v2817
        %v2819 = vpop.f32.mrf.mxu0
        %2820 = vmatprep.mubr.f32.mxu0 %v2260
        %2821 = vmatmul.mubr.f32.gmra.mxu0 %v2128
        %v2822 = vpop.f32.mrf.mxu0
        %v2823 = vadd.f32 %v2644, %v2822
        %v2824 = vpop.f32.mrf.mxu0
        %2825 = vmatprep.mubr.f32.mxu0 %v2262
        %2826 = vmatmul.mubr.f32.gmra.mxu0 %v2129
        %v2827 = vpop.f32.mrf.mxu0
        %v2828 = vadd.f32 %v2644, %v2827
        %v2829 = vpop.f32.mrf.mxu0
        %2830 = vmatprep.mubr.f32.mxu0 %v2265
        %2831 = vmatmul.mubr.f32.gmra.mxu0 %v2131
        %v2832 = vpop.f32.mrf.mxu0
        %v2833 = vadd.f32 %v2644, %v2832
        %v2834 = vpop.f32.mrf.mxu0
        %2835 = vmatprep.mubr.f32.mxu0 %v2267
        %2836 = vmatmul.mubr.f32.gmra.mxu0 %v2132
        %v2837 = vpop.f32.mrf.mxu0
        %v2838 = vadd.f32 %v2644, %v2837
        %v2839 = vpop.f32.mrf.mxu0
        %2840 = vmatprep.mubr.f32.mxu0 %v2270
        %2841 = vmatmul.mubr.f32.gmra.mxu0 %v2134
        %v2842 = vpop.f32.mrf.mxu0
        %v2843 = vadd.f32 %v2644, %v2842
        %v2844 = vpop.f32.mrf.mxu0
        %2845 = vmatprep.mubr.f32.mxu0 %v2272
        %2846 = vmatmul.mubr.f32.gmra.mxu0 %v2135
        %v2847 = vpop.f32.mrf.mxu0
        %v2848 = vadd.f32 %v2644, %v2847
        %v2849 = vpop.f32.mrf.mxu0
        %2850 = vmatprep.mubr.f32.mxu0 %v2275
        %2851 = vmatmul.mubr.f32.gmra.mxu0 %v2137
        %v2852 = vpop.f32.mrf.mxu0
        %v2853 = vadd.f32 %v2644, %v2852
        %v2854 = vpop.f32.mrf.mxu0
        %2855 = vmatprep.mubr.f32.mxu0 %v2277
        %2856 = vmatmul.mubr.f32.gmra.mxu0 %v2138
        %v2857 = vpop.f32.mrf.mxu0
        %v2858 = vadd.f32 %v2644, %v2857
        %v2859 = vpop.f32.mrf.mxu0
        %2860 = vmatprep.mubr.f32.mxu0 %v2280
        %2861 = vmatmul.mubr.f32.gmra.mxu0 %v2140
        %v2862 = vpop.f32.mrf.mxu0
        %v2863 = vadd.f32 %v2644, %v2862
        %v2864 = vpop.f32.mrf.mxu0
        %2865 = vmatprep.mubr.f32.mxu0 %v2282
        %2866 = vmatmul.mubr.f32.gmra.mxu0 %v2141
        %v2867 = vpop.f32.mrf.mxu0
        %v2868 = vadd.f32 %v2644, %v2867
        %v2869 = vpop.f32.mrf.mxu0
        %2870 = vdwg.mxu0
        %2871 = vmatprep.subr.mxu0 0.0
        %2872 = vmatpush1.msra.mxu0 %v2542
        %2873 = vmatprep.subr.mxu0 0.0
        %2874 = vmatpush1.msra.mxu0 %v2541
        %2875 = vmatprep.subr.mxu0 0.0
        %2876 = vmatpush1.msra.mxu0 %v2540
        %2877 = vmatprep.subr.mxu0 0.0
        %2878 = vmatpush1.msra.mxu0 %v2539
        %2879 = vmatprep.subr.mxu0 0.0
        %2880 = vmatpush1.msra.mxu0 %v2538
        %2881 = vmatprep.subr.mxu0 0.0
        %2882 = vmatpush1.msra.mxu0 %v2537
        %2883 = vmatprep.subr.mxu0 0.0
        %2884 = vmatpush1.msra.mxu0 %v2536
        %2885 = vmatprep.subr.mxu0 0.0
        %2886 = vmatpush1.msra.mxu0 %v2535
        %2887 = vmatprep.subr.mxu0 0.0
        %2888 = vmatpush1.msra.mxu0 %v2534
        %2889 = vmatprep.subr.mxu0 0.0
        %2890 = vmatpush1.msra.mxu0 %v2533
        %2891 = vmatprep.subr.mxu0 0.0
        %2892 = vmatpush1.msra.mxu0 %v2532
        %2893 = vmatprep.subr.mxu0 0.0
        %2894 = vmatpush1.msra.mxu0 %v2531
        %2895 = vmatprep.subr.mxu0 0.0
        %2896 = vmatpush1.msra.mxu0 %v2530
        %2897 = vmatprep.subr.mxu0 0.0
        %2898 = vmatpush1.msra.mxu0 %v2529
        %2899 = vmatprep.subr.mxu0 0.0
        %2900 = vmatpush1.msra.mxu0 %v2528
        %2901 = vmatprep.subr.mxu0 0.0
        %2902 = vmatpush1.msra.mxu0 %v2527
        %2903 = vmatprep.subr.mxu0 0.0
        %2904 = vmatpush2.msra.mxu0 %v2558
        %2905 = vmatprep.subr.mxu0 0.0
        %2906 = vmatpush2.msra.mxu0 %v2557
        %2907 = vmatprep.subr.mxu0 0.0
        %2908 = vmatpush2.msra.mxu0 %v2556
        %2909 = vmatprep.subr.mxu0 0.0
        %2910 = vmatpush2.msra.mxu0 %v2555
        %2911 = vmatprep.subr.mxu0 0.0
        %2912 = vmatpush2.msra.mxu0 %v2554
        %2913 = vmatprep.subr.mxu0 0.0
        %2914 = vmatpush2.msra.mxu0 %v2553
        %2915 = vmatprep.subr.mxu0 0.0
        %2916 = vmatpush2.msra.mxu0 %v2552
        %2917 = vmatprep.subr.mxu0 0.0
        %2918 = vmatpush2.msra.mxu0 %v2551
        %2919 = vmatprep.subr.mxu0 0.0
        %2920 = vmatpush2.msra.mxu0 %v2550
        %2921 = vmatprep.subr.mxu0 0.0
        %2922 = vmatpush2.msra.mxu0 %v2549
        %2923 = vmatprep.subr.mxu0 0.0
        %2924 = vmatpush2.msra.mxu0 %v2548
        %2925 = vmatprep.subr.mxu0 0.0
        %2926 = vmatpush2.msra.mxu0 %v2547
        %2927 = vmatprep.subr.mxu0 0.0
        %2928 = vmatpush2.msra.mxu0 %v2546
        %2929 = vmatprep.subr.mxu0 0.0
        %2930 = vmatpush2.msra.mxu0 %v2545
        %2931 = vmatprep.subr.mxu0 0.0
        %2932 = vmatpush2.msra.mxu0 %v2544
        %2933 = vmatprep.subr.mxu0 0.0
        %2934 = vmatpush2.msra.mxu0 %v2543
        %2935 = vmatprep.mubr.f32.mxu0 %v2101
        %2936 = vmatmul.mubr.f32.gmra.mxu0 %v2317
        %v2937 = vpop.f32.mrf.mxu0
        %v2938 = vadd.f32 %v2713, %v2937
        %v2939 = vpop.f32.mrf.mxu0
        %2940 = vmatprep.mubr.f32.mxu0 %v2102
        %2941 = vmatmul.mubr.f32.gmra.mxu0 %v2319
        %v2942 = vpop.f32.mrf.mxu0
        %v2943 = vadd.f32 %v2718, %v2942
        %v2944 = vpop.f32.mrf.mxu0
        %2945 = vmatprep.mubr.f32.mxu0 %v2104
        %2946 = vmatmul.mubr.f32.gmra.mxu0 %v2322
        %v2947 = vpop.f32.mrf.mxu0
        %v2948 = vadd.f32 %v2723, %v2947
        %v2949 = vpop.f32.mrf.mxu0
        %2950 = vmatprep.mubr.f32.mxu0 %v2105
        %2951 = vmatmul.mubr.f32.gmra.mxu0 %v2324
        %v2952 = vpop.f32.mrf.mxu0
        %v2953 = vadd.f32 %v2728, %v2952
        %v2954 = vpop.f32.mrf.mxu0
        %2955 = vmatprep.mubr.f32.mxu0 %v2107
        %2956 = vmatmul.mubr.f32.gmra.mxu0 %v2327
        %v2957 = vpop.f32.mrf.mxu0
        %v2958 = vadd.f32 %v2733, %v2957
        %v2959 = vpop.f32.mrf.mxu0
        %2960 = vmatprep.mubr.f32.mxu0 %v2108
        %2961 = vmatmul.mubr.f32.gmra.mxu0 %v2329
        %v2962 = vpop.f32.mrf.mxu0
        %v2963 = vadd.f32 %v2738, %v2962
        %v2964 = vpop.f32.mrf.mxu0
        %2965 = vmatprep.mubr.f32.mxu0 %v2110
        %2966 = vmatmul.mubr.f32.gmra.mxu0 %v2332
        %v2967 = vpop.f32.mrf.mxu0
        %v2968 = vadd.f32 %v2743, %v2967
        %v2969 = vpop.f32.mrf.mxu0
        %2970 = vmatprep.mubr.f32.mxu0 %v2111
        %2971 = vmatmul.mubr.f32.gmra.mxu0 %v2334
        %v2972 = vpop.f32.mrf.mxu0
        %v2973 = vadd.f32 %v2748, %v2972
        %v2974 = vpop.f32.mrf.mxu0
        %2975 = vmatprep.mubr.f32.mxu0 %v2113
        %2976 = vmatmul.mubr.f32.gmra.mxu0 %v2337
        %v2977 = vpop.f32.mrf.mxu0
        %v2978 = vadd.f32 %v2753, %v2977
        %v2979 = vpop.f32.mrf.mxu0
        %2980 = vmatprep.mubr.f32.mxu0 %v2114
        %2981 = vmatmul.mubr.f32.gmra.mxu0 %v2339
        %v2982 = vpop.f32.mrf.mxu0
        %v2983 = vadd.f32 %v2758, %v2982
        %v2984 = vpop.f32.mrf.mxu0
        %2985 = vmatprep.mubr.f32.mxu0 %v2116
        %2986 = vmatmul.mubr.f32.gmra.mxu0 %v2342
        %v2987 = vpop.f32.mrf.mxu0
        %v2988 = vadd.f32 %v2763, %v2987
        %v2989 = vpop.f32.mrf.mxu0
        %2990 = vmatprep.mubr.f32.mxu0 %v2117
        %2991 = vmatmul.mubr.f32.gmra.mxu0 %v2344
        %v2992 = vpop.f32.mrf.mxu0
        %v2993 = vadd.f32 %v2768, %v2992
        %v2994 = vpop.f32.mrf.mxu0
        %2995 = vmatprep.mubr.f32.mxu0 %v2119
        %2996 = vmatmul.mubr.f32.gmra.mxu0 %v2347
        %v2997 = vpop.f32.mrf.mxu0
        %v2998 = vadd.f32 %v2773, %v2997
        %v2999 = vpop.f32.mrf.mxu0
        %3000 = vmatprep.mubr.f32.mxu0 %v2120
        %3001 = vmatmul.mubr.f32.gmra.mxu0 %v2349
        %v3002 = vpop.f32.mrf.mxu0
        %v3003 = vadd.f32 %v2778, %v3002
        %v3004 = vpop.f32.mrf.mxu0
        %3005 = vmatprep.mubr.f32.mxu0 %v2122
        %3006 = vmatmul.mubr.f32.gmra.mxu0 %v2352
        %v3007 = vpop.f32.mrf.mxu0
        %v3008 = vadd.f32 %v2783, %v3007
        %v3009 = vpop.f32.mrf.mxu0
        %3010 = vmatprep.mubr.f32.mxu0 %v2123
        %3011 = vmatmul.mubr.f32.gmra.mxu0 %v2354
        %v3012 = vpop.f32.mrf.mxu0
        %v3013 = vadd.f32 %v2788, %v3012
        %v3014 = vpop.f32.mrf.mxu0
        %3015 = vmatprep.mubr.f32.mxu0 %v2125
        %3016 = vmatmul.mubr.f32.gmra.mxu0 %v2357
        %v3017 = vpop.f32.mrf.mxu0
        %v3018 = vadd.f32 %v2793, %v3017
        %v3019 = vpop.f32.mrf.mxu0
        %3020 = vmatprep.mubr.f32.mxu0 %v2126
        %3021 = vmatmul.mubr.f32.gmra.mxu0 %v2359
        %v3022 = vpop.f32.mrf.mxu0
        %v3023 = vadd.f32 %v2798, %v3022
        %v3024 = vpop.f32.mrf.mxu0
        %3025 = vmatprep.mubr.f32.mxu0 %v2128
        %3026 = vmatmul.mubr.f32.gmra.mxu0 %v2362
        %v3027 = vpop.f32.mrf.mxu0
        %v3028 = vadd.f32 %v2803, %v3027
        %v3029 = vpop.f32.mrf.mxu0
        %3030 = vmatprep.mubr.f32.mxu0 %v2129
        %3031 = vmatmul.mubr.f32.gmra.mxu0 %v2364
        %v3032 = vpop.f32.mrf.mxu0
        %v3033 = vadd.f32 %v2808, %v3032
        %v3034 = vpop.f32.mrf.mxu0
        %3035 = vmatprep.mubr.f32.mxu0 %v2131
        %3036 = vmatmul.mubr.f32.gmra.mxu0 %v2367
        %v3037 = vpop.f32.mrf.mxu0
        %v3038 = vadd.f32 %v2813, %v3037
        %v3039 = vpop.f32.mrf.mxu0
        %3040 = vmatprep.mubr.f32.mxu0 %v2132
        %3041 = vmatmul.mubr.f32.gmra.mxu0 %v2369
        %v3042 = vpop.f32.mrf.mxu0
        %v3043 = vadd.f32 %v2818, %v3042
        %v3044 = vpop.f32.mrf.mxu0
        %3045 = vmatprep.mubr.f32.mxu0 %v2134
        %3046 = vmatmul.mubr.f32.gmra.mxu0 %v2372
        %v3047 = vpop.f32.mrf.mxu0
        %v3048 = vadd.f32 %v2823, %v3047
        %v3049 = vpop.f32.mrf.mxu0
        %3050 = vmatprep.mubr.f32.mxu0 %v2135
        %3051 = vmatmul.mubr.f32.gmra.mxu0 %v2374
        %v3052 = vpop.f32.mrf.mxu0
        %v3053 = vadd.f32 %v2828, %v3052
        %v3054 = vpop.f32.mrf.mxu0
        %3055 = vmatprep.mubr.f32.mxu0 %v2137
        %3056 = vmatmul.mubr.f32.gmra.mxu0 %v2377
        %v3057 = vpop.f32.mrf.mxu0
        %v3058 = vadd.f32 %v2833, %v3057
        %v3059 = vpop.f32.mrf.mxu0
        %3060 = vmatprep.mubr.f32.mxu0 %v2138
        %3061 = vmatmul.mubr.f32.gmra.mxu0 %v2379
        %v3062 = vpop.f32.mrf.mxu0
        %v3063 = vadd.f32 %v2838, %v3062
        %v3064 = vpop.f32.mrf.mxu0
        %3065 = vmatprep.mubr.f32.mxu0 %v2140
        %3066 = vmatmul.mubr.f32.gmra.mxu0 %v2382
        %v3067 = vpop.f32.mrf.mxu0
        %v3068 = vadd.f32 %v2843, %v3067
        %v3069 = vpop.f32.mrf.mxu0
        %3070 = vmatprep.mubr.f32.mxu0 %v2141
        %3071 = vmatmul.mubr.f32.gmra.mxu0 %v2384
        %v3072 = vpop.f32.mrf.mxu0
        %v3073 = vadd.f32 %v2848, %v3072
        %v3074 = vpop.f32.mrf.mxu0
        %3075 = vmatprep.mubr.f32.mxu0 %v2143
        %3076 = vmatmul.mubr.f32.gmra.mxu0 %v2387
        %v3077 = vpop.f32.mrf.mxu0
        %v3078 = vadd.f32 %v2853, %v3077
        %v3079 = vpop.f32.mrf.mxu0
        %3080 = vmatprep.mubr.f32.mxu0 %v2144
        %3081 = vmatmul.mubr.f32.gmra.mxu0 %v2389
        %v3082 = vpop.f32.mrf.mxu0
        %v3083 = vadd.f32 %v2858, %v3082
        %v3084 = vpop.f32.mrf.mxu0
        %3085 = vmatprep.mubr.f32.mxu0 %v2146
        %3086 = vmatmul.mubr.f32.gmra.mxu0 %v2392
        %v3087 = vpop.f32.mrf.mxu0
        %v3088 = vadd.f32 %v2863, %v3087
        %v3089 = vpop.f32.mrf.mxu0
        %3090 = vmatprep.mubr.f32.mxu0 %v2147
        %3091 = vmatmul.mubr.f32.gmra.mxu0 %v2394
        %v3092 = vpop.f32.mrf.mxu0
        %v3093 = vadd.f32 %v2868, %v3092
        %v3094 = vpop.f32.mrf.mxu0
        %3095 = vdwg.mxu0
        %3096 = vmatprep.subr.mxu0 0.0
        %3097 = vmatpush1.msra.mxu0 %v2574
        %3098 = vmatprep.subr.mxu0 0.0
        %3099 = vmatpush1.msra.mxu0 %v2573
        %3100 = vmatprep.subr.mxu0 0.0
        %3101 = vmatpush1.msra.mxu0 %v2572
        %3102 = vmatprep.subr.mxu0 0.0
        %3103 = vmatpush1.msra.mxu0 %v2571
        %3104 = vmatprep.subr.mxu0 0.0
        %3105 = vmatpush1.msra.mxu0 %v2570
        %3106 = vmatprep.subr.mxu0 0.0
        %3107 = vmatpush1.msra.mxu0 %v2569
        %3108 = vmatprep.subr.mxu0 0.0
        %3109 = vmatpush1.msra.mxu0 %v2568
        %3110 = vmatprep.subr.mxu0 0.0
        %3111 = vmatpush1.msra.mxu0 %v2567
        %3112 = vmatprep.subr.mxu0 0.0
        %3113 = vmatpush1.msra.mxu0 %v2566
        %3114 = vmatprep.subr.mxu0 0.0
        %3115 = vmatpush1.msra.mxu0 %v2565
        %3116 = vmatprep.subr.mxu0 0.0
        %3117 = vmatpush1.msra.mxu0 %v2564
        %3118 = vmatprep.subr.mxu0 0.0
        %3119 = vmatpush1.msra.mxu0 %v2563
        %3120 = vmatprep.subr.mxu0 0.0
        %3121 = vmatpush1.msra.mxu0 %v2562
        %3122 = vmatprep.subr.mxu0 0.0
        %3123 = vmatpush1.msra.mxu0 %v2561
        %3124 = vmatprep.subr.mxu0 0.0
        %3125 = vmatpush1.msra.mxu0 %v2560
        %3126 = vmatprep.subr.mxu0 0.0
        %3127 = vmatpush1.msra.mxu0 %v2559
        %3128 = vmatprep.subr.mxu0 0.0
        %3129 = vmatpush2.msra.mxu0 %v2590
        %3130 = vmatprep.subr.mxu0 0.0
        %3131 = vmatpush2.msra.mxu0 %v2589
        %3132 = vmatprep.subr.mxu0 0.0
        %3133 = vmatpush2.msra.mxu0 %v2588
        %3134 = vmatprep.subr.mxu0 0.0
        %3135 = vmatpush2.msra.mxu0 %v2587
        %3136 = vmatprep.subr.mxu0 0.0
        %3137 = vmatpush2.msra.mxu0 %v2586
        %3138 = vmatprep.subr.mxu0 0.0
        %3139 = vmatpush2.msra.mxu0 %v2585
        %3140 = vmatprep.subr.mxu0 0.0
        %3141 = vmatpush2.msra.mxu0 %v2584
        %3142 = vmatprep.subr.mxu0 0.0
        %3143 = vmatpush2.msra.mxu0 %v2583
        %3144 = vmatprep.subr.mxu0 0.0
        %3145 = vmatpush2.msra.mxu0 %v2582
        %3146 = vmatprep.subr.mxu0 0.0
        %3147 = vmatpush2.msra.mxu0 %v2581
        %3148 = vmatprep.subr.mxu0 0.0
        %3149 = vmatpush2.msra.mxu0 %v2580
        %3150 = vmatprep.subr.mxu0 0.0
        %3151 = vmatpush2.msra.mxu0 %v2579
        %3152 = vmatprep.subr.mxu0 0.0
        %3153 = vmatpush2.msra.mxu0 %v2578
        %3154 = vmatprep.subr.mxu0 0.0
        %3155 = vmatpush2.msra.mxu0 %v2577
        %3156 = vmatprep.subr.mxu0 0.0
        %3157 = vmatpush2.msra.mxu0 %v2576
        %3158 = vmatprep.subr.mxu0 0.0
        %3159 = vmatpush2.msra.mxu0 %v2575
        %3160 = vmatprep.mubr.f32.mxu0 %v2327
        %3161 = vmatmul.mubr.f32.gmra.mxu0 %v2215
        %v3162 = vpop.f32.mrf.mxu0
        %v3163 = vadd.f32 %v2938, %v3162
        %v3164 = vpop.f32.mrf.mxu0
        %3165 = vmatprep.mubr.f32.mxu0 %v2329
        %3166 = vmatmul.mubr.f32.gmra.mxu0 %v2217
        %v3167 = vpop.f32.mrf.mxu0
        %v3168 = vadd.f32 %v2943, %v3167
        %v3169 = vpop.f32.mrf.mxu0
        %3170 = vmatprep.mubr.f32.mxu0 %v2332
        %3171 = vmatmul.mubr.f32.gmra.mxu0 %v2220
        %v3172 = vpop.f32.mrf.mxu0
        %v3173 = vadd.f32 %v2948, %v3172
        %v3174 = vpop.f32.mrf.mxu0
        %3175 = vmatprep.mubr.f32.mxu0 %v2334
        %3176 = vmatmul.mubr.f32.gmra.mxu0 %v2222
        %v3177 = vpop.f32.mrf.mxu0
        %v3178 = vadd.f32 %v2953, %v3177
        %v3179 = vpop.f32.mrf.mxu0
        %3180 = vmatprep.mubr.f32.mxu0 %v2337
        %3181 = vmatmul.mubr.f32.gmra.mxu0 %v2225
        %v3182 = vpop.f32.mrf.mxu0
        %v3183 = vadd.f32 %v2958, %v3182
        %v3184 = vpop.f32.mrf.mxu0
        %3185 = vmatprep.mubr.f32.mxu0 %v2339
        %3186 = vmatmul.mubr.f32.gmra.mxu0 %v2227
        %v3187 = vpop.f32.mrf.mxu0
        %v3188 = vadd.f32 %v2963, %v3187
        %v3189 = vpop.f32.mrf.mxu0
        %3190 = vmatprep.mubr.f32.mxu0 %v2342
        %3191 = vmatmul.mubr.f32.gmra.mxu0 %v2230
        %v3192 = vpop.f32.mrf.mxu0
        %v3193 = vadd.f32 %v2968, %v3192
        %v3194 = vpop.f32.mrf.mxu0
        %3195 = vmatprep.mubr.f32.mxu0 %v2344
        %3196 = vmatmul.mubr.f32.gmra.mxu0 %v2232
        %v3197 = vpop.f32.mrf.mxu0
        %v3198 = vadd.f32 %v2973, %v3197
        %v3199 = vpop.f32.mrf.mxu0
        %3200 = vmatprep.mubr.f32.mxu0 %v2347
        %3201 = vmatmul.mubr.f32.gmra.mxu0 %v2235
        %v3202 = vpop.f32.mrf.mxu0
        %v3203 = vadd.f32 %v2978, %v3202
        %v3204 = vpop.f32.mrf.mxu0
        %3205 = vmatprep.mubr.f32.mxu0 %v2349
        %3206 = vmatmul.mubr.f32.gmra.mxu0 %v2237
        %v3207 = vpop.f32.mrf.mxu0
        %v3208 = vadd.f32 %v2983, %v3207
        %v3209 = vpop.f32.mrf.mxu0
        %3210 = vmatprep.mubr.f32.mxu0 %v2352
        %3211 = vmatmul.mubr.f32.gmra.mxu0 %v2240
        %v3212 = vpop.f32.mrf.mxu0
        %v3213 = vadd.f32 %v2988, %v3212
        %v3214 = vpop.f32.mrf.mxu0
        %3215 = vmatprep.mubr.f32.mxu0 %v2354
        %3216 = vmatmul.mubr.f32.gmra.mxu0 %v2242
        %v3217 = vpop.f32.mrf.mxu0
        %v3218 = vadd.f32 %v2993, %v3217
        %v3219 = vpop.f32.mrf.mxu0
        %3220 = vmatprep.mubr.f32.mxu0 %v2357
        %3221 = vmatmul.mubr.f32.gmra.mxu0 %v2245
        %v3222 = vpop.f32.mrf.mxu0
        %v3223 = vadd.f32 %v2998, %v3222
        %v3224 = vpop.f32.mrf.mxu0
        %3225 = vmatprep.mubr.f32.mxu0 %v2359
        %3226 = vmatmul.mubr.f32.gmra.mxu0 %v2247
        %v3227 = vpop.f32.mrf.mxu0
        %v3228 = vadd.f32 %v3003, %v3227
        %v3229 = vpop.f32.mrf.mxu0
        %3230 = vmatprep.mubr.f32.mxu0 %v2362
        %3231 = vmatmul.mubr.f32.gmra.mxu0 %v2250
        %v3232 = vpop.f32.mrf.mxu0
        %v3233 = vadd.f32 %v3008, %v3232
        %v3234 = vpop.f32.mrf.mxu0
        %3235 = vmatprep.mubr.f32.mxu0 %v2364
        %3236 = vmatmul.mubr.f32.gmra.mxu0 %v2252
        %v3237 = vpop.f32.mrf.mxu0
        %v3238 = vadd.f32 %v3013, %v3237
        %v3239 = vpop.f32.mrf.mxu0
        %3240 = vmatprep.mubr.f32.mxu0 %v2367
        %3241 = vmatmul.mubr.f32.gmra.mxu0 %v2255
        %v3242 = vpop.f32.mrf.mxu0
        %v3243 = vadd.f32 %v3018, %v3242
        %v3244 = vpop.f32.mrf.mxu0
        %3245 = vmatprep.mubr.f32.mxu0 %v2369
        %3246 = vmatmul.mubr.f32.gmra.mxu0 %v2257
        %v3247 = vpop.f32.mrf.mxu0
        %v3248 = vadd.f32 %v3023, %v3247
        %v3249 = vpop.f32.mrf.mxu0
        %3250 = vmatprep.mubr.f32.mxu0 %v2372
        %3251 = vmatmul.mubr.f32.gmra.mxu0 %v2260
        %v3252 = vpop.f32.mrf.mxu0
        %v3253 = vadd.f32 %v3028, %v3252
        %v3254 = vpop.f32.mrf.mxu0
        %3255 = vmatprep.mubr.f32.mxu0 %v2374
        %3256 = vmatmul.mubr.f32.gmra.mxu0 %v2262
        %v3257 = vpop.f32.mrf.mxu0
        %v3258 = vadd.f32 %v3033, %v3257
        %v3259 = vpop.f32.mrf.mxu0
        %3260 = vmatprep.mubr.f32.mxu0 %v2377
        %3261 = vmatmul.mubr.f32.gmra.mxu0 %v2265
        %v3262 = vpop.f32.mrf.mxu0
        %v3263 = vadd.f32 %v3038, %v3262
        %v3264 = vpop.f32.mrf.mxu0
        %3265 = vmatprep.mubr.f32.mxu0 %v2379
        %3266 = vmatmul.mubr.f32.gmra.mxu0 %v2267
        %v3267 = vpop.f32.mrf.mxu0
        %v3268 = vadd.f32 %v3043, %v3267
        %v3269 = vpop.f32.mrf.mxu0
        %3270 = vmatprep.mubr.f32.mxu0 %v2382
        %3271 = vmatmul.mubr.f32.gmra.mxu0 %v2270
        %v3272 = vpop.f32.mrf.mxu0
        %v3273 = vadd.f32 %v3048, %v3272
        %v3274 = vpop.f32.mrf.mxu0
        %3275 = vmatprep.mubr.f32.mxu0 %v2384
        %3276 = vmatmul.mubr.f32.gmra.mxu0 %v2272
        %v3277 = vpop.f32.mrf.mxu0
        %v3278 = vadd.f32 %v3053, %v3277
        %v3279 = vpop.f32.mrf.mxu0
        %3280 = vmatprep.mubr.f32.mxu0 %v2387
        %3281 = vmatmul.mubr.f32.gmra.mxu0 %v2275
        %v3282 = vpop.f32.mrf.mxu0
        %v3283 = vadd.f32 %v3058, %v3282
        %v3284 = vpop.f32.mrf.mxu0
        %3285 = vmatprep.mubr.f32.mxu0 %v2389
        %3286 = vmatmul.mubr.f32.gmra.mxu0 %v2277
        %v3287 = vpop.f32.mrf.mxu0
        %v3288 = vadd.f32 %v3063, %v3287
        %v3289 = vpop.f32.mrf.mxu0
        %3290 = vmatprep.mubr.f32.mxu0 %v2392
        %3291 = vmatmul.mubr.f32.gmra.mxu0 %v2280
        %v3292 = vpop.f32.mrf.mxu0
        %v3293 = vadd.f32 %v3068, %v3292
        %v3294 = vpop.f32.mrf.mxu0
        %3295 = vmatprep.mubr.f32.mxu0 %v2394
        %3296 = vmatmul.mubr.f32.gmra.mxu0 %v2282
        %v3297 = vpop.f32.mrf.mxu0
        %v3298 = vadd.f32 %v3073, %v3297
        %v3299 = vpop.f32.mrf.mxu0
        %3300 = vmatprep.mubr.f32.mxu0 %v2449
        %3301 = vmatmul.mubr.f32.gmra.mxu0 %v2435
        %v3302 = vpop.f32.mrf.mxu0
        %v3303 = vadd.f32 %v3078, %v3302
        %v3304 = vpop.f32.mrf.mxu0
        %3305 = vmatprep.mubr.f32.mxu0 %v2451
        %3306 = vmatmul.mubr.f32.gmra.mxu0 %v2437
        %v3307 = vpop.f32.mrf.mxu0
        %v3308 = vadd.f32 %v3083, %v3307
        %v3309 = vpop.f32.mrf.mxu0
        %3310 = vmatprep.mubr.f32.mxu0 %v2454
        %3311 = vmatmul.mubr.f32.gmra.mxu0 %v2440
        %v3312 = vpop.f32.mrf.mxu0
        %v3313 = vadd.f32 %v3088, %v3312
        %v3314 = vpop.f32.mrf.mxu0
        %3315 = vmatprep.mubr.f32.mxu0 %v2456
        %3316 = vmatmul.mubr.f32.gmra.mxu0 %v2442
        %v3317 = vpop.f32.mrf.mxu0
        %v3318 = vadd.f32 %v3093, %v3317
        %v3319 = vpop.f32.mrf.mxu0
        %3320 = vdwg.mxu0
        %3321 = vmatprep.subr.mxu0 0.0
        %3322 = vmatpush1.msra.mxu0 %v2606
        %3323 = vmatprep.subr.mxu0 0.0
        %3324 = vmatpush1.msra.mxu0 %v2605
        %3325 = vmatprep.subr.mxu0 0.0
        %3326 = vmatpush1.msra.mxu0 %v2604
        %3327 = vmatprep.subr.mxu0 0.0
        %3328 = vmatpush1.msra.mxu0 %v2603
        %3329 = vmatprep.subr.mxu0 0.0
        %3330 = vmatpush1.msra.mxu0 %v2602
        %3331 = vmatprep.subr.mxu0 0.0
        %3332 = vmatpush1.msra.mxu0 %v2601
        %3333 = vmatprep.subr.mxu0 0.0
        %3334 = vmatpush1.msra.mxu0 %v2600
        %3335 = vmatprep.subr.mxu0 0.0
        %3336 = vmatpush1.msra.mxu0 %v2599
        %3337 = vmatprep.subr.mxu0 0.0
        %3338 = vmatpush1.msra.mxu0 %v2598
        %3339 = vmatprep.subr.mxu0 0.0
        %3340 = vmatpush1.msra.mxu0 %v2597
        %3341 = vmatprep.subr.mxu0 0.0
        %3342 = vmatpush1.msra.mxu0 %v2596
        %3343 = vmatprep.subr.mxu0 0.0
        %3344 = vmatpush1.msra.mxu0 %v2595
        %3345 = vmatprep.subr.mxu0 0.0
        %3346 = vmatpush1.msra.mxu0 %v2594
        %3347 = vmatprep.subr.mxu0 0.0
        %3348 = vmatpush1.msra.mxu0 %v2593
        %3349 = vmatprep.subr.mxu0 0.0
        %3350 = vmatpush1.msra.mxu0 %v2592
        %3351 = vmatprep.subr.mxu0 0.0
        %3352 = vmatpush1.msra.mxu0 %v2591
        %3353 = vmatprep.subr.mxu0 0.0
        %3354 = vmatpush2.msra.mxu0 %v2622
        %3355 = vmatprep.subr.mxu0 0.0
        %3356 = vmatpush2.msra.mxu0 %v2621
        %3357 = vmatprep.subr.mxu0 0.0
        %3358 = vmatpush2.msra.mxu0 %v2620
        %3359 = vmatprep.subr.mxu0 0.0
        %3360 = vmatpush2.msra.mxu0 %v2619
        %3361 = vmatprep.subr.mxu0 0.0
        %3362 = vmatpush2.msra.mxu0 %v2618
        %3363 = vmatprep.subr.mxu0 0.0
        %3364 = vmatpush2.msra.mxu0 %v2617
        %3365 = vmatprep.subr.mxu0 0.0
        %3366 = vmatpush2.msra.mxu0 %v2616
        %3367 = vmatprep.subr.mxu0 0.0
        %3368 = vmatpush2.msra.mxu0 %v2615
        %3369 = vmatprep.subr.mxu0 0.0
        %3370 = vmatpush2.msra.mxu0 %v2614
        %3371 = vmatprep.subr.mxu0 0.0
        %3372 = vmatpush2.msra.mxu0 %v2613
        %3373 = vmatprep.subr.mxu0 0.0
        %3374 = vmatpush2.msra.mxu0 %v2612
        %3375 = vmatprep.subr.mxu0 0.0
        %3376 = vmatpush2.msra.mxu0 %v2611
        %3377 = vmatprep.subr.mxu0 0.0
        %3378 = vmatpush2.msra.mxu0 %v2610
        %3379 = vmatprep.subr.mxu0 0.0
        %3380 = vmatpush2.msra.mxu0 %v2609
        %3381 = vmatprep.subr.mxu0 0.0
        %3382 = vmatpush2.msra.mxu0 %v2608
        %3383 = vmatprep.subr.mxu0 0.0
        %3384 = vmatpush2.msra.mxu0 %v2607
        %3385 = vmatprep.mubr.f32.mxu0 %v2225
        %3386 = vmatmul.mubr.f32.gmra.mxu0 %v2107
        %v3387 = vpop.f32.mrf.mxu0
        %v3388 = vadd.f32 %v3163, %v3387
        %v3389 = vpop.f32.mrf.mxu0
        %3390 = vmatprep.mubr.f32.mxu0 %v2227
        %3391 = vmatmul.mubr.f32.gmra.mxu0 %v2108
        %v3392 = vpop.f32.mrf.mxu0
        %v3393 = vadd.f32 %v3168, %v3392
        %v3394 = vpop.f32.mrf.mxu0
        %3395 = vmatprep.mubr.f32.mxu0 %v2230
        %3396 = vmatmul.mubr.f32.gmra.mxu0 %v2110
        %v3397 = vpop.f32.mrf.mxu0
        %v3398 = vadd.f32 %v3173, %v3397
        %v3399 = vpop.f32.mrf.mxu0
        %3400 = vmatprep.mubr.f32.mxu0 %v2232
        %3401 = vmatmul.mubr.f32.gmra.mxu0 %v2111
        %v3402 = vpop.f32.mrf.mxu0
        %v3403 = vadd.f32 %v3178, %v3402
        %v3404 = vpop.f32.mrf.mxu0
        %3405 = vmatprep.mubr.f32.mxu0 %v2235
        %3406 = vmatmul.mubr.f32.gmra.mxu0 %v2113
        %v3407 = vpop.f32.mrf.mxu0
        %v3408 = vadd.f32 %v3183, %v3407
        %v3409 = vpop.f32.mrf.mxu0
        %3410 = vmatprep.mubr.f32.mxu0 %v2237
        %3411 = vmatmul.mubr.f32.gmra.mxu0 %v2114
        %v3412 = vpop.f32.mrf.mxu0
        %v3413 = vadd.f32 %v3188, %v3412
        %v3414 = vpop.f32.mrf.mxu0
        %3415 = vmatprep.mubr.f32.mxu0 %v2240
        %3416 = vmatmul.mubr.f32.gmra.mxu0 %v2116
        %v3417 = vpop.f32.mrf.mxu0
        %v3418 = vadd.f32 %v3193, %v3417
        %v3419 = vpop.f32.mrf.mxu0
        %3420 = vmatprep.mubr.f32.mxu0 %v2242
        %3421 = vmatmul.mubr.f32.gmra.mxu0 %v2117
        %v3422 = vpop.f32.mrf.mxu0
        %v3423 = vadd.f32 %v3198, %v3422
        %v3424 = vpop.f32.mrf.mxu0
        %3425 = vmatprep.mubr.f32.mxu0 %v2245
        %3426 = vmatmul.mubr.f32.gmra.mxu0 %v2119
        %v3427 = vpop.f32.mrf.mxu0
        %v3428 = vadd.f32 %v3203, %v3427
        %v3429 = vpop.f32.mrf.mxu0
        %3430 = vmatprep.mubr.f32.mxu0 %v2247
        %3431 = vmatmul.mubr.f32.gmra.mxu0 %v2120
        %v3432 = vpop.f32.mrf.mxu0
        %v3433 = vadd.f32 %v3208, %v3432
        %v3434 = vpop.f32.mrf.mxu0
        %3435 = vmatprep.mubr.f32.mxu0 %v2250
        %3436 = vmatmul.mubr.f32.gmra.mxu0 %v2122
        %v3437 = vpop.f32.mrf.mxu0
        %v3438 = vadd.f32 %v3213, %v3437
        %v3439 = vpop.f32.mrf.mxu0
        %3440 = vmatprep.mubr.f32.mxu0 %v2252
        %3441 = vmatmul.mubr.f32.gmra.mxu0 %v2123
        %v3442 = vpop.f32.mrf.mxu0
        %v3443 = vadd.f32 %v3218, %v3442
        %v3444 = vpop.f32.mrf.mxu0
        %3445 = vmatprep.mubr.f32.mxu0 %v2255
        %3446 = vmatmul.mubr.f32.gmra.mxu0 %v2125
        %v3447 = vpop.f32.mrf.mxu0
        %v3448 = vadd.f32 %v3223, %v3447
        %v3449 = vpop.f32.mrf.mxu0
        %3450 = vmatprep.mubr.f32.mxu0 %v2257
        %3451 = vmatmul.mubr.f32.gmra.mxu0 %v2126
        %v3452 = vpop.f32.mrf.mxu0
        %v3453 = vadd.f32 %v3228, %v3452
        %v3454 = vpop.f32.mrf.mxu0
        %3455 = vmatprep.mubr.f32.mxu0 %v2260
        %3456 = vmatmul.mubr.f32.gmra.mxu0 %v2128
        %v3457 = vpop.f32.mrf.mxu0
        %v3458 = vadd.f32 %v3233, %v3457
        %v3459 = vpop.f32.mrf.mxu0
        %3460 = vmatprep.mubr.f32.mxu0 %v2262
        %3461 = vmatmul.mubr.f32.gmra.mxu0 %v2129
        %v3462 = vpop.f32.mrf.mxu0
        %v3463 = vadd.f32 %v3238, %v3462
        %v3464 = vpop.f32.mrf.mxu0
        %3465 = vmatprep.mubr.f32.mxu0 %v2265
        %3466 = vmatmul.mubr.f32.gmra.mxu0 %v2131
        %v3467 = vpop.f32.mrf.mxu0
        %v3468 = vadd.f32 %v3243, %v3467
        %v3469 = vpop.f32.mrf.mxu0
        %3470 = vmatprep.mubr.f32.mxu0 %v2267
        %3471 = vmatmul.mubr.f32.gmra.mxu0 %v2132
        %v3472 = vpop.f32.mrf.mxu0
        %v3473 = vadd.f32 %v3248, %v3472
        %v3474 = vpop.f32.mrf.mxu0
        %3475 = vmatprep.mubr.f32.mxu0 %v2270
        %3476 = vmatmul.mubr.f32.gmra.mxu0 %v2134
        %v3477 = vpop.f32.mrf.mxu0
        %v3478 = vadd.f32 %v3253, %v3477
        %v3479 = vpop.f32.mrf.mxu0
        %3480 = vmatprep.mubr.f32.mxu0 %v2272
        %3481 = vmatmul.mubr.f32.gmra.mxu0 %v2135
        %v3482 = vpop.f32.mrf.mxu0
        %v3483 = vadd.f32 %v3258, %v3482
        %v3484 = vpop.f32.mrf.mxu0
        %3485 = vmatprep.mubr.f32.mxu0 %v2275
        %3486 = vmatmul.mubr.f32.gmra.mxu0 %v2137
        %v3487 = vpop.f32.mrf.mxu0
        %v3488 = vadd.f32 %v3263, %v3487
        %v3489 = vpop.f32.mrf.mxu0
        %3490 = vmatprep.mubr.f32.mxu0 %v2277
        %3491 = vmatmul.mubr.f32.gmra.mxu0 %v2138
        %v3492 = vpop.f32.mrf.mxu0
        %v3493 = vadd.f32 %v3268, %v3492
        %v3494 = vpop.f32.mrf.mxu0
        %3495 = vmatprep.mubr.f32.mxu0 %v2280
        %3496 = vmatmul.mubr.f32.gmra.mxu0 %v2140
        %v3497 = vpop.f32.mrf.mxu0
        %v3498 = vadd.f32 %v3273, %v3497
        %v3499 = vpop.f32.mrf.mxu0
        %3500 = vmatprep.mubr.f32.mxu0 %v2282
        %3501 = vmatmul.mubr.f32.gmra.mxu0 %v2141
        %v3502 = vpop.f32.mrf.mxu0
        %v3503 = vadd.f32 %v3278, %v3502
        %v3504 = vpop.f32.mrf.mxu0
        %3505 = vmatprep.mubr.f32.mxu0 %v2435
        %3506 = vmatmul.mubr.f32.gmra.mxu0 %v2143
        %v3507 = vpop.f32.mrf.mxu0
        %v3508 = vadd.f32 %v3283, %v3507
        %v3509 = vpop.f32.mrf.mxu0
        %3510 = vmatprep.mubr.f32.mxu0 %v2437
        %3511 = vmatmul.mubr.f32.gmra.mxu0 %v2144
        %v3512 = vpop.f32.mrf.mxu0
        %v3513 = vadd.f32 %v3288, %v3512
        %v3514 = vpop.f32.mrf.mxu0
        %3515 = vmatprep.mubr.f32.mxu0 %v2440
        %3516 = vmatmul.mubr.f32.gmra.mxu0 %v2146
        %v3517 = vpop.f32.mrf.mxu0
        %v3518 = vadd.f32 %v3293, %v3517
        %v3519 = vpop.f32.mrf.mxu0
        %3520 = vmatprep.mubr.f32.mxu0 %v2442
        %3521 = vmatmul.mubr.f32.gmra.mxu0 %v2147
        %v3522 = vpop.f32.mrf.mxu0
        %v3523 = vadd.f32 %v3298, %v3522
        %v3524 = vpop.f32.mrf.mxu0
        %3525 = vmatprep.mubr.f32.mxu0 %v2469
        %3526 = vmatmul.mubr.f32.gmra.mxu0 %v2149
        %v3527 = vpop.f32.mrf.mxu0
        %v3528 = vadd.f32 %v3303, %v3527
        %v3529 = vpop.f32.mrf.mxu0
        %3530 = vmatprep.mubr.f32.mxu0 %v2471
        %3531 = vmatmul.mubr.f32.gmra.mxu0 %v2150
        %v3532 = vpop.f32.mrf.mxu0
        %v3533 = vadd.f32 %v3308, %v3532
        %v3534 = vpop.f32.mrf.mxu0
        %3535 = vmatprep.mubr.f32.mxu0 %v2474
        %3536 = vmatmul.mubr.f32.gmra.mxu0 %v2152
        %v3537 = vpop.f32.mrf.mxu0
        %v3538 = vadd.f32 %v3313, %v3537
        %v3539 = vpop.f32.mrf.mxu0
        %3540 = vmatprep.mubr.f32.mxu0 %v2476
        %3541 = vmatmul.mubr.f32.gmra.mxu0 %v2153
        %v3542 = vpop.f32.mrf.mxu0
        %v3543 = vadd.f32 %v3318, %v3542
        %v3544 = vpop.f32.mrf.mxu0
        %3545 = vdwg.mxu0
        %3546 = vmatprep.subr.mxu0 0.0
        %3547 = vmatpush1.msra.mxu0 %v2638
        %3548 = vmatprep.subr.mxu0 0.0
        %3549 = vmatpush1.msra.mxu0 %v2637
        %3550 = vmatprep.subr.mxu0 0.0
        %3551 = vmatpush1.msra.mxu0 %v2636
        %3552 = vmatprep.subr.mxu0 0.0
        %3553 = vmatpush1.msra.mxu0 %v2635
        %3554 = vmatprep.subr.mxu0 0.0
        %3555 = vmatpush1.msra.mxu0 %v2634
        %3556 = vmatprep.subr.mxu0 0.0
        %3557 = vmatpush1.msra.mxu0 %v2633
        %3558 = vmatprep.subr.mxu0 0.0
        %3559 = vmatpush1.msra.mxu0 %v2632
        %3560 = vmatprep.subr.mxu0 0.0
        %3561 = vmatpush1.msra.mxu0 %v2631
        %3562 = vmatprep.subr.mxu0 0.0
        %3563 = vmatpush1.msra.mxu0 %v2630
        %3564 = vmatprep.subr.mxu0 0.0
        %3565 = vmatpush1.msra.mxu0 %v2629
        %3566 = vmatprep.subr.mxu0 0.0
        %3567 = vmatpush1.msra.mxu0 %v2628
        %3568 = vmatprep.subr.mxu0 0.0
        %3569 = vmatpush1.msra.mxu0 %v2627
        %3570 = vmatprep.subr.mxu0 0.0
        %3571 = vmatpush1.msra.mxu0 %v2626
        %3572 = vmatprep.subr.mxu0 0.0
        %3573 = vmatpush1.msra.mxu0 %v2625
        %3574 = vmatprep.subr.mxu0 0.0
        %3575 = vmatpush1.msra.mxu0 %v2624
        %3576 = vmatprep.subr.mxu0 0.0
        %3577 = vmatpush1.msra.mxu0 %v2623
        %3578 = vmatprep.subr.mxu0 0.0
        %3579 = vmatpush2.msra.mxu0 0.0
        %3580 = vmatprep.subr.mxu0 0.0
        %3581 = vmatpush2.msra.mxu0 0.0
        %3582 = vmatprep.subr.mxu0 0.0
        %3583 = vmatpush2.msra.mxu0 0.0
        %3584 = vmatprep.subr.mxu0 0.0
        %3585 = vmatpush2.msra.mxu0 0.0
        %3586 = vmatprep.subr.mxu0 0.0
        %3587 = vmatpush2.msra.mxu0 0.0
        %3588 = vmatprep.subr.mxu0 0.0
        %3589 = vmatpush2.msra.mxu0 0.0
        %3590 = vmatprep.subr.mxu0 0.0
        %3591 = vmatpush2.msra.mxu0 0.0
        %3592 = vmatprep.subr.mxu0 0.0
        %3593 = vmatpush2.msra.mxu0 0.0
        %3594 = vmatprep.subr.mxu0 0.0
        %3595 = vmatpush2.msra.mxu0 0.0
        %3596 = vmatprep.subr.mxu0 0.0
        %3597 = vmatpush2.msra.mxu0 0.0
        %3598 = vmatprep.subr.mxu0 0.0
        %3599 = vmatpush2.msra.mxu0 0.0
        %3600 = vmatprep.subr.mxu0 0.0
        %3601 = vmatpush2.msra.mxu0 0.0
        %3602 = vmatprep.subr.mxu0 0.0
        %3603 = vmatpush2.msra.mxu0 0.0
        %3604 = vmatprep.subr.mxu0 0.0
        %3605 = vmatpush2.msra.mxu0 0.0
        %3606 = vmatprep.subr.mxu0 0.0
        %3607 = vmatpush2.msra.mxu0 0.0
        %3608 = vmatprep.subr.mxu0 0.0
        %3609 = vmatpush2.msra.mxu0 0.0
        %3610 = vmatprep.mubr.f32.mxu0 0.0
        %3611 = vmatmul.mubr.f32.gmra.mxu0 %v2337
        %v3612 = vpop.f32.mrf.mxu0
        %v3613 = vadd.f32 %v3388, %v3612
        %v3614 = vpop.f32.mrf.mxu0
        %3615 = vmatprep.mubr.f32.mxu0 0.0
        %3616 = vmatmul.mubr.f32.gmra.mxu0 %v2339
        %v3617 = vpop.f32.mrf.mxu0
        %v3618 = vadd.f32 %v3393, %v3617
        %v3619 = vpop.f32.mrf.mxu0
        %3620 = vmatprep.mubr.f32.mxu0 0.0
        %3621 = vmatmul.mubr.f32.gmra.mxu0 %v2342
        %v3622 = vpop.f32.mrf.mxu0
        %v3623 = vadd.f32 %v3398, %v3622
        %v3624 = vpop.f32.mrf.mxu0
        %3625 = vmatprep.mubr.f32.mxu0 0.0
        %3626 = vmatmul.mubr.f32.gmra.mxu0 %v2344
        %v3627 = vpop.f32.mrf.mxu0
        %v3628 = vadd.f32 %v3403, %v3627
        %v3629 = vpop.f32.mrf.mxu0
        %3630 = vmatprep.mubr.f32.mxu0 0.0
        %3631 = vmatmul.mubr.f32.gmra.mxu0 %v2347
        %v3632 = vpop.f32.mrf.mxu0
        %v3633 = vadd.f32 %v3408, %v3632
        %v3634 = vpop.f32.mrf.mxu0
        %3635 = vmatprep.mubr.f32.mxu0 0.0
        %3636 = vmatmul.mubr.f32.gmra.mxu0 %v2349
        %v3637 = vpop.f32.mrf.mxu0
        %v3638 = vadd.f32 %v3413, %v3637
        %v3639 = vpop.f32.mrf.mxu0
        %3640 = vmatprep.mubr.f32.mxu0 0.0
        %3641 = vmatmul.mubr.f32.gmra.mxu0 %v2352
        %v3642 = vpop.f32.mrf.mxu0
        %v3643 = vadd.f32 %v3418, %v3642
        %v3644 = vpop.f32.mrf.mxu0
        %3645 = vmatprep.mubr.f32.mxu0 0.0
        %3646 = vmatmul.mubr.f32.gmra.mxu0 %v2354
        %v3647 = vpop.f32.mrf.mxu0
        %v3648 = vadd.f32 %v3423, %v3647
        %v3649 = vpop.f32.mrf.mxu0
        %3650 = vmatprep.mubr.f32.mxu0 0.0
        %3651 = vmatmul.mubr.f32.gmra.mxu0 %v2357
        %v3652 = vpop.f32.mrf.mxu0
        %v3653 = vadd.f32 %v3428, %v3652
        %v3654 = vpop.f32.mrf.mxu0
        %3655 = vmatprep.mubr.f32.mxu0 0.0
        %3656 = vmatmul.mubr.f32.gmra.mxu0 %v2359
        %v3657 = vpop.f32.mrf.mxu0
        %v3658 = vadd.f32 %v3433, %v3657
        %v3659 = vpop.f32.mrf.mxu0
        %3660 = vmatprep.mubr.f32.mxu0 0.0
        %3661 = vmatmul.mubr.f32.gmra.mxu0 %v2362
        %v3662 = vpop.f32.mrf.mxu0
        %v3663 = vadd.f32 %v3438, %v3662
        %v3664 = vpop.f32.mrf.mxu0
        %3665 = vmatprep.mubr.f32.mxu0 0.0
        %3666 = vmatmul.mubr.f32.gmra.mxu0 %v2364
        %v3667 = vpop.f32.mrf.mxu0
        %v3668 = vadd.f32 %v3443, %v3667
        %v3669 = vpop.f32.mrf.mxu0
        %3670 = vmatprep.mubr.f32.mxu0 0.0
        %3671 = vmatmul.mubr.f32.gmra.mxu0 %v2367
        %v3672 = vpop.f32.mrf.mxu0
        %v3673 = vadd.f32 %v3448, %v3672
        %v3674 = vpop.f32.mrf.mxu0
        %3675 = vmatprep.mubr.f32.mxu0 0.0
        %3676 = vmatmul.mubr.f32.gmra.mxu0 %v2369
        %v3677 = vpop.f32.mrf.mxu0
        %v3678 = vadd.f32 %v3453, %v3677
        %v3679 = vpop.f32.mrf.mxu0
        %3680 = vmatprep.mubr.f32.mxu0 0.0
        %3681 = vmatmul.mubr.f32.gmra.mxu0 %v2372
        %v3682 = vpop.f32.mrf.mxu0
        %v3683 = vadd.f32 %v3458, %v3682
        %v3684 = vpop.f32.mrf.mxu0
        %3685 = vmatprep.mubr.f32.mxu0 0.0
        %3686 = vmatmul.mubr.f32.gmra.mxu0 %v2374
        %v3687 = vpop.f32.mrf.mxu0
        %v3688 = vadd.f32 %v3463, %v3687
        %v3689 = vpop.f32.mrf.mxu0
        %3690 = vmatprep.mubr.f32.mxu0 0.0
        %3691 = vmatmul.mubr.f32.gmra.mxu0 %v2377
        %v3692 = vpop.f32.mrf.mxu0
        %v3693 = vadd.f32 %v3468, %v3692
        %v3694 = vpop.f32.mrf.mxu0
        %3695 = vmatprep.mubr.f32.mxu0 0.0
        %3696 = vmatmul.mubr.f32.gmra.mxu0 %v2379
        %v3697 = vpop.f32.mrf.mxu0
        %v3698 = vadd.f32 %v3473, %v3697
        %v3699 = vpop.f32.mrf.mxu0
        %3700 = vmatprep.mubr.f32.mxu0 0.0
        %3701 = vmatmul.mubr.f32.gmra.mxu0 %v2382
        %v3702 = vpop.f32.mrf.mxu0
        %v3703 = vadd.f32 %v3478, %v3702
        %v3704 = vpop.f32.mrf.mxu0
        %3705 = vmatprep.mubr.f32.mxu0 0.0
        %3706 = vmatmul.mubr.f32.gmra.mxu0 %v2384
        %v3707 = vpop.f32.mrf.mxu0
        %v3708 = vadd.f32 %v3483, %v3707
        %v3709 = vpop.f32.mrf.mxu0
        %3710 = vmatprep.mubr.f32.mxu0 0.0
        %3711 = vmatmul.mubr.f32.gmra.mxu0 %v2387
        %v3712 = vpop.f32.mrf.mxu0
        %v3713 = vadd.f32 %v3488, %v3712
        %v3714 = vpop.f32.mrf.mxu0
        %3715 = vmatprep.mubr.f32.mxu0 0.0
        %3716 = vmatmul.mubr.f32.gmra.mxu0 %v2389
        %v3717 = vpop.f32.mrf.mxu0
        %v3718 = vadd.f32 %v3493, %v3717
        %v3719 = vpop.f32.mrf.mxu0
        %3720 = vmatprep.mubr.f32.mxu0 0.0
        %3721 = vmatmul.mubr.f32.gmra.mxu0 %v2392
        %v3722 = vpop.f32.mrf.mxu0
        %v3723 = vadd.f32 %v3498, %v3722
        %v3724 = vpop.f32.mrf.mxu0
        %3725 = vmatprep.mubr.f32.mxu0 0.0
        %3726 = vmatmul.mubr.f32.gmra.mxu0 %v2394
        %v3727 = vpop.f32.mrf.mxu0
        %v3728 = vadd.f32 %v3503, %v3727
        %v3729 = vpop.f32.mrf.mxu0
        %3730 = vmatprep.mubr.f32.mxu0 0.0
        %3731 = vmatmul.mubr.f32.gmra.mxu0 %v2449
        %v3732 = vpop.f32.mrf.mxu0
        %v3733 = vadd.f32 %v3508, %v3732
        %v3734 = vpop.f32.mrf.mxu0
        %3735 = vmatprep.mubr.f32.mxu0 0.0
        %3736 = vmatmul.mubr.f32.gmra.mxu0 %v2451
        %v3737 = vpop.f32.mrf.mxu0
        %v3738 = vadd.f32 %v3513, %v3737
        %v3739 = vpop.f32.mrf.mxu0
        %3740 = vmatprep.mubr.f32.mxu0 0.0
        %3741 = vmatmul.mubr.f32.gmra.mxu0 %v2454
        %v3742 = vpop.f32.mrf.mxu0
        %v3743 = vadd.f32 %v3518, %v3742
        %v3744 = vpop.f32.mrf.mxu0
        %3745 = vmatprep.mubr.f32.mxu0 0.0
        %3746 = vmatmul.mubr.f32.gmra.mxu0 %v2456
        %v3747 = vpop.f32.mrf.mxu0
        %v3748 = vadd.f32 %v3523, %v3747
        %v3749 = vpop.f32.mrf.mxu0
        %3750 = vmatprep.mubr.f32.mxu0 0.0
        %3751 = vmatmul.mubr.f32.gmra.mxu0 %v2483
        %v3752 = vpop.f32.mrf.mxu0
        %v3753 = vadd.f32 %v3528, %v3752
        %v3754 = vpop.f32.mrf.mxu0
        %3755 = vmatprep.mubr.f32.mxu0 0.0
        %3756 = vmatmul.mubr.f32.gmra.mxu0 %v2485
        %v3757 = vpop.f32.mrf.mxu0
        %v3758 = vadd.f32 %v3533, %v3757
        %v3759 = vpop.f32.mrf.mxu0
        %3760 = vmatprep.mubr.f32.mxu0 0.0
        %3761 = vmatmul.mubr.f32.gmra.mxu0 %v2488
        %v3762 = vpop.f32.mrf.mxu0
        %v3763 = vadd.f32 %v3538, %v3762
        %v3764 = vpop.f32.mrf.mxu0
        %3765 = vmatprep.mubr.f32.mxu0 0.0
        %3766 = vmatmul.mubr.f32.gmra.mxu0 %v2490
        %v3767 = vpop.f32.mrf.mxu0
        %v3768 = vadd.f32 %v3543, %v3767
        %v3769 = vpop.f32.mrf.mxu0
        %3770 = vdwg.mxu0
        %v3771 = vmax.f32 %v3613, 0.0
        %v3772 = vmax.f32 %v3618, 0.0
        %v3773 = vmax.f32 %v3623, 0.0
        %v3774 = vmax.f32 %v3628, 0.0
        %v3775 = vmax.f32 %v3633, 0.0
        %v3776 = vmax.f32 %v3638, 0.0
        %v3777 = vmax.f32 %v3643, 0.0
        %v3778 = vmax.f32 %v3648, 0.0
        %v3779 = vmax.f32 %v3653, 0.0
        %v3780 = vmax.f32 %v3658, 0.0
        %v3781 = vmax.f32 %v3663, 0.0
        %v3782 = vmax.f32 %v3668, 0.0
        %v3783 = vmax.f32 %v3673, 0.0
        %v3784 = vmax.f32 %v3678, 0.0
        %v3785 = vmax.f32 %v3683, 0.0
        %v3786 = vmax.f32 %v3688, 0.0
        %v3787 = vmax.f32 %v3693, 0.0
        %v3788 = vmax.f32 %v3698, 0.0
        %v3789 = vmax.f32 %v3703, 0.0
        %v3790 = vmax.f32 %v3708, 0.0
        %v3791 = vmax.f32 %v3713, 0.0
        %v3792 = vmax.f32 %v3718, 0.0
        %v3793 = vmax.f32 %v3723, 0.0
        %v3794 = vmax.f32 %v3728, 0.0
        %v3795 = vmax.f32 %v3733, 0.0
        %v3796 = vmax.f32 %v3738, 0.0
        %v3797 = vmax.f32 %v3743, 0.0
        %v3798 = vmax.f32 %v3748, 0.0
        %v3799 = vmax.f32 %v3753, 0.0
        %v3800 = vmax.f32 %v3758, 0.0
        %v3801 = vmax.f32 %v3763, 0.0
        %v3802 = vmax.f32 %v3768, 0.0
        %v3803 = vld [vmem:[%s5] sm:$0xff]
        %v3804 = vld [vmem:[%s5 + $0x8] sm:$0xff]
        %v3805 = vld [vmem:[%s5 + $0x10] sm:$0xff]
        %v3806 = vld [vmem:[%s5 + $0x18] sm:$0xff]
        %v3807 = vld [vmem:[%s5 + $0x20] sm:$0xff]
        %v3808 = vld [vmem:[%s5 + $0x28] sm:$0xff]
        %v3809 = vld [vmem:[%s5 + $0x30] sm:$0xff]
        %v3810 = vld [vmem:[%s5 + $0x38] sm:$0xff]
        %v3811 = vld [vmem:[%s5 + $0x40] sm:$0xff]
        %v3812 = vld [vmem:[%s5 + $0x48] sm:$0xff]
        %v3813 = vld [vmem:[%s5 + $0x50] sm:$0xff]
        %v3814 = vld [vmem:[%s5 + $0x58] sm:$0xff]
        %v3815 = vld [vmem:[%s5 + $0x60] sm:$0xff]
        %v3816 = vld [vmem:[%s5 + $0x68] sm:$0xff]
        %v3817 = vld [vmem:[%s5 + $0x70] sm:$0xff]
        %v3818 = vld [vmem:[%s5 + $0x78] sm:$0xff]
        %v3819 = vld [vmem:[%s6] sm:$0x1]
        %v3821 = vlaneseq
        %v3822 = vshrl.u32 %v3821, 7
        %v3823 = vsub.s32 0, %v3822
        %v3824 = vrot.slane %v3819, %v3823
        %3826 = vmatprep.subr.mxu0 0.0
        %3827 = vmatpush1.msra.mxu0 %v3818
        %3828 = vmatprep.subr.mxu0 0.0
        %3829 = vmatpush1.msra.mxu0 %v3817
        %3830 = vmatprep.subr.mxu0 0.0
        %3831 = vmatpush1.msra.mxu0 %v3816
        %3832 = vmatprep.subr.mxu0 0.0
        %3833 = vmatpush1.msra.mxu0 %v3815
        %3834 = vmatprep.subr.mxu0 0.0
        %3835 = vmatpush1.msra.mxu0 %v3814
        %3836 = vmatprep.subr.mxu0 0.0
        %3837 = vmatpush1.msra.mxu0 %v3813
        %3838 = vmatprep.subr.mxu0 0.0
        %3839 = vmatpush1.msra.mxu0 %v3812
        %3840 = vmatprep.subr.mxu0 0.0
        %3841 = vmatpush1.msra.mxu0 %v3811
        %3842 = vmatprep.subr.mxu0 0.0
        %3843 = vmatpush1.msra.mxu0 %v3810
        %3844 = vmatprep.subr.mxu0 0.0
        %3845 = vmatpush1.msra.mxu0 %v3809
        %3846 = vmatprep.subr.mxu0 0.0
        %3847 = vmatpush1.msra.mxu0 %v3808
        %3848 = vmatprep.subr.mxu0 0.0
        %3849 = vmatpush1.msra.mxu0 %v3807
        %3850 = vmatprep.subr.mxu0 0.0
        %3851 = vmatpush1.msra.mxu0 %v3806
        %3852 = vmatprep.subr.mxu0 0.0
        %3853 = vmatpush1.msra.mxu0 %v3805
        %3854 = vmatprep.subr.mxu0 0.0
        %3855 = vmatpush1.msra.mxu0 %v3804
        %3856 = vmatprep.subr.mxu0 0.0
        %3857 = vmatpush1.msra.mxu0 %v3803
        %3858 = vmatprep.subr.mxu0 0.0
        %3859 = vmatpush2.msra.mxu0 0.0
        %3860 = vmatprep.subr.mxu0 0.0
        %3861 = vmatpush2.msra.mxu0 0.0
        %3862 = vmatprep.subr.mxu0 0.0
        %3863 = vmatpush2.msra.mxu0 0.0
        %3864 = vmatprep.subr.mxu0 0.0
        %3865 = vmatpush2.msra.mxu0 0.0
        %3866 = vmatprep.subr.mxu0 0.0
        %3867 = vmatpush2.msra.mxu0 0.0
        %3868 = vmatprep.subr.mxu0 0.0
        %3869 = vmatpush2.msra.mxu0 0.0
        %3870 = vmatprep.subr.mxu0 0.0
        %3871 = vmatpush2.msra.mxu0 0.0
        %3872 = vmatprep.subr.mxu0 0.0
        %3873 = vmatpush2.msra.mxu0 0.0
        %3874 = vmatprep.subr.mxu0 0.0
        %3875 = vmatpush2.msra.mxu0 0.0
        %3876 = vmatprep.subr.mxu0 0.0
        %3877 = vmatpush2.msra.mxu0 0.0
        %3878 = vmatprep.subr.mxu0 0.0
        %3879 = vmatpush2.msra.mxu0 0.0
        %3880 = vmatprep.subr.mxu0 0.0
        %3881 = vmatpush2.msra.mxu0 0.0
        %3882 = vmatprep.subr.mxu0 0.0
        %3883 = vmatpush2.msra.mxu0 0.0
        %3884 = vmatprep.subr.mxu0 0.0
        %3885 = vmatpush2.msra.mxu0 0.0
        %3886 = vmatprep.subr.mxu0 0.0
        %3887 = vmatpush2.msra.mxu0 0.0
        %3888 = vmatprep.subr.mxu0 0.0
        %3889 = vmatpush2.msra.mxu0 0.0
        %3890 = vmatprep.mubr.f32.mxu0 0.0
        %3891 = vmatmul.mubr.f32.gmra.mxu0 %v413
        %v3892 = vpop.f32.mrf.mxu0
        %v3893 = vadd.f32 %v3824, %v3892
        %v3894 = vpop.f32.mrf.mxu0
        %3895 = vmatprep.mubr.f32.mxu0 0.0
        %3896 = vmatmul.mubr.f32.gmra.mxu0 %v415
        %v3897 = vpop.f32.mrf.mxu0
        %v3898 = vadd.f32 %v3824, %v3897
        %v3899 = vpop.f32.mrf.mxu0
        %3900 = vmatprep.mubr.f32.mxu0 0.0
        %3901 = vmatmul.mubr.f32.gmra.mxu0 %v418
        %v3902 = vpop.f32.mrf.mxu0
        %v3903 = vadd.f32 %v3824, %v3902
        %v3904 = vpop.f32.mrf.mxu0
        %3905 = vmatprep.mubr.f32.mxu0 0.0
        %3906 = vmatmul.mubr.f32.gmra.mxu0 %v420
        %v3907 = vpop.f32.mrf.mxu0
        %v3908 = vadd.f32 %v3824, %v3907
        %v3909 = vpop.f32.mrf.mxu0
        %3910 = vmatprep.mubr.f32.mxu0 0.0
        %3911 = vmatmul.mubr.f32.gmra.mxu0 %v423
        %v3912 = vpop.f32.mrf.mxu0
        %v3913 = vadd.f32 %v3824, %v3912
        %v3914 = vpop.f32.mrf.mxu0
        %3915 = vmatprep.mubr.f32.mxu0 0.0
        %3916 = vmatmul.mubr.f32.gmra.mxu0 %v425
        %v3917 = vpop.f32.mrf.mxu0
        %v3918 = vadd.f32 %v3824, %v3917
        %v3919 = vpop.f32.mrf.mxu0
        %3920 = vmatprep.mubr.f32.mxu0 0.0
        %3921 = vmatmul.mubr.f32.gmra.mxu0 %v428
        %v3922 = vpop.f32.mrf.mxu0
        %v3923 = vadd.f32 %v3824, %v3922
        %v3924 = vpop.f32.mrf.mxu0
        %3925 = vmatprep.mubr.f32.mxu0 0.0
        %3926 = vmatmul.mubr.f32.gmra.mxu0 %v430
        %v3927 = vpop.f32.mrf.mxu0
        %v3928 = vadd.f32 %v3824, %v3927
        %v3929 = vpop.f32.mrf.mxu0
        %3930 = vmatprep.mubr.f32.mxu0 0.0
        %3931 = vmatmul.mubr.f32.gmra.mxu0 %v433
        %v3932 = vpop.f32.mrf.mxu0
        %v3933 = vadd.f32 %v3824, %v3932
        %v3934 = vpop.f32.mrf.mxu0
        %3935 = vmatprep.mubr.f32.mxu0 0.0
        %3936 = vmatmul.mubr.f32.gmra.mxu0 %v435
        %v3937 = vpop.f32.mrf.mxu0
        %v3938 = vadd.f32 %v3824, %v3937
        %v3939 = vpop.f32.mrf.mxu0
        %3940 = vmatprep.mubr.f32.mxu0 0.0
        %3941 = vmatmul.mubr.f32.gmra.mxu0 %v438
        %v3942 = vpop.f32.mrf.mxu0
        %v3943 = vadd.f32 %v3824, %v3942
        %v3944 = vpop.f32.mrf.mxu0
        %3945 = vmatprep.mubr.f32.mxu0 0.0
        %3946 = vmatmul.mubr.f32.gmra.mxu0 %v440
        %v3947 = vpop.f32.mrf.mxu0
        %v3948 = vadd.f32 %v3824, %v3947
        %v3949 = vpop.f32.mrf.mxu0
        %3950 = vmatprep.mubr.f32.mxu0 0.0
        %3951 = vmatmul.mubr.f32.gmra.mxu0 %v443
        %v3952 = vpop.f32.mrf.mxu0
        %v3953 = vadd.f32 %v3824, %v3952
        %v3954 = vpop.f32.mrf.mxu0
        %3955 = vmatprep.mubr.f32.mxu0 0.0
        %3956 = vmatmul.mubr.f32.gmra.mxu0 %v445
        %v3957 = vpop.f32.mrf.mxu0
        %v3958 = vadd.f32 %v3824, %v3957
        %v3959 = vpop.f32.mrf.mxu0
        %3960 = vmatprep.mubr.f32.mxu0 0.0
        %3961 = vmatmul.mubr.f32.gmra.mxu0 %v448
        %v3962 = vpop.f32.mrf.mxu0
        %v3963 = vadd.f32 %v3824, %v3962
        %v3964 = vpop.f32.mrf.mxu0
        %3965 = vmatprep.mubr.f32.mxu0 0.0
        %3966 = vmatmul.mubr.f32.gmra.mxu0 %v450
        %v3967 = vpop.f32.mrf.mxu0
        %v3968 = vadd.f32 %v3824, %v3967
        %v3969 = vpop.f32.mrf.mxu0
        %3970 = vmatprep.mubr.f32.mxu0 0.0
        %3971 = vmatmul.mubr.f32.gmra.mxu0 %v453
        %v3972 = vpop.f32.mrf.mxu0
        %v3973 = vadd.f32 %v3824, %v3972
        %v3974 = vpop.f32.mrf.mxu0
        %3975 = vmatprep.mubr.f32.mxu0 0.0
        %3976 = vmatmul.mubr.f32.gmra.mxu0 %v455
        %v3977 = vpop.f32.mrf.mxu0
        %v3978 = vadd.f32 %v3824, %v3977
        %v3979 = vpop.f32.mrf.mxu0
        %3980 = vmatprep.mubr.f32.mxu0 0.0
        %3981 = vmatmul.mubr.f32.gmra.mxu0 %v458
        %v3982 = vpop.f32.mrf.mxu0
        %v3983 = vadd.f32 %v3824, %v3982
        %v3984 = vpop.f32.mrf.mxu0
        %3985 = vmatprep.mubr.f32.mxu0 0.0
        %3986 = vmatmul.mubr.f32.gmra.mxu0 %v460
        %v3987 = vpop.f32.mrf.mxu0
        %v3988 = vadd.f32 %v3824, %v3987
        %v3989 = vpop.f32.mrf.mxu0
        %3990 = vmatprep.mubr.f32.mxu0 0.0
        %3991 = vmatmul.mubr.f32.gmra.mxu0 %v463
        %v3992 = vpop.f32.mrf.mxu0
        %v3993 = vadd.f32 %v3824, %v3992
        %v3994 = vpop.f32.mrf.mxu0
        %3995 = vmatprep.mubr.f32.mxu0 0.0
        %3996 = vmatmul.mubr.f32.gmra.mxu0 %v465
        %v3997 = vpop.f32.mrf.mxu0
        %v3998 = vadd.f32 %v3824, %v3997
        %v3999 = vpop.f32.mrf.mxu0
        %4000 = vmatprep.mubr.f32.mxu0 0.0
        %4001 = vmatmul.mubr.f32.gmra.mxu0 %v468
        %v4002 = vpop.f32.mrf.mxu0
        %v4003 = vadd.f32 %v3824, %v4002
        %v4004 = vpop.f32.mrf.mxu0
        %4005 = vmatprep.mubr.f32.mxu0 0.0
        %4006 = vmatmul.mubr.f32.gmra.mxu0 %v470
        %v4007 = vpop.f32.mrf.mxu0
        %v4008 = vadd.f32 %v3824, %v4007
        %v4009 = vpop.f32.mrf.mxu0
        %4010 = vmatprep.mubr.f32.mxu0 0.0
        %4011 = vmatmul.mubr.f32.gmra.mxu0 %v473
        %v4012 = vpop.f32.mrf.mxu0
        %v4013 = vadd.f32 %v3824, %v4012
        %v4014 = vpop.f32.mrf.mxu0
        %4015 = vmatprep.mubr.f32.mxu0 0.0
        %4016 = vmatmul.mubr.f32.gmra.mxu0 %v475
        %v4017 = vpop.f32.mrf.mxu0
        %v4018 = vadd.f32 %v3824, %v4017
        %v4019 = vpop.f32.mrf.mxu0
        %4020 = vmatprep.mubr.f32.mxu0 0.0
        %4021 = vmatmul.mubr.f32.gmra.mxu0 %v478
        %v4022 = vpop.f32.mrf.mxu0
        %v4023 = vadd.f32 %v3824, %v4022
        %v4024 = vpop.f32.mrf.mxu0
        %4025 = vmatprep.mubr.f32.mxu0 0.0
        %4026 = vmatmul.mubr.f32.gmra.mxu0 %v480
        %v4027 = vpop.f32.mrf.mxu0
        %v4028 = vadd.f32 %v3824, %v4027
        %v4029 = vpop.f32.mrf.mxu0
        %4030 = vmatprep.mubr.f32.mxu0 0.0
        %4031 = vmatmul.mubr.f32.gmra.mxu0 %v634
        %v4032 = vpop.f32.mrf.mxu0
        %v4033 = vadd.f32 %v3824, %v4032
        %v4034 = vpop.f32.mrf.mxu0
        %4035 = vmatprep.mubr.f32.mxu0 0.0
        %4036 = vmatmul.mubr.f32.gmra.mxu0 %v636
        %v4037 = vpop.f32.mrf.mxu0
        %v4038 = vadd.f32 %v3824, %v4037
        %v4039 = vpop.f32.mrf.mxu0
        %4040 = vmatprep.mubr.f32.mxu0 0.0
        %4041 = vmatmul.mubr.f32.gmra.mxu0 %v639
        %v4042 = vpop.f32.mrf.mxu0
        %v4043 = vadd.f32 %v3824, %v4042
        %v4044 = vpop.f32.mrf.mxu0
        %4045 = vmatprep.mubr.f32.mxu0 0.0
        %4046 = vmatmul.mubr.f32.gmra.mxu0 %v641
        %v4047 = vpop.f32.mrf.mxu0
        %v4048 = vadd.f32 %v3824, %v4047
        %v4049 = vpop.f32.mrf.mxu0
        %4050 = vdwg.mxu0
        %v4051 = vadd.f32 %v3771, %v3893
        %v4052 = vadd.f32 %v3772, %v3898
        %v4053 = vadd.f32 %v3773, %v3903
        %v4054 = vadd.f32 %v3774, %v3908
        %v4055 = vadd.f32 %v3775, %v3913
        %v4056 = vadd.f32 %v3776, %v3918
        %v4057 = vadd.f32 %v3777, %v3923
        %v4058 = vadd.f32 %v3778, %v3928
        %v4059 = vadd.f32 %v3779, %v3933
        %v4060 = vadd.f32 %v3780, %v3938
        %v4061 = vadd.f32 %v3781, %v3943
        %v4062 = vadd.f32 %v3782, %v3948
        %v4063 = vadd.f32 %v3783, %v3953
        %v4064 = vadd.f32 %v3784, %v3958
        %v4065 = vadd.f32 %v3785, %v3963
        %v4066 = vadd.f32 %v3786, %v3968
        %v4067 = vadd.f32 %v3787, %v3973
        %v4068 = vadd.f32 %v3788, %v3978
        %v4069 = vadd.f32 %v3789, %v3983
        %v4070 = vadd.f32 %v3790, %v3988
        %v4071 = vadd.f32 %v3791, %v3993
        %v4072 = vadd.f32 %v3792, %v3998
        %v4073 = vadd.f32 %v3793, %v4003
        %v4074 = vadd.f32 %v3794, %v4008
        %v4075 = vadd.f32 %v3795, %v4013
        %v4076 = vadd.f32 %v3796, %v4018
        %v4077 = vadd.f32 %v3797, %v4023
        %v4078 = vadd.f32 %v3798, %v4028
        %v4079 = vadd.f32 %v3799, %v4033
        %v4080 = vadd.f32 %v3800, %v4038
        %v4081 = vadd.f32 %v3801, %v4043
        %v4082 = vadd.f32 %v3802, %v4048
        %4083 = vst [vmem:[%s286] sm:$0xff] %v4051
        %4084 = vst [vmem:[%s286 + $0x8] sm:$0xff] %v4052
        %4085 = vst [vmem:[%s286 + $0x10] sm:$0xff] %v4053
        %4086 = vst [vmem:[%s286 + $0x18] sm:$0xff] %v4054
        %4087 = vst [vmem:[%s286 + $0x20] sm:$0xff] %v4055
        %4088 = vst [vmem:[%s286 + $0x28] sm:$0xff] %v4056
        %4089 = vst [vmem:[%s286 + $0x30] sm:$0xff] %v4057
        %4090 = vst [vmem:[%s286 + $0x38] sm:$0xff] %v4058
        %4091 = vst [vmem:[%s286 + $0x40] sm:$0xff] %v4059
        %4092 = vst [vmem:[%s286 + $0x48] sm:$0xff] %v4060
        %4093 = vst [vmem:[%s286 + $0x50] sm:$0xff] %v4061
        %4094 = vst [vmem:[%s286 + $0x58] sm:$0xff] %v4062
        %4095 = vst [vmem:[%s286 + $0x60] sm:$0xff] %v4063
        %4096 = vst [vmem:[%s286 + $0x68] sm:$0xff] %v4064
        %4097 = vst [vmem:[%s286 + $0x70] sm:$0xff] %v4065
        %4098 = vst [vmem:[%s286 + $0x78] sm:$0xff] %v4066
        %4099 = vst [vmem:[%s286 + $0x80] sm:$0xff] %v4067
        %4100 = vst [vmem:[%s286 + $0x88] sm:$0xff] %v4068
        %4101 = vst [vmem:[%s286 + $0x90] sm:$0xff] %v4069
        %4102 = vst [vmem:[%s286 + $0x98] sm:$0xff] %v4070
        %4103 = vst [vmem:[%s286 + $0xa0] sm:$0xff] %v4071
        %4104 = vst [vmem:[%s286 + $0xa8] sm:$0xff] %v4072
        %4105 = vst [vmem:[%s286 + $0xb0] sm:$0xff] %v4073
        %4106 = vst [vmem:[%s286 + $0xb8] sm:$0xff] %v4074
        %4107 = vst [vmem:[%s286 + $0xc0] sm:$0xff] %v4075
        %4108 = vst [vmem:[%s286 + $0xc8] sm:$0xff] %v4076
        %4109 = vst [vmem:[%s286 + $0xd0] sm:$0xff] %v4077
        %4110 = vst [vmem:[%s286 + $0xd8] sm:$0xff] %v4078
        %4111 = vst [vmem:[%s286 + $0xe0] sm:$0xff] %v4079
        %4112 = vst [vmem:[%s286 + $0xe8] sm:$0xff] %v4080
        %4113 = vst [vmem:[%s286 + $0xf0] sm:$0xff] %v4081
        %4114 = vst [vmem:[%s286 + $0xf8] sm:$0xff] %v4082
        %s4115 = sand.u32 %s182, 1
        %s4116 = scalar_lea.sflag [#allocation5], %s4115
        %s4117 = sand.u32 %s182, 1
        %s4118 = smul.addr %s4117, 256
        %s4119 = scalar_lea.vmem [#allocation6], %s4118
        // Predicated region
        $region53: #{tpu_custom_call.1} parent=47 // pred_check
          %p4120 = pneg %p192
        $region54: #{tpu_custom_call.1} parent=47 // pred_check_branch
          %4122 = sbr.rel (%p4120) target = $region56
        $region55: #{tpu_custom_call.1} parent=47 // pred_region
          %s4124 = ssub.s32 4096, 4096
          %4125 = vsyncadd %s4116, %s4124
          %s4126 = smul.addr %s22, 32
          %s4127 = smul.addr %s4126, 128
          %s4128 = scalar_lea.hbm %s7, %s4127
          %s4129 = sshll.u32 %s4119, 4
          %s4130 = int_to_ptr.vmem [resolvable:$true] %s4129
          %4135 = dma.vmem_to_hbm [thread:$0]  %s4130, 4096, %s4128, %s4116, 128, 128, 8
        $region56: #{tpu_custom_call.1} parent=47 // pred_fallthru
          _
      $region48: #{tpu_custom_call.1} parent=5 // pred_fallthru
        _
      %p4136 = scmp.le.s32.totalorder 2, %s17
      // Predicated region
      $region57: #{tpu_custom_call.1} parent=5 // pred_check
        %p4137 = pneg %p4136
      $region58: #{tpu_custom_call.1} parent=5 // pred_check_branch
        %4139 = sbr.rel (%p4137) target = $region60
      $region59: #{tpu_custom_call.1} parent=5 // pred_region
        %s4140 = ssub.s32 %s17, 2
        // Predicated region
        $region61: #{tpu_custom_call.1} parent=59 // pred_check
          %p4141 = pneg %p198
        $region62: #{tpu_custom_call.1} parent=59 // pred_check_branch
          %4143 = sbr.rel (%p4141) target = $region64
        $region63: #{tpu_custom_call.1} parent=59 // pred_region
          %s4144 = sand.u32 %s183, 1
          %s4145 = scalar_lea.sflag [#allocation5], %s4144
          %s4146 = sand.u32 %s183, 1
          %s4147 = smul.addr %s4146, 256
          %s4148 = scalar_lea.vmem [#allocation6], %s4147
          %4149 = dma.done %s4145, 4096
        $region64: #{tpu_custom_call.1} parent=59 // pred_fallthru
          _
      $region60: #{tpu_custom_call.1} parent=5 // pred_fallthru
        _
    $region6: #{tpu_custom_call.1} parent=1 // loop_footer
      %s21 = sadd.s32 1, %s17
    $region7: #{tpu_custom_call.1} parent=1 // loop_footer_branch
      %16 = sbr.rel target = $region3
    $region8: #{tpu_custom_call.1} parent=1 // loop_exit
      _
    %4150 = vsyncpa [#allocation4], 1
    %s4151 = scalar_lea.sflag [#allocation4], 1
    %4152 = vsyncpa %s4151, 1
    %4153 = vsyncpa [#allocation5], 1
    %s4154 = scalar_lea.sflag [#allocation5], 1
    %4155 = vsyncpa %s4154, 1

</llo_original>
